<compile_context>
chip_gen: v5e
topology: v5e:2x2
jax: 0.10.0
libtpu: 0.0.40
codegen_flags: <defaults>
</compile_context>

<pallas_src>
import functools

import jax
import jax.numpy as jnp
import numpy as np
from jax import lax
from jax.experimental import pallas as pl
from jax.experimental.pallas import tpu as pltpu

F32 = jnp.float32
BF16 = jnp.bfloat16
NEG_INF = -1e30  # large finite negative: avoids inf-inf NaNs in online softmax


# ----------------------------------------------------------------------------
# Shared in-kernel helpers.
# ----------------------------------------------------------------------------
def _rms_norm_f32(t_f32, w_bf16, eps):
    ms = jnp.mean(t_f32 * t_f32, axis=-1, keepdims=True)
    return t_f32 * lax.rsqrt(ms + eps) * w_bf16.astype(F32)


def _rotate_half(x, cos, sin, half):
    """RoPE in the de-interleaved (evens-then-odds) domain: 1 swap + 2 FMAs."""
    swapped = jnp.concatenate([x[:, half:], x[:, :half]], axis=-1)
    return x * cos + swapped * sin


# ----------------------------------------------------------------------------
# Kernel 1: rms_norm(x) -> K/V projection -> RoPE(K).
# Outputs K_rot / V as (n_kv_heads, seq, head_dim) bf16 (lane-dense since the
# production head_dim is 128; for head_dim < 128 a (seq, kv_dim) layout would
# be preferred).
# ----------------------------------------------------------------------------
def _kv_kernel(x_ref, attn_nw_ref, wk_ref, wv_ref, cos_k_ref, sin_k_ref,
               k_out_ref, v_out_ref, *, n_kv_heads, head_dim, eps):
    half = head_dim // 2
    xn_bf = _rms_norm_f32(x_ref[...].astype(F32), attn_nw_ref[0, :], eps).astype(BF16)

    k_flat = jnp.dot(xn_bf, wk_ref[...], preferred_element_type=F32)   # (ts, kv_dim)
    v_flat = jnp.dot(xn_bf, wv_ref[...], preferred_element_type=F32)

    cos = cos_k_ref[...]          # (ts, head_dim) f32
    sin = sin_k_ref[...]          # signed: [-s, +s]

    for kv in range(n_kv_heads):
        k_h = k_flat[:, kv * head_dim:(kv + 1) * head_dim]
        k_out_ref[kv] = _rotate_half(k_h, cos, sin, half).astype(BF16)
        v_out_ref[kv] = v_flat[:, kv * head_dim:(kv + 1) * head_dim].astype(BF16)


# ----------------------------------------------------------------------------
# Kernel 2: per q-tile transformer block
# (attention with causal kv-tile streaming + online softmax, FFN, residuals).
# ----------------------------------------------------------------------------
def _block_kernel(x_ref, attn_nw_ref, ffn_nw_ref, wq_ref, wo_ref, w13_ref,
                  w2_ref, k_ref, v_ref, cos_q_ref, sin_q_ref, out_ref,
                  m_scr, l_scr, acc_scr,
                  *, n_heads, n_kv_heads, head_dim, hidden_dim, eps, tile_s):
    i = pl.program_id(0)
    group = n_heads // n_kv_heads
    half = head_dim // 2

    x_f32 = x_ref[...].astype(F32)

    # --------------------------- attention ---------------------------
    xn_bf = _rms_norm_f32(x_f32, attn_nw_ref[0, :], eps).astype(BF16)
    q_flat = jnp.dot(xn_bf, wq_ref[...], preferred_element_type=F32)    # (ts, H*hd)

    cos_q = cos_q_ref[...]        # (ts, hd) f32, 1/sqrt(hd) folded in
    sin_q = sin_q_ref[...]

    # Tile-local causal mask, only used for the diagonal kv tile.
    rows = lax.broadcasted_iota(jnp.int32, (group * tile_s, tile_s), 0)
    cols = lax.broadcasted_iota(jnp.int32, (group * tile_s, tile_s), 1)
    keep = cols <= jnp.bitwise_and(rows, tile_s - 1)   # tile_s is a power of two

    def online_step(s, v_t):
        m_old = m_scr[...]
        m_new = jnp.maximum(m_old, jnp.max(s, axis=-1, keepdims=True))
        alpha = jnp.exp(m_old - m_new)
        p = jnp.exp(s - m_new)
        l_scr[...] = alpha * l_scr[...] + jnp.sum(p, axis=-1, keepdims=True)
        acc_scr[...] = alpha * acc_scr[...] + jnp.dot(
            p.astype(BF16), v_t, preferred_element_type=F32)
        m_scr[...] = m_new

    # Residual is folded into the wo accumulation (f32).
    h_acc = x_f32

    for kv in range(n_kv_heads):
        # RoPE each query head of the group with the (ts, hd) tables, then
        # stack the group along sublanes: one (g*ts, hd) operand per matmul.
        q_parts = []
        for g in range(group):
            h = kv * group + g
            q_h = q_flat[:, h * head_dim:(h + 1) * head_dim]
            q_parts.append(_rotate_half(q_h, cos_q, sin_q, half))
        q_rot = (q_parts[0] if group == 1
                 else jnp.concatenate(q_parts, axis=0)).astype(BF16)     # (g*ts, hd)

        k_kv = k_ref.at[kv]        # (seq, hd) ref views -- no copy
        v_kv = v_ref.at[kv]

        m_scr[...] = jnp.full(m_scr.shape, NEG_INF, F32)
        l_scr[...] = jnp.zeros(l_scr.shape, F32)
        acc_scr[...] = jnp.zeros(acc_scr.shape, F32)

        # Off-diagonal kv tiles (j < i): fully visible, no mask.
        # kv tiles with j > i are skipped entirely (causal).
        @pl.loop(0, i)
        def _(j):
            start = pl.multiple_of(j * tile_s, tile_s)
            k_t = k_kv[pl.ds(start, tile_s), :]
            v_t = v_kv[pl.ds(start, tile_s), :]
            s = lax.dot_general(q_rot, k_t, (((1,), (1,)), ((), ())),
                                preferred_element_type=F32)              # (g*ts, ts)
            online_step(s, v_t)

        # Diagonal kv tile (j == i): tile-local triangular mask.
        start = pl.multiple_of(i * tile_s, tile_s)
        k_t = k_kv[pl.ds(start, tile_s), :]
        v_t = v_kv[pl.ds(start, tile_s), :]
        s = lax.dot_general(q_rot, k_t, (((1,), (1,)), ((), ())),
                            preferred_element_type=F32)
        online_step(jnp.where(keep, s, NEG_INF), v_t)

        o_stack = (acc_scr[...] *
                   pl.reciprocal(l_scr[...], approx=True)).astype(BF16)  # (g*ts, hd)

        # Consume each head output immediately: accumulate its wo contribution
        # (no head concatenate, no long-lived per-head values).
        for g in range(group):
            h = kv * group + g
            o_h = o_stack[g * tile_s:(g + 1) * tile_s, :]
            h_acc = h_acc + jnp.dot(
                o_h, wo_ref[h * head_dim:(h + 1) * head_dim, :],
                preferred_element_type=F32)

    # -------------------------- feed-forward --------------------------
    hn_bf = _rms_norm_f32(h_acc, ffn_nw_ref[0, :], eps).astype(BF16)
    ab = jnp.dot(hn_bf, w13_ref[...], preferred_element_type=F32)        # (ts, 2*hidden)
    a = ab[:, :hidden_dim]
    b = ab[:, hidden_dim:]
    gated = (a * jax.nn.sigmoid(a) * b).astype(BF16)                     # silu(w1x)*(w3x)
    ffn_delta = jnp.dot(gated, w2_ref[...], preferred_element_type=F32)

    out_ref[...] = (h_acc + ffn_delta).astype(BF16)


# ----------------------------------------------------------------------------
# One-time parameter preparation (outside the per-call path).
# ----------------------------------------------------------------------------
def _deinterleave_cols(w_t, n_heads_w, head_dim):
    """Reorder each head's output columns: evens first, odds second.

    Maps interleaved RoPE to rotate-half; since the same permutation is applied
    to Q and K features, attention scores are unchanged.
    """
    perm = np.concatenate([np.arange(0, head_dim, 2), np.arange(1, head_dim, 2)])
    cols = np.concatenate([h * head_dim + perm for h in range(n_heads_w)])
    return w_t[:, cols]


def _rope_tables(seq, head_dim, rope_theta, scale):
    hh = head_dim // 2
    zero_to_one = jnp.arange(hh, dtype=F32) / hh
    freqs = 1.0 / (rope_theta ** zero_to_one)
    ang = jnp.outer(jnp.arange(seq, dtype=F32), freqs)                   # (seq, hh)
    cos = jnp.cos(ang)
    sin = jnp.sin(ang)
    cos_half = jnp.concatenate([cos, cos], axis=-1) * scale              # (seq, hd)
    sin_half = jnp.concatenate([-sin, sin], axis=-1) * scale             # signed
    return cos_half.astype(F32), sin_half.astype(F32)


def prepare_block_params(params, *, seq, n_heads, n_kv_heads, rope_theta):
    dim = params["wq"].shape[1]
    head_dim = dim // n_heads
    scale = 1.0 / (head_dim ** 0.5)

    wq_p = _deinterleave_cols(params["wq"].T, n_heads, head_dim)         # (dim, H*hd)
    wk_p = _deinterleave_cols(params["wk"].T, n_kv_heads, head_dim)      # (dim, KV*hd)
    wv_p = params["wv"].T                                                # (dim, KV*hd)
    wo_p = params["wo"].T                                                # (H*hd, dim)
    w13 = jnp.concatenate([params["w1"].T, params["w3"].T], axis=1)      # (dim, 2*hidden)
    w2_p = params["w2"].T                                                # (hidden, dim)

    cos_q, sin_q = _rope_tables(seq, head_dim, rope_theta, scale)        # scale folded
    cos_k, sin_k = _rope_tables(seq, head_dim, rope_theta, 1.0)

    return dict(
        attn_norm=params["attention_norm"].reshape(1, dim),
        ffn_norm=params["ffn_norm"].reshape(1, dim),
        wq=wq_p, wk=wk_p, wv=wv_p, wo=wo_p, w13=w13, w2=w2_p,
        cos_q=cos_q, sin_q=sin_q, cos_k=cos_k, sin_k=sin_k,
    )


# ----------------------------------------------------------------------------
# Wrapper: two pipelined pallas_calls.
# ----------------------------------------------------------------------------
def _nbytes(shape, dtype):
    return int(np.prod(shape)) * jnp.dtype(dtype).itemsize


def _pick_tile_s(seq):
    """MXU-filling q tile per generation: 128 on v5e, 256 on v6e/v7x."""
    kind = jax.devices()[0].device_kind.lower()
    ts = 128 if "v5" in kind else 256
    return min(ts, seq)


def _vmem_budget(resident_bytes, streamed_bytes, slack=8 << 20):
    # Resident (Buffered(1)) arrays count once, pipelined tiles twice,
    # plus slack for f32 intermediates / scratch.  Clamp to a value valid on
    # every generation (v7x physical VMEM is 64 MiB).
    est = resident_bytes + 2 * streamed_bytes + slack
    return int(max(24 << 20, min(48 << 20, est)))


def transformer_block_forward(x, prep, *, n_heads, n_kv_heads, norm_eps,
                              tile_s=None):
    seq, dim = x.shape
    head_dim = dim // n_heads
    kv_dim = n_kv_heads * head_dim
    hidden = prep["w2"].shape[0]
    group = n_heads // n_kv_heads

    if tile_s is None:
        tile_s = _pick_tile_s(seq)
    tile_s = min(tile_s, seq)
    assert seq % tile_s == 0, "seq must be divisible by the seq tile"
    assert (tile_s & (tile_s - 1)) == 0, "seq tile must be a power of two"
    num_tiles = seq // tile_s

    # Single-buffer every constant-index_map block (Pallas double-buffers by
    # default, which doubles the VMEM footprint of "resident" weights / K / V).
    resident = pl.Buffered(buffer_count=1)

    # ---- kernel 1: K/V projection + RoPE(K), tiled over seq ----
    k1_res = 2 * _nbytes((dim, kv_dim), BF16) + _nbytes((1, dim), BF16)
    k1_str = (_nbytes((tile_s, dim), BF16)
              + 2 * _nbytes((tile_s, head_dim), F32)
              + 2 * _nbytes((n_kv_heads, tile_s, head_dim), BF16))
    kv_kernel = functools.partial(
        _kv_kernel, n_kv_heads=n_kv_heads, head_dim=head_dim, eps=norm_eps)
    k_rot, v_heads = pl.pallas_call(
        kv_kernel,
        out_shape=(jax.ShapeDtypeStruct((n_kv_heads, seq, head_dim), BF16),
                   jax.ShapeDtypeStruct((n_kv_heads, seq, head_dim), BF16)),
        grid=(num_tiles,),
        in_specs=[
            pl.BlockSpec((tile_s, dim), lambda i: (i, 0)),                     # x
            pl.BlockSpec((1, dim), lambda i: (0, 0), pipeline_mode=resident),  # attn norm
            pl.BlockSpec((dim, kv_dim), lambda i: (0, 0), pipeline_mode=resident),
            pl.BlockSpec((dim, kv_dim), lambda i: (0, 0), pipeline_mode=resident),
            pl.BlockSpec((tile_s, head_dim), lambda i: (i, 0)),                # cos_k
            pl.BlockSpec((tile_s, head_dim), lambda i: (i, 0)),                # sin_k
        ],
        out_specs=(pl.BlockSpec((n_kv_heads, tile_s, head_dim), lambda i: (0, i, 0)),
                   pl.BlockSpec((n_kv_heads, tile_s, head_dim), lambda i: (0, i, 0))),
        compiler_params=pltpu.CompilerParams(
            dimension_semantics=("parallel",),
            vmem_limit_bytes=_vmem_budget(k1_res, k1_str)),
    )(x, prep["attn_norm"], prep["wk"], prep["wv"], prep["cos_k"], prep["sin_k"])

    # ---- kernel 2: attention (causal kv streaming) + FFN per q-tile ----
    # NOTE: at real Llama-3-8B dims, w13/w2 would be K-streamed (emit_pipeline)
    # and K/V streamed per kv tile instead of held resident.
    k2_res = (_nbytes((dim, n_heads * head_dim), BF16)
              + _nbytes((n_heads * head_dim, dim), BF16)
              + _nbytes((dim, 2 * hidden), BF16)
              + _nbytes((hidden, dim), BF16)
              + 2 * _nbytes((n_kv_heads, seq, head_dim), BF16)
              + 2 * _nbytes((1, dim), BF16))
    k2_str = (2 * _nbytes((tile_s, dim), BF16)
              + 2 * _nbytes((tile_s, head_dim), F32))
    block_kernel = functools.partial(
        _block_kernel, n_heads=n_heads, n_kv_heads=n_kv_heads,
        head_dim=head_dim, hidden_dim=hidden, eps=norm_eps, tile_s=tile_s)
    out = pl.pallas_call(
        block_kernel,
        out_shape=jax.ShapeDtypeStruct((seq, dim), BF16),
        grid=(num_tiles,),
        in_specs=[
            pl.BlockSpec((tile_s, dim), lambda i: (i, 0)),                      # x
            pl.BlockSpec((1, dim), lambda i: (0, 0), pipeline_mode=resident),   # attn norm
            pl.BlockSpec((1, dim), lambda i: (0, 0), pipeline_mode=resident),   # ffn norm
            pl.BlockSpec((dim, n_heads * head_dim), lambda i: (0, 0),
                         pipeline_mode=resident),                               # wq
            pl.BlockSpec((n_heads * head_dim, dim), lambda i: (0, 0),
                         pipeline_mode=resident),                               # wo
            pl.BlockSpec((dim, 2 * hidden), lambda i: (0, 0),
                         pipeline_mode=resident),                               # w1|w3
            pl.BlockSpec((hidden, dim), lambda i: (0, 0),
                         pipeline_mode=resident),                               # w2
            pl.BlockSpec((n_kv_heads, seq, head_dim), lambda i: (0, 0, 0),
                         pipeline_mode=resident),                               # K rotated
            pl.BlockSpec((n_kv_heads, seq, head_dim), lambda i: (0, 0, 0),
                         pipeline_mode=resident),                               # V
            pl.BlockSpec((tile_s, head_dim), lambda i: (i, 0)),                 # cos_q
            pl.BlockSpec((tile_s, head_dim), lambda i: (i, 0)),                 # sin_q
        ],
        out_specs=pl.BlockSpec((tile_s, dim), lambda i: (i, 0)),
        scratch_shapes=[
            pltpu.VMEM((group * tile_s, 1), F32),          # online-softmax m
            pltpu.VMEM((group * tile_s, 1), F32),          # online-softmax l
            pltpu.VMEM((group * tile_s, head_dim), F32),   # online-softmax acc
        ],
        compiler_params=pltpu.CompilerParams(
            dimension_semantics=("parallel",),
            vmem_limit_bytes=_vmem_budget(k2_res, k2_str)),
    )(x, prep["attn_norm"], prep["ffn_norm"], prep["wq"], prep["wo"],
      prep["w13"], prep["w2"], k_rot, v_heads, prep["cos_q"], prep["sin_q"])

    return out


# ----------------------------------------------------------------------------
# Pure-JAX reference mirroring the PyTorch forward (per-head loop, interleaved
# complex RoPE), used only for a correctness check.
# ----------------------------------------------------------------------------
def reference_block(x, params, *, n_heads, n_kv_heads, rope_theta, norm_eps):
    seq, dim = x.shape
    head_dim = dim // n_heads
    wq, wk, wv, wo = params["wq"], params["wk"], params["wv"], params["wo"]
    w1, w2, w3 = params["w1"], params["w2"], params["w3"]
    attn_nw, ffn_nw = params["attention_norm"], params["ffn_norm"]

    def rms(t, w):
        tf = t.astype(F32)
        return (tf * lax.rsqrt(jnp.mean(tf * tf, -1, keepdims=True) + norm_eps)
                * w.astype(F32)).astype(BF16)

    def rotary(t_bf16):
        tf = t_bf16.astype(F32)
        s, hd = tf.shape
        nparts = hd // 2
        zto = jnp.arange(nparts, dtype=F32) / nparts
        freqs = 1.0 / (rope_theta ** zto)
        ang = jnp.outer(jnp.arange(s, dtype=F32), freqs)
        c, sn = jnp.cos(ang), jnp.sin(ang)
        tp = tf.reshape(s, nparts, 2)
        re = tp[..., 0] * c - tp[..., 1] * sn
        im = tp[..., 0] * sn + tp[..., 1] * c
        return jnp.stack([re, im], axis=-1).reshape(s, hd)

    hp = jax.lax.Precision.HIGHEST
    xn = rms(x, attn_nw)
    group = n_heads // n_kv_heads
    mask = jnp.where(jnp.triu(jnp.ones((seq, seq), bool), 1),
                     jnp.float32(-jnp.inf), jnp.float32(0.0))
    outs = []
    for h in range(n_heads):
        kv = h // group
        wq_h = wq[h * head_dim:(h + 1) * head_dim]
        wk_h = wk[kv * head_dim:(kv + 1) * head_dim]
        wv_h = wv[kv * head_dim:(kv + 1) * head_dim]
        q = jnp.dot(xn, wq_h.T, preferred_element_type=F32).astype(BF16)
        k = jnp.dot(xn, wk_h.T, preferred_element_type=F32).astype(BF16)
        v = jnp.dot(xn, wv_h.T, preferred_element_type=F32).astype(BF16)
        qr, kr = rotary(q), rotary(k)
        scores = jnp.dot(qr, kr.T, precision=hp) / (head_dim ** 0.5) + mask
        probs = jax.nn.softmax(scores, axis=-1).astype(BF16)
        outs.append(jnp.dot(probs, v, preferred_element_type=F32).astype(BF16))
    stacked = jnp.concatenate(outs, axis=-1)
    attn_delta = jnp.dot(stacked, wo.T, preferred_element_type=F32).astype(BF16)
    h_res = (x.astype(F32) + attn_delta.astype(F32)).astype(BF16)

    hn = rms(h_res, ffn_nw)
    a = jnp.dot(hn, w1.T, preferred_element_type=F32).astype(BF16)
    b = jnp.dot(hn, w3.T, preferred_element_type=F32).astype(BF16)
    af = a.astype(F32)
    gated = (af * jax.nn.sigmoid(af)).astype(BF16) * b
    ffn_delta = jnp.dot(gated, w2.T, preferred_element_type=F32).astype(BF16)
    return (h_res.astype(F32) + ffn_delta.astype(F32)).astype(BF16)


# ----------------------------------------------------------------------------
if __name__ == "__main__":
    # Small ModelArgs-consistent shapes; head_dim=128 matches Llama-3 (lane-dense).
    seq = 512
    dim = 512
    n_heads = 4
    n_kv_heads = 2
    head_dim = dim // n_heads                      # 128
    ffn_dim_multiplier = 2.0
    multiple_of = 256
    rope_theta = 500000.0
    norm_eps = 1e-5
    hidden_dim = int(dim * ffn_dim_multiplier)
    hidden_dim = multiple_of * ((hidden_dim + multiple_of - 1) // multiple_of)  # 1024

    key = jax.random.PRNGKey(0)
    ks = jax.random.split(key, 10)

    def w(k, shape):
        return (0.02 * jax.random.normal(k, shape, F32)).astype(BF16)

    # PyTorch/Llama checkpoint-style shapes: (out_features, in_features).
    params = {
        "wq": w(ks[1], (n_heads * head_dim, dim)),
        "wk": w(ks[2], (n_kv_heads * head_dim, dim)),
        "wv": w(ks[3], (n_kv_heads * head_dim, dim)),
        "wo": w(ks[4], (dim, n_heads * head_dim)),
        "w1": w(ks[5], (hidden_dim, dim)),
        "w2": w(ks[6], (dim, hidden_dim)),
        "w3": w(ks[7], (hidden_dim, dim)),
        "attention_norm": (jnp.ones((dim,), F32)
                           + 0.02 * jax.random.normal(ks[8], (dim,), F32)).astype(BF16),
        "ffn_norm": (jnp.ones((dim,), F32)
                     + 0.02 * jax.random.normal(ks[9], (dim,), F32)).astype(BF16),
    }
    x = jax.random.normal(ks[0], (seq, dim), F32).astype(BF16)

    # One-time weight preparation (transpose / de-interleave / fuse / tables).
    prep = prepare_block_params(params, seq=seq, n_heads=n_heads,
                                n_kv_heads=n_kv_heads, rope_theta=rope_theta)

    out = transformer_block_forward(x, prep, n_heads=n_heads,
                                    n_kv_heads=n_kv_heads, norm_eps=norm_eps,
                                    tile_s=None)   # per-generation tile size
    out = jax.block_until_ready(out)

    ref = reference_block(x, params, n_heads=n_heads, n_kv_heads=n_kv_heads,
                          rope_theta=rope_theta, norm_eps=norm_eps)
    ref = jax.block_until_ready(ref)

    assert out.shape == (seq, dim) and out.dtype == BF16
    np.testing.assert_allclose(np.asarray(out, dtype=np.float32),
                               np.asarray(ref, dtype=np.float32),
                               rtol=5e-2, atol=5e-2)
    print("KERNEL_OK")
</pallas_src>

<mosaic_0001>
module attributes {stable_mosaic.version = 11 : i64} {
  func.func @_kv_kernel(%arg0: i32, %arg1: memref<256x512xbf16, #tpu.memory_space<vmem>>, %arg2: memref<1x512xbf16, #tpu.memory_space<vmem>>, %arg3: memref<512x256xbf16, #tpu.memory_space<vmem>>, %arg4: memref<512x256xbf16, #tpu.memory_space<vmem>>, %arg5: memref<256x128xf32, #tpu.memory_space<vmem>>, %arg6: memref<256x128xf32, #tpu.memory_space<vmem>>, %arg7: memref<2x256x128xbf16, #tpu.memory_space<vmem>>, %arg8: memref<2x256x128xbf16, #tpu.memory_space<vmem>>) attributes {dimension_semantics = [#tpu.dimension_semantics<parallel>], iteration_bounds = array<i64: 2>, scalar_prefetch = 0 : i64, scratch_operands = 0 : i64, tpu.core_type = #tpu.core_type<tc>, window_params = [{transform_indices = @transform_0, window_bounds = array<i64: 256, 512>}, {pipeline_mode = #tpu.pipeline_mode<synchronous>, transform_indices = @transform_1, window_bounds = array<i64: 1, 512>}, {pipeline_mode = #tpu.pipeline_mode<synchronous>, transform_indices = @transform_2, window_bounds = array<i64: 512, 256>}, {pipeline_mode = #tpu.pipeline_mode<synchronous>, transform_indices = @transform_3, window_bounds = array<i64: 512, 256>}, {transform_indices = @transform_4, window_bounds = array<i64: 256, 128>}, {transform_indices = @transform_5, window_bounds = array<i64: 256, 128>}, {transform_indices = @transform_6, window_bounds = array<i64: 2, 256, 128>}, {transform_indices = @transform_7, window_bounds = array<i64: 2, 256, 128>}]} {
    %c0 = arith.constant 0 : index
    %c0_0 = arith.constant 0 : index
    %0 = vector.load %arg1[%c0, %c0_0] : memref<256x512xbf16, #tpu.memory_space<vmem>>, vector<256x512xbf16>
    %1 = arith.extf %0 : vector<256x512xbf16> to vector<256x512xf32>
    %c0_1 = arith.constant 0 : index
    %c0_2 = arith.constant 0 : index
    %2 = vector.load %arg2[%c0_1, %c0_2] : memref<1x512xbf16, #tpu.memory_space<vmem>>, vector<1x512xbf16>
    %3 = vector.shape_cast %2 : vector<1x512xbf16> to vector<512xbf16>
    %4 = arith.mulf %1, %1 : vector<256x512xf32>
    %cst = arith.constant dense<0.000000e+00> : vector<256xf32>
    %5 = vector.multi_reduction <add>, %4, %cst [1] : vector<256x512xf32> to vector<256xf32>
    %6 = vector.shape_cast %5 : vector<256xf32> to vector<256x1xf32>
    %cst_3 = arith.constant 5.120000e+02 : f32
    %7 = vector.broadcast %cst_3 : f32 to vector<256x1xf32>
    %8 = arith.divf %6, %7 : vector<256x1xf32>
    %cst_4 = arith.constant 9.99999974E-6 : f32
    %9 = vector.broadcast %cst_4 : f32 to vector<256x1xf32>
    %10 = arith.addf %8, %9 : vector<256x1xf32>
    %11 = math.rsqrt %10 : vector<256x1xf32>
    %12 = vector.broadcast %11 : vector<256x1xf32> to vector<256x512xf32>
    %13 = arith.mulf %1, %12 : vector<256x512xf32>
    %14 = arith.extf %3 : vector<512xbf16> to vector<512xf32>
    %15 = vector.shape_cast %14 : vector<512xf32> to vector<1x512xf32>
    %16 = vector.broadcast %15 : vector<1x512xf32> to vector<256x512xf32>
    %17 = arith.mulf %13, %16 : vector<256x512xf32>
    %18 = arith.truncf %17 : vector<256x512xf32> to vector<256x512xbf16>
    %c0_5 = arith.constant 0 : index
    %c0_6 = arith.constant 0 : index
    %19 = vector.load %arg3[%c0_5, %c0_6] : memref<512x256xbf16, #tpu.memory_space<vmem>>, vector<512x256xbf16>
    %cst_7 = arith.constant dense<0.000000e+00> : vector<256x256xf32>
    %20 = tpu.matmul %18, %19, %cst_7 {dimension_numbers = #tpu.dot_dimension_numbers<[1], [0], [0], [1], [0, 0, 1, 1], [], []>} : vector<256x512xbf16>, vector<512x256xbf16>, vector<256x256xf32> -> vector<256x256xf32>
    %c0_8 = arith.constant 0 : index
    %c0_9 = arith.constant 0 : index
    %21 = vector.load %arg4[%c0_8, %c0_9] : memref<512x256xbf16, #tpu.memory_space<vmem>>, vector<512x256xbf16>
    %cst_10 = arith.constant dense<0.000000e+00> : vector<256x256xf32>
    %22 = tpu.matmul %18, %21, %cst_10 {dimension_numbers = #tpu.dot_dimension_numbers<[1], [0], [0], [1], [0, 0, 1, 1], [], []>} : vector<256x512xbf16>, vector<512x256xbf16>, vector<256x256xf32> -> vector<256x256xf32>
    %c0_11 = arith.constant 0 : index
    %c0_12 = arith.constant 0 : index
    %23 = vector.load %arg5[%c0_11, %c0_12] : memref<256x128xf32, #tpu.memory_space<vmem>>, vector<256x128xf32>
    %c0_13 = arith.constant 0 : index
    %c0_14 = arith.constant 0 : index
    %24 = vector.load %arg6[%c0_13, %c0_14] : memref<256x128xf32, #tpu.memory_space<vmem>>, vector<256x128xf32>
    %25 = vector.extract_strided_slice %20 {offsets = [0, 0], sizes = [256, 128], strides = [1, 1]} : vector<256x256xf32> to vector<256x128xf32>
    %26 = vector.extract_strided_slice %25 {offsets = [0, 64], sizes = [256, 64], strides = [1, 1]} : vector<256x128xf32> to vector<256x64xf32>
    %27 = vector.extract_strided_slice %25 {offsets = [0, 0], sizes = [256, 64], strides = [1, 1]} : vector<256x128xf32> to vector<256x64xf32>
    %28 = tpu.concatenate %26, %27 in 1 : vector<256x64xf32>, vector<256x64xf32> -> vector<256x128xf32>
    %29 = arith.mulf %25, %23 : vector<256x128xf32>
    %30 = arith.mulf %28, %24 : vector<256x128xf32>
    %31 = arith.addf %29, %30 : vector<256x128xf32>
    %32 = arith.truncf %31 : vector<256x128xf32> to vector<256x128xbf16>
    %c0_15 = arith.constant 0 : index
    %c0_16 = arith.constant 0 : index
    %c0_17 = arith.constant 0 : index
    %33 = vector.load %arg7[%c0_15, %c0_16, %c0_17] : memref<2x256x128xbf16, #tpu.memory_space<vmem>>, vector<1x256x128xbf16>
    %34 = vector.shape_cast %33 : vector<1x256x128xbf16> to vector<256x128xbf16>
    %35 = vector.shape_cast %32 : vector<256x128xbf16> to vector<1x256x128xbf16>
    tpu.vector_store %arg7[%c0_15, %c0_16, %c0_17], %35 {strides = array<i32>} : memref<2x256x128xbf16, #tpu.memory_space<vmem>>, vector<1x256x128xbf16>,
    %36 = vector.extract_strided_slice %22 {offsets = [0, 0], sizes = [256, 128], strides = [1, 1]} : vector<256x256xf32> to vector<256x128xf32>
    %37 = arith.truncf %36 : vector<256x128xf32> to vector<256x128xbf16>
    %c0_18 = arith.constant 0 : index
    %c0_19 = arith.constant 0 : index
    %c0_20 = arith.constant 0 : index
    %38 = vector.load %arg8[%c0_18, %c0_19, %c0_20] : memref<2x256x128xbf16, #tpu.memory_space<vmem>>, vector<1x256x128xbf16>
    %39 = vector.shape_cast %38 : vector<1x256x128xbf16> to vector<256x128xbf16>
    %40 = vector.shape_cast %37 : vector<256x128xbf16> to vector<1x256x128xbf16>
    tpu.vector_store %arg8[%c0_18, %c0_19, %c0_20], %40 {strides = array<i32>} : memref<2x256x128xbf16, #tpu.memory_space<vmem>>, vector<1x256x128xbf16>,
    %41 = vector.extract_strided_slice %20 {offsets = [0, 128], sizes = [256, 128], strides = [1, 1]} : vector<256x256xf32> to vector<256x128xf32>
    %42 = vector.extract_strided_slice %41 {offsets = [0, 64], sizes = [256, 64], strides = [1, 1]} : vector<256x128xf32> to vector<256x64xf32>
    %43 = vector.extract_strided_slice %41 {offsets = [0, 0], sizes = [256, 64], strides = [1, 1]} : vector<256x128xf32> to vector<256x64xf32>
    %44 = tpu.concatenate %42, %43 in 1 : vector<256x64xf32>, vector<256x64xf32> -> vector<256x128xf32>
    %45 = arith.mulf %41, %23 : vector<256x128xf32>
    %46 = arith.mulf %44, %24 : vector<256x128xf32>
    %47 = arith.addf %45, %46 : vector<256x128xf32>
    %48 = arith.truncf %47 : vector<256x128xf32> to vector<256x128xbf16>
    %c1 = arith.constant 1 : index
    %c0_21 = arith.constant 0 : index
    %c0_22 = arith.constant 0 : index
    %49 = vector.load %arg7[%c1, %c0_21, %c0_22] : memref<2x256x128xbf16, #tpu.memory_space<vmem>>, vector<1x256x128xbf16>
    %50 = vector.shape_cast %49 : vector<1x256x128xbf16> to vector<256x128xbf16>
    %51 = vector.shape_cast %48 : vector<256x128xbf16> to vector<1x256x128xbf16>
    tpu.vector_store %arg7[%c1, %c0_21, %c0_22], %51 {strides = array<i32>} : memref<2x256x128xbf16, #tpu.memory_space<vmem>>, vector<1x256x128xbf16>,
    %52 = vector.extract_strided_slice %22 {offsets = [0, 128], sizes = [256, 128], strides = [1, 1]} : vector<256x256xf32> to vector<256x128xf32>
    %53 = arith.truncf %52 : vector<256x128xf32> to vector<256x128xbf16>
    %c1_23 = arith.constant 1 : index
    %c0_24 = arith.constant 0 : index
    %c0_25 = arith.constant 0 : index
    %54 = vector.load %arg8[%c1_23, %c0_24, %c0_25] : memref<2x256x128xbf16, #tpu.memory_space<vmem>>, vector<1x256x128xbf16>
    %55 = vector.shape_cast %54 : vector<1x256x128xbf16> to vector<256x128xbf16>
    %56 = vector.shape_cast %53 : vector<256x128xbf16> to vector<1x256x128xbf16>
    tpu.vector_store %arg8[%c1_23, %c0_24, %c0_25], %56 {strides = array<i32>} : memref<2x256x128xbf16, #tpu.memory_space<vmem>>, vector<1x256x128xbf16>,
    return
  }
  func.func @transform_0(%arg0: i32) -> (i32, i32) {
    %c0_i32 = arith.constant 0 : i32
    %c0_i32_0 = arith.constant 0 : i32
    return %arg0, %c0_i32 : i32, i32
  }
  func.func @transform_1(%arg0: i32) -> (i32, i32) {
    %c0_i32 = arith.constant 0 : i32
    %c0_i32_0 = arith.constant 0 : i32
    %c0_i32_1 = arith.constant 0 : i32
    return %c0_i32, %c0_i32_0 : i32, i32
  }
  func.func @transform_2(%arg0: i32) -> (i32, i32) {
    %c0_i32 = arith.constant 0 : i32
    %c0_i32_0 = arith.constant 0 : i32
    %c0_i32_1 = arith.constant 0 : i32
    return %c0_i32, %c0_i32_0 : i32, i32
  }
  func.func @transform_3(%arg0: i32) -> (i32, i32) {
    %c0_i32 = arith.constant 0 : i32
    %c0_i32_0 = arith.constant 0 : i32
    %c0_i32_1 = arith.constant 0 : i32
    return %c0_i32, %c0_i32_0 : i32, i32
  }
  func.func @transform_4(%arg0: i32) -> (i32, i32) {
    %c0_i32 = arith.constant 0 : i32
    %c0_i32_0 = arith.constant 0 : i32
    return %arg0, %c0_i32 : i32, i32
  }
  func.func @transform_5(%arg0: i32) -> (i32, i32) {
    %c0_i32 = arith.constant 0 : i32
    %c0_i32_0 = arith.constant 0 : i32
    return %arg0, %c0_i32 : i32, i32
  }
  func.func @transform_6(%arg0: i32) -> (i32, i32, i32) {
    %c0_i32 = arith.constant 0 : i32
    %c0_i32_0 = arith.constant 0 : i32
    %c0_i32_1 = arith.constant 0 : i32
    return %c0_i32, %arg0, %c0_i32_0 : i32, i32, i32
  }
  func.func @transform_7(%arg0: i32) -> (i32, i32, i32) {
    %c0_i32 = arith.constant 0 : i32
    %c0_i32_0 = arith.constant 0 : i32
    %c0_i32_1 = arith.constant 0 : i32
    return %c0_i32, %arg0, %c0_i32_0 : i32, i32, i32
  }
}

</mosaic_0001>

<llo_original>
// kernel: tpu_custom_call.1
$region0: #{tpu_custom_call.1}
  #allocation0 [shape = 'u32[]', space=smem, size = 0x4, offset = 0x4, fixed_abs, tag = 'smem constant byte address 0x4 - core index']
  #allocation1 [shape = 'u32[72,128]{1,0:T(1,128)}', space=vmem, size = 0x9000, scoped, tag = 'internal scratch']
  #allocation15 [shape = 's32[]', space=sflag, size = 0x4, offset = 0, fixed_abs, tag = 'sflag constant byte address 0x0 - dummy sync flag']
  #allocation17 [shape = 's32[]', space=sflag, size = 0x4, offset = 0, fixed_abs, tag = 'sflag constant byte address 0x0 - dummy sync flag']
  %s0 = inlined_call_operand.hbm [shape: bf16[512,512], index: 0, kind: input, shape index: {}]
  %s1 = inlined_call_operand.hbm [shape: bf16[1,512], index: 1, kind: input, shape index: {}]
  %s2 = inlined_call_operand.hbm [shape: bf16[512,256], index: 2, kind: input, shape index: {}]
  %s3 = inlined_call_operand.hbm [shape: bf16[512,256], index: 3, kind: input, shape index: {}]
  %s4 = inlined_call_operand.hbm [shape: f32[512,128], index: 4, kind: input, shape index: {}]
  %s5 = inlined_call_operand.hbm [shape: f32[512,128], index: 5, kind: input, shape index: {}]
  %s6 = inlined_call_operand.hbm [shape: bf16[2,512,128], index: 6, kind: output, shape index: {0}]
  %s7 = inlined_call_operand.hbm [shape: bf16[2,512,128], index: 7, kind: output, shape index: {1}]
  %8 = xla_tuple %s6, %s7
  %s9 = sld [smem:[#allocation0]]
  $region89: #{tpu_custom_call.1} parent=0
    _
  %s11 = ssub.s32 1, %s9
  %s12 = scalar_select 0, %s11, %s9
  $region1: #{tpu_custom_call.1} parent=0
    #allocation2 [shape = 'u8[524288]{0}', space=vmem, size = 0x80000, scoped, tag = 'input window, operand 0']
    #allocation3 [shape = 's32[2]{0}', space=sflag, size = 0x8, scoped, tag = 'scoped memory for tpu_custom_call.1']
    #allocation4 [shape = 's32[2]{0}', space=sflag, size = 0x8, scoped, tag = 'scoped memory for tpu_custom_call.1']
    #allocation5 [shape = 'u8[2048]{0}', space=vmem, size = 0x800, scoped, tag = 'input window, operand 1, single buffered']
    #allocation6 [shape = 's32[1]{0}', space=sflag, size = 0x4, scoped, tag = 'scoped memory for tpu_custom_call.1']
    #allocation7 [shape = 'u8[262144]{0}', space=vmem, size = 0x40000, scoped, tag = 'input window, operand 2, single buffered']
    #allocation8 [shape = 'u8[262144]{0}', space=vmem, size = 0x40000, scoped, tag = 'input window, operand 3, single buffered']
    #allocation9 [shape = 's32[1]{0}', space=sflag, size = 0x4, scoped, tag = 'scoped memory for tpu_custom_call.1']
    #allocation10 [shape = 'u8[262144]{0}', space=vmem, size = 0x40000, scoped, tag = 'input window, operand 4']
    #allocation11 [shape = 'u8[262144]{0}', space=vmem, size = 0x40000, scoped, tag = 'input window, operand 5']
    #allocation12 [shape = 'u8[262144]{0}', space=vmem, size = 0x40000, scoped, tag = 'output window, operand 0']
    #allocation13 [shape = 'u8[262144]{0}', space=vmem, size = 0x40000, scoped, tag = 'output window, operand 1']
    #allocation14 [shape = 's32[2]{0}', space=sflag, size = 0x8, scoped, tag = 'scoped memory for tpu_custom_call.1']
    %13 = vsyncpa [#allocation3], 0
    %s14 = scalar_lea.sflag [#allocation3], 1
    %15 = vsyncpa %s14, 0
    %16 = vsyncpa [#allocation6], 0
    %17 = vsyncpa [#allocation9], 0
    %18 = vsyncpa [#allocation4], 0
    %s19 = scalar_lea.sflag [#allocation4], 1
    %20 = vsyncpa %s19, 0
    %21 = vsyncpa [#allocation14], 0
    %s22 = scalar_lea.sflag [#allocation14], 1
    %23 = vsyncpa %s22, 0
    loop: start=0, step=1, limit=4
    $region2: #{tpu_custom_call.1} parent=1 // loop_pre_header
      _
    $region3: #{tpu_custom_call.1} parent=1 // loop_header
      %s25 = sphi 0, %s29
      %p26 = scmp.ge.s32.totalorder %s25, 4
      %s35 = sphi 0, %s37
      %s38 = sphi 0, %s35
      %s39 = sphi 0, %s38
      %s55 = sphi 0, %s39
      %s59 = sphi 0, %s59
      %s61 = sphi 0, %s59
      %s62 = sphi 0, %s61
      %s76 = sphi 0, %s62
      %s80 = sphi 0, %s80
      %s82 = sphi 0, %s80
      %s83 = sphi 0, %s82
      %s97 = sphi 0, %s83
      %s101 = sphi 0, %s101
      %s103 = sphi 0, %s101
      %s104 = sphi 0, %s103
      %s118 = sphi 0, %s104
      %s124 = sphi 0, %s126
      %s127 = sphi 0, %s124
      %s128 = sphi 0, %s127
      %s144 = sphi 0, %s128
      %s150 = sphi 0, %s152
      %s153 = sphi 0, %s150
      %s154 = sphi 0, %s153
      %s170 = sphi 0, %s154
      %s176 = sphi 0, %s178
      %s179 = sphi 0, %s176
      %s180 = sphi 0, %s179
      %s196 = sphi 0, %s180
      %s202 = sphi 0, %s204
      %s205 = sphi 0, %s202
      %s206 = sphi 0, %s205
      %s222 = sphi 0, %s206
    $region4: #{tpu_custom_call.1} parent=1 // loop_header_branch
      %28 = sbr.rel (%p26) target = $region8
    $region5: #{tpu_custom_call.1} parent=1 // loop_body
      %s30 = ssub.s32 %s25, 1
      %s31 = ssub.s32 %s25, 2
      %s32 = sadd.s32 %s25, 1
      %s33 = ssub.s32 %s25, %s32
      %p34 = scmp.eq.s32.totalorder %s33, 0
      %s36 = sadd.s32 %s35, 1
      %s37 = scalar_select %p34, %s35, %s36
      %p40 = pneg %p34
      %p41 = scmp.eq.s32.totalorder %s25, 1
      %p42 = por %p40, %p41
      %p43 = scmp.ne.s32.totalorder %s35, %s38
      %p44 = scmp.eq.s32.totalorder %s25, 0
      %p45 = por %p43, %p44
      %p46 = scmp.ne.s32.totalorder %s35, %s38
      %p47 = scmp.eq.s32.totalorder %s30, 1
      %p48 = por %p46, %p47
      %p49 = scmp.ne.s32.totalorder %s38, %s39
      %p50 = scmp.eq.s32.totalorder %s30, 0
      %p51 = por %p49, %p50
      %p52 = scmp.ne.s32.totalorder %s38, %s39
      %p53 = scmp.eq.s32.totalorder %s31, 1
      %p54 = por %p52, %p53
      %p56 = scmp.ne.s32.totalorder %s39, %s55
      %p57 = scmp.eq.s32.totalorder %s31, 0
      %p58 = por %p56, %p57
      %s60 = sadd.s32 %s59, 1
      %p63 = scmp.eq.s32.totalorder %s25, 1
      %p64 = scmp.ne.s32.totalorder %s59, %s61
      %p65 = scmp.eq.s32.totalorder %s25, 0
      %p66 = por %p64, %p65
      %p67 = scmp.ne.s32.totalorder %s59, %s61
      %p68 = scmp.eq.s32.totalorder %s30, 1
      %p69 = por %p67, %p68
      %p70 = scmp.ne.s32.totalorder %s61, %s62
      %p71 = scmp.eq.s32.totalorder %s30, 0
      %p72 = por %p70, %p71
      %p73 = scmp.ne.s32.totalorder %s61, %s62
      %p74 = scmp.eq.s32.totalorder %s31, 1
      %p75 = por %p73, %p74
      %p77 = scmp.ne.s32.totalorder %s62, %s76
      %p78 = scmp.eq.s32.totalorder %s31, 0
      %p79 = por %p77, %p78
      %s81 = sadd.s32 %s80, 1
      %p84 = scmp.eq.s32.totalorder %s25, 1
      %p85 = scmp.ne.s32.totalorder %s80, %s82
      %p86 = scmp.eq.s32.totalorder %s25, 0
      %p87 = por %p85, %p86
      %p88 = scmp.ne.s32.totalorder %s80, %s82
      %p89 = scmp.eq.s32.totalorder %s30, 1
      %p90 = por %p88, %p89
      %p91 = scmp.ne.s32.totalorder %s82, %s83
      %p92 = scmp.eq.s32.totalorder %s30, 0
      %p93 = por %p91, %p92
      %p94 = scmp.ne.s32.totalorder %s82, %s83
      %p95 = scmp.eq.s32.totalorder %s31, 1
      %p96 = por %p94, %p95
      %p98 = scmp.ne.s32.totalorder %s83, %s97
      %p99 = scmp.eq.s32.totalorder %s31, 0
      %p100 = por %p98, %p99
      %s102 = sadd.s32 %s101, 1
      %p105 = scmp.eq.s32.totalorder %s25, 1
      %p106 = scmp.ne.s32.totalorder %s101, %s103
      %p107 = scmp.eq.s32.totalorder %s25, 0
      %p108 = por %p106, %p107
      %p109 = scmp.ne.s32.totalorder %s101, %s103
      %p110 = scmp.eq.s32.totalorder %s30, 1
      %p111 = por %p109, %p110
      %p112 = scmp.ne.s32.totalorder %s103, %s104
      %p113 = scmp.eq.s32.totalorder %s30, 0
      %p114 = por %p112, %p113
      %p115 = scmp.ne.s32.totalorder %s103, %s104
      %p116 = scmp.eq.s32.totalorder %s31, 1
      %p117 = por %p115, %p116
      %p119 = scmp.ne.s32.totalorder %s104, %s118
      %p120 = scmp.eq.s32.totalorder %s31, 0
      %p121 = por %p119, %p120
      %s122 = ssub.s32 %s25, %s32
      %p123 = scmp.eq.s32.totalorder %s122, 0
      %s125 = sadd.s32 %s124, 1
      %s126 = scalar_select %p123, %s124, %s125
      %p129 = pneg %p123
      %p130 = scmp.eq.s32.totalorder %s25, 1
      %p131 = por %p129, %p130
      %p132 = scmp.ne.s32.totalorder %s124, %s127
      %p133 = scmp.eq.s32.totalorder %s25, 0
      %p134 = por %p132, %p133
      %p135 = scmp.ne.s32.totalorder %s124, %s127
      %p136 = scmp.eq.s32.totalorder %s30, 1
      %p137 = por %p135, %p136
      %p138 = scmp.ne.s32.totalorder %s127, %s128
      %p139 = scmp.eq.s32.totalorder %s30, 0
      %p140 = por %p138, %p139
      %p141 = scmp.ne.s32.totalorder %s127, %s128
      %p142 = scmp.eq.s32.totalorder %s31, 1
      %p143 = por %p141, %p142
      %p145 = scmp.ne.s32.totalorder %s128, %s144
      %p146 = scmp.eq.s32.totalorder %s31, 0
      %p147 = por %p145, %p146
      %s148 = ssub.s32 %s25, %s32
      %p149 = scmp.eq.s32.totalorder %s148, 0
      %s151 = sadd.s32 %s150, 1
      %s152 = scalar_select %p149, %s150, %s151
      %p155 = pneg %p149
      %p156 = scmp.eq.s32.totalorder %s25, 1
      %p157 = por %p155, %p156
      %p158 = scmp.ne.s32.totalorder %s150, %s153
      %p159 = scmp.eq.s32.totalorder %s25, 0
      %p160 = por %p158, %p159
      %p161 = scmp.ne.s32.totalorder %s150, %s153
      %p162 = scmp.eq.s32.totalorder %s30, 1
      %p163 = por %p161, %p162
      %p164 = scmp.ne.s32.totalorder %s153, %s154
      %p165 = scmp.eq.s32.totalorder %s30, 0
      %p166 = por %p164, %p165
      %p167 = scmp.ne.s32.totalorder %s153, %s154
      %p168 = scmp.eq.s32.totalorder %s31, 1
      %p169 = por %p167, %p168
      %p171 = scmp.ne.s32.totalorder %s154, %s170
      %p172 = scmp.eq.s32.totalorder %s31, 0
      %p173 = por %p171, %p172
      %s174 = ssub.s32 %s25, %s32
      %p175 = scmp.eq.s32.totalorder %s174, 0
      %s177 = sadd.s32 %s176, 1
      %s178 = scalar_select %p175, %s176, %s177
      %p181 = pneg %p175
      %p182 = scmp.eq.s32.totalorder %s25, 1
      %p183 = por %p181, %p182
      %p184 = scmp.ne.s32.totalorder %s176, %s179
      %p185 = scmp.eq.s32.totalorder %s25, 0
      %p186 = por %p184, %p185
      %p187 = scmp.ne.s32.totalorder %s176, %s179
      %p188 = scmp.eq.s32.totalorder %s30, 1
      %p189 = por %p187, %p188
      %p190 = scmp.ne.s32.totalorder %s179, %s180
      %p191 = scmp.eq.s32.totalorder %s30, 0
      %p192 = por %p190, %p191
      %p193 = scmp.ne.s32.totalorder %s179, %s180
      %p194 = scmp.eq.s32.totalorder %s31, 1
      %p195 = por %p193, %p194
      %p197 = scmp.ne.s32.totalorder %s180, %s196
      %p198 = scmp.eq.s32.totalorder %s31, 0
      %p199 = por %p197, %p198
      %s200 = ssub.s32 %s25, %s32
      %p201 = scmp.eq.s32.totalorder %s200, 0
      %s203 = sadd.s32 %s202, 1
      %s204 = scalar_select %p201, %s202, %s203
      %p207 = pneg %p201
      %p208 = scmp.eq.s32.totalorder %s25, 1
      %p209 = por %p207, %p208
      %p210 = scmp.ne.s32.totalorder %s202, %s205
      %p211 = scmp.eq.s32.totalorder %s25, 0
      %p212 = por %p210, %p211
      %p213 = scmp.ne.s32.totalorder %s202, %s205
      %p214 = scmp.eq.s32.totalorder %s30, 1
      %p215 = por %p213, %p214
      %p216 = scmp.ne.s32.totalorder %s205, %s206
      %p217 = scmp.eq.s32.totalorder %s30, 0
      %p218 = por %p216, %p217
      %p219 = scmp.ne.s32.totalorder %s205, %s206
      %p220 = scmp.eq.s32.totalorder %s31, 1
      %p221 = por %p219, %p220
      %p223 = scmp.ne.s32.totalorder %s206, %s222
      %p224 = scmp.eq.s32.totalorder %s31, 0
      %p225 = por %p223, %p224
      %p226 = scmp.le.s32.totalorder 1, %s25
      %p227 = scmp.lt.s32.totalorder %s25, 3
      %p228 = pnand %p226, %p227
      %p229 = pneg %p228
      // Predicated region
      $region9: #{tpu_custom_call.1} parent=5 // pred_check
        _
      $region10: #{tpu_custom_call.1} parent=5 // pred_check_branch
        %231 = sbr.rel (%p228) target = $region12
      $region11: #{tpu_custom_call.1} parent=5 // pred_region
        %s232 = ssub.s32 %s25, 1
        // Predicated region
        $region13: #{tpu_custom_call.1} parent=11 // pred_check
          %p233 = pneg %p72
        $region14: #{tpu_custom_call.1} parent=11 // pred_check_branch
          %235 = sbr.rel (%p233) target = $region16
        $region15: #{tpu_custom_call.1} parent=11 // pred_region
          %237 = vsyncadd [#allocation6], 0
          %s239 = sshll.u32 %s1, 4
          %s240 = int_to_ptr.hbm [resolvable:$true] %s239
          %s241 = sshll.u32 [#allocation5], 4
          %s242 = int_to_ptr.vmem [resolvable:$true] %s241
          %244 = dma.hbm_to_vmem [thread:$0]  %s240, 64, %s242, [#allocation6]
        $region16: #{tpu_custom_call.1} parent=11 // pred_fallthru
          _
        // Predicated region
        $region17: #{tpu_custom_call.1} parent=11 // pred_check
          %p245 = pneg %p93
        $region18: #{tpu_custom_call.1} parent=11 // pred_check_branch
          %247 = sbr.rel (%p245) target = $region20
        $region19: #{tpu_custom_call.1} parent=11 // pred_region
          %249 = vsyncadd [#allocation6], 0
          %s250 = sshll.u32 %s2, 4
          %s251 = int_to_ptr.hbm [resolvable:$true] %s250
          %s252 = sshll.u32 [#allocation7], 4
          %s253 = int_to_ptr.vmem [resolvable:$true] %s252
          %258 = dma.hbm_to_vmem [thread:$0]  %s251, 8192, %s253, [#allocation6], 128, 128, 8
        $region20: #{tpu_custom_call.1} parent=11 // pred_fallthru
          _
        // Predicated region
        $region21: #{tpu_custom_call.1} parent=11 // pred_check
          %p259 = pneg %p114
        $region22: #{tpu_custom_call.1} parent=11 // pred_check_branch
          %261 = sbr.rel (%p259) target = $region24
        $region23: #{tpu_custom_call.1} parent=11 // pred_region
          %263 = vsyncadd [#allocation9], 0
          %s264 = sshll.u32 %s3, 4
          %s265 = int_to_ptr.hbm [resolvable:$true] %s264
          %s266 = sshll.u32 [#allocation8], 4
          %s267 = int_to_ptr.vmem [resolvable:$true] %s266
          %272 = dma.hbm_to_vmem [thread:$0]  %s265, 8192, %s267, [#allocation9], 128, 128, 8
        $region24: #{tpu_custom_call.1} parent=11 // pred_fallthru
          _
      $region12: #{tpu_custom_call.1} parent=5 // pred_fallthru
        _
      %p273 = scmp.lt.s32.totalorder %s25, 2
      // Predicated region
      $region25: #{tpu_custom_call.1} parent=5 // pred_check
        %p274 = pneg %p273
      $region26: #{tpu_custom_call.1} parent=5 // pred_check_branch
        %276 = sbr.rel (%p274) target = $region28
      $region27: #{tpu_custom_call.1} parent=5 // pred_region
        // Predicated region
        $region29: #{tpu_custom_call.1} parent=27 // pred_check
          %p277 = pneg %p45
        $region30: #{tpu_custom_call.1} parent=27 // pred_check_branch
          %279 = sbr.rel (%p277) target = $region32
        $region31: #{tpu_custom_call.1} parent=27 // pred_region
          %s280 = sand.u32 %s25, 1
          %s281 = scalar_lea.sflag [#allocation3], %s280
          %s282 = sand.u32 %s35, 1
          %s283 = smul.addr %s282, 512
          %s284 = scalar_lea.vmem [#allocation2], %s283
          %s285 = smul.u32 32, %s25
          %287 = vsyncadd %s281, 0
          %s288 = smul.addr %s285, 4
          %s289 = smul.addr %s288, 4
          %s290 = scalar_lea.hbm %s0, %s289
          %s291 = sshll.u32 %s290, 4
          %s292 = int_to_ptr.hbm [resolvable:$true] %s291
          %s293 = sshll.u32 %s284, 4
          %s294 = int_to_ptr.vmem [resolvable:$true] %s293
          %299 = dma.hbm_to_vmem [thread:$0]  %s292, 8192, %s294, %s281, 256, 256, 16
        $region32: #{tpu_custom_call.1} parent=27 // pred_fallthru
          _
        // Predicated region
        $region33: #{tpu_custom_call.1} parent=27 // pred_check
          %p300 = pneg %p134
        $region34: #{tpu_custom_call.1} parent=27 // pred_check_branch
          %302 = sbr.rel (%p300) target = $region36
        $region35: #{tpu_custom_call.1} parent=27 // pred_region
          %s303 = sand.u32 %s25, 1
          %s304 = scalar_lea.sflag [#allocation3], %s303
          %s305 = sand.u32 %s124, 1
          %s306 = smul.addr %s305, 256
          %s307 = scalar_lea.vmem [#allocation10], %s306
          %s308 = smul.u32 32, %s25
          %310 = vsyncadd %s304, 0
          %s311 = smul.addr %s308, 8
          %s312 = scalar_lea.hbm %s4, %s311
          %s313 = sshll.u32 %s312, 4
          %s314 = int_to_ptr.hbm [resolvable:$true] %s313
          %s315 = sshll.u32 %s307, 4
          %s316 = int_to_ptr.vmem [resolvable:$true] %s315
          %321 = dma.hbm_to_vmem [thread:$0]  %s314, 4096, %s316, %s304, 128, 128, 8
        $region36: #{tpu_custom_call.1} parent=27 // pred_fallthru
          _
        // Predicated region
        $region37: #{tpu_custom_call.1} parent=27 // pred_check
          %p322 = pneg %p160
        $region38: #{tpu_custom_call.1} parent=27 // pred_check_branch
          %324 = sbr.rel (%p322) target = $region40
        $region39: #{tpu_custom_call.1} parent=27 // pred_region
          %s325 = sand.u32 %s25, 1
          %s326 = scalar_lea.sflag [#allocation3], %s325
          %s327 = sand.u32 %s150, 1
          %s328 = smul.addr %s327, 256
          %s329 = scalar_lea.vmem [#allocation11], %s328
          %s330 = smul.u32 32, %s25
          %332 = vsyncadd %s326, 0
          %s333 = smul.addr %s330, 8
          %s334 = scalar_lea.hbm %s5, %s333
          %s335 = sshll.u32 %s334, 4
          %s336 = int_to_ptr.hbm [resolvable:$true] %s335
          %s337 = sshll.u32 %s329, 4
          %s338 = int_to_ptr.vmem [resolvable:$true] %s337
          %343 = dma.hbm_to_vmem [thread:$0]  %s336, 4096, %s338, %s326, 128, 128, 8
        $region40: #{tpu_custom_call.1} parent=27 // pred_fallthru
          _
      $region28: #{tpu_custom_call.1} parent=5 // pred_fallthru
        _
      %p344 = scmp.le.s32.totalorder 1, %s25
      %p345 = scmp.lt.s32.totalorder %s25, 3
      %p346 = pnand %p344, %p345
      %p347 = pneg %p346
      // Predicated region
      $region41: #{tpu_custom_call.1} parent=5 // pred_check
        _
      $region42: #{tpu_custom_call.1} parent=5 // pred_check_branch
        %349 = sbr.rel (%p346) target = $region44
      $region43: #{tpu_custom_call.1} parent=5 // pred_region
        %s350 = ssub.s32 %s25, 1
        %s351 = sand.u32 %s30, 1
        %s352 = scalar_lea.sflag [#allocation3], %s351
        %s353 = sand.u32 %s38, 1
        %s354 = smul.addr %s353, 512
        %s355 = scalar_lea.vmem [#allocation2], %s354
        // Predicated region
        $region45: #{tpu_custom_call.1} parent=43 // pred_check
          %p356 = pneg %p51
        $region46: #{tpu_custom_call.1} parent=43 // pred_check_branch
          %358 = sbr.rel (%p356) target = $region48
        $region47: #{tpu_custom_call.1} parent=43 // pred_region
          %360 = dma.done %s352, 8192
        $region48: #{tpu_custom_call.1} parent=43 // pred_fallthru
          _
        // Predicated region
        $region49: #{tpu_custom_call.1} parent=43 // pred_check
          %p361 = pneg %p72
        $region50: #{tpu_custom_call.1} parent=43 // pred_check_branch
          %363 = sbr.rel (%p361) target = $region52
        $region51: #{tpu_custom_call.1} parent=43 // pred_region
          %365 = dma.done [#allocation6], 64
        $region52: #{tpu_custom_call.1} parent=43 // pred_fallthru
          _
        // Predicated region
        $region53: #{tpu_custom_call.1} parent=43 // pred_check
          %p366 = pneg %p93
        $region54: #{tpu_custom_call.1} parent=43 // pred_check_branch
          %368 = sbr.rel (%p366) target = $region56
        $region55: #{tpu_custom_call.1} parent=43 // pred_region
          %370 = dma.done [#allocation6], 8192
        $region56: #{tpu_custom_call.1} parent=43 // pred_fallthru
          _
        // Predicated region
        $region57: #{tpu_custom_call.1} parent=43 // pred_check
          %p371 = pneg %p114
        $region58: #{tpu_custom_call.1} parent=43 // pred_check_branch
          %373 = sbr.rel (%p371) target = $region60
        $region59: #{tpu_custom_call.1} parent=43 // pred_region
          %375 = dma.done [#allocation9], 8192
        $region60: #{tpu_custom_call.1} parent=43 // pred_fallthru
          _
        %s376 = sand.u32 %s30, 1
        %s377 = scalar_lea.sflag [#allocation3], %s376
        %s378 = sand.u32 %s127, 1
        %s379 = smul.addr %s378, 256
        %s380 = scalar_lea.vmem [#allocation10], %s379
        // Predicated region
        $region61: #{tpu_custom_call.1} parent=43 // pred_check
          %p381 = pneg %p140
        $region62: #{tpu_custom_call.1} parent=43 // pred_check_branch
          %383 = sbr.rel (%p381) target = $region64
        $region63: #{tpu_custom_call.1} parent=43 // pred_region
          %385 = dma.done %s377, 4096
        $region64: #{tpu_custom_call.1} parent=43 // pred_fallthru
          _
        %s386 = sand.u32 %s30, 1
        %s387 = scalar_lea.sflag [#allocation3], %s386
        %s388 = sand.u32 %s153, 1
        %s389 = smul.addr %s388, 256
        %s390 = scalar_lea.vmem [#allocation11], %s389
        // Predicated region
        $region65: #{tpu_custom_call.1} parent=43 // pred_check
          %p391 = pneg %p166
        $region66: #{tpu_custom_call.1} parent=43 // pred_check_branch
          %393 = sbr.rel (%p391) target = $region68
        $region67: #{tpu_custom_call.1} parent=43 // pred_region
          %395 = dma.done %s387, 4096
        $region68: #{tpu_custom_call.1} parent=43 // pred_fallthru
          _
        %s396 = sand.u32 %s30, 1
        %s397 = scalar_lea.sflag [#allocation3], %s396
        %s398 = sand.u32 %s38, 1
        %s399 = smul.addr %s398, 512
        %s400 = scalar_lea.vmem [#allocation2], %s399
        %p401 = pneg %p51
        %p402 = pneg %p48
        %p403 = pneg %p72
        %p404 = pneg %p69
        %p405 = pneg %p93
        %p406 = pneg %p90
        %p407 = pneg %p114
        %p408 = pneg %p111
        %s409 = sand.u32 %s30, 1
        %s410 = scalar_lea.sflag [#allocation3], %s409
        %s411 = sand.u32 %s127, 1
        %s412 = smul.addr %s411, 256
        %s413 = scalar_lea.vmem [#allocation10], %s412
        %p414 = pneg %p140
        %p415 = pneg %p137
        %s416 = sand.u32 %s30, 1
        %s417 = scalar_lea.sflag [#allocation3], %s416
        %s418 = sand.u32 %s153, 1
        %s419 = smul.addr %s418, 256
        %s420 = scalar_lea.vmem [#allocation11], %s419
        %p421 = pneg %p166
        %p422 = pneg %p163
        %p423 = pneg %p192
        %p424 = pneg %p189
        %s425 = sand.u32 %s179, 1
        %s426 = scalar_lea.sflag [#allocation4], %s425
        %s427 = sand.u32 %s179, 1
        %s428 = smul.addr %s427, 256
        %s429 = scalar_lea.vmem [#allocation12], %s428
        %p430 = pneg %p218
        %p431 = pneg %p215
        %s432 = sand.u32 %s205, 1
        %s433 = scalar_lea.sflag [#allocation14], %s432
        %s434 = sand.u32 %s205, 1
        %s435 = smul.addr %s434, 256
        %s436 = scalar_lea.vmem [#allocation13], %s435
        %s437 = smul.u32 32, %s30
        %s438 = smul.u32 32, %s30
        %s439 = smul.u32 32, %s30
        %s440 = smul.u32 32, %s30
        %s441 = smul.u32 32, %s30
        %v442 = vld [vmem:[%s355] sm:$0xff]
        %v443 = vld [vmem:[%s355 + $0x8] sm:$0xff]
        %v444 = vld [vmem:[%s355 + $0x10] sm:$0xff]
        %v445 = vld [vmem:[%s355 + $0x18] sm:$0xff]
        %v446 = vld [vmem:[%s355 + $0x20] sm:$0xff]
        %v447 = vld [vmem:[%s355 + $0x28] sm:$0xff]
        %v448 = vld [vmem:[%s355 + $0x30] sm:$0xff]
        %v449 = vld [vmem:[%s355 + $0x38] sm:$0xff]
        %v450 = vld [vmem:[%s355 + $0x40] sm:$0xff]
        %v451 = vld [vmem:[%s355 + $0x48] sm:$0xff]
        %v452 = vld [vmem:[%s355 + $0x50] sm:$0xff]
        %v453 = vld [vmem:[%s355 + $0x58] sm:$0xff]
        %v454 = vld [vmem:[%s355 + $0x60] sm:$0xff]
        %v455 = vld [vmem:[%s355 + $0x68] sm:$0xff]
        %v456 = vld [vmem:[%s355 + $0x70] sm:$0xff]
        %v457 = vld [vmem:[%s355 + $0x78] sm:$0xff]
        %v458 = vld [vmem:[%s355 + $0x80] sm:$0xff]
        %v459 = vld [vmem:[%s355 + $0x88] sm:$0xff]
        %v460 = vld [vmem:[%s355 + $0x90] sm:$0xff]
        %v461 = vld [vmem:[%s355 + $0x98] sm:$0xff]
        %v462 = vld [vmem:[%s355 + $0xa0] sm:$0xff]
        %v463 = vld [vmem:[%s355 + $0xa8] sm:$0xff]
        %v464 = vld [vmem:[%s355 + $0xb0] sm:$0xff]
        %v465 = vld [vmem:[%s355 + $0xb8] sm:$0xff]
        %v466 = vld [vmem:[%s355 + $0xc0] sm:$0xff]
        %v467 = vld [vmem:[%s355 + $0xc8] sm:$0xff]
        %v468 = vld [vmem:[%s355 + $0xd0] sm:$0xff]
        %v469 = vld [vmem:[%s355 + $0xd8] sm:$0xff]
        %v470 = vld [vmem:[%s355 + $0xe0] sm:$0xff]
        %v471 = vld [vmem:[%s355 + $0xe8] sm:$0xff]
        %v472 = vld [vmem:[%s355 + $0xf0] sm:$0xff]
        %v473 = vld [vmem:[%s355 + $0xf8] sm:$0xff]
        %v474 = vld [vmem:[%s355 + $0x100] sm:$0xff]
        %v475 = vld [vmem:[%s355 + $0x108] sm:$0xff]
        %v476 = vld [vmem:[%s355 + $0x110] sm:$0xff]
        %v477 = vld [vmem:[%s355 + $0x118] sm:$0xff]
        %v478 = vld [vmem:[%s355 + $0x120] sm:$0xff]
        %v479 = vld [vmem:[%s355 + $0x128] sm:$0xff]
        %v480 = vld [vmem:[%s355 + $0x130] sm:$0xff]
        %v481 = vld [vmem:[%s355 + $0x138] sm:$0xff]
        %v482 = vld [vmem:[%s355 + $0x140] sm:$0xff]
        %v483 = vld [vmem:[%s355 + $0x148] sm:$0xff]
        %v484 = vld [vmem:[%s355 + $0x150] sm:$0xff]
        %v485 = vld [vmem:[%s355 + $0x158] sm:$0xff]
        %v486 = vld [vmem:[%s355 + $0x160] sm:$0xff]
        %v487 = vld [vmem:[%s355 + $0x168] sm:$0xff]
        %v488 = vld [vmem:[%s355 + $0x170] sm:$0xff]
        %v489 = vld [vmem:[%s355 + $0x178] sm:$0xff]
        %v490 = vld [vmem:[%s355 + $0x180] sm:$0xff]
        %v491 = vld [vmem:[%s355 + $0x188] sm:$0xff]
        %v492 = vld [vmem:[%s355 + $0x190] sm:$0xff]
        %v493 = vld [vmem:[%s355 + $0x198] sm:$0xff]
        %v494 = vld [vmem:[%s355 + $0x1a0] sm:$0xff]
        %v495 = vld [vmem:[%s355 + $0x1a8] sm:$0xff]
        %v496 = vld [vmem:[%s355 + $0x1b0] sm:$0xff]
        %v497 = vld [vmem:[%s355 + $0x1b8] sm:$0xff]
        %v498 = vld [vmem:[%s355 + $0x1c0] sm:$0xff]
        %v499 = vld [vmem:[%s355 + $0x1c8] sm:$0xff]
        %v500 = vld [vmem:[%s355 + $0x1d0] sm:$0xff]
        %v501 = vld [vmem:[%s355 + $0x1d8] sm:$0xff]
        %v502 = vld [vmem:[%s355 + $0x1e0] sm:$0xff]
        %v503 = vld [vmem:[%s355 + $0x1e8] sm:$0xff]
        %v504 = vld [vmem:[%s355 + $0x1f0] sm:$0xff]
        %v505 = vld [vmem:[%s355 + $0x1f8] sm:$0xff]
        %v506 = vunpack.c.l.bf16 %v442
        %v507 = vunpack.c.h.bf16 %v442
        %v508 = vunpack.c.l.bf16 %v443
        %v509 = vunpack.c.h.bf16 %v443
        %v510 = vunpack.c.l.bf16 %v444
        %v511 = vunpack.c.h.bf16 %v444
        %v512 = vunpack.c.l.bf16 %v445
        %v513 = vunpack.c.h.bf16 %v445
        %v514 = vunpack.c.l.bf16 %v446
        %v515 = vunpack.c.h.bf16 %v446
        %v516 = vunpack.c.l.bf16 %v447
        %v517 = vunpack.c.h.bf16 %v447
        %v518 = vunpack.c.l.bf16 %v448
        %v519 = vunpack.c.h.bf16 %v448
        %v520 = vunpack.c.l.bf16 %v449
        %v521 = vunpack.c.h.bf16 %v449
        %v522 = vunpack.c.l.bf16 %v450
        %v523 = vunpack.c.h.bf16 %v450
        %v524 = vunpack.c.l.bf16 %v451
        %v525 = vunpack.c.h.bf16 %v451
        %v526 = vunpack.c.l.bf16 %v452
        %v527 = vunpack.c.h.bf16 %v452
        %v528 = vunpack.c.l.bf16 %v453
        %v529 = vunpack.c.h.bf16 %v453
        %v530 = vunpack.c.l.bf16 %v454
        %v531 = vunpack.c.h.bf16 %v454
        %v532 = vunpack.c.l.bf16 %v455
        %v533 = vunpack.c.h.bf16 %v455
        %v534 = vunpack.c.l.bf16 %v456
        %v535 = vunpack.c.h.bf16 %v456
        %v536 = vunpack.c.l.bf16 %v457
        %v537 = vunpack.c.h.bf16 %v457
        %v538 = vunpack.c.l.bf16 %v458
        %v539 = vunpack.c.h.bf16 %v458
        %v540 = vunpack.c.l.bf16 %v459
        %v541 = vunpack.c.h.bf16 %v459
        %v542 = vunpack.c.l.bf16 %v460
        %v543 = vunpack.c.h.bf16 %v460
        %v544 = vunpack.c.l.bf16 %v461
        %v545 = vunpack.c.h.bf16 %v461
        %v546 = vunpack.c.l.bf16 %v462
        %v547 = vunpack.c.h.bf16 %v462
        %v548 = vunpack.c.l.bf16 %v463
        %v549 = vunpack.c.h.bf16 %v463
        %v550 = vunpack.c.l.bf16 %v464
        %v551 = vunpack.c.h.bf16 %v464
        %v552 = vunpack.c.l.bf16 %v465
        %v553 = vunpack.c.h.bf16 %v465
        %v554 = vunpack.c.l.bf16 %v466
        %v555 = vunpack.c.h.bf16 %v466
        %v556 = vunpack.c.l.bf16 %v467
        %v557 = vunpack.c.h.bf16 %v467
        %v558 = vunpack.c.l.bf16 %v468
        %v559 = vunpack.c.h.bf16 %v468
        %v560 = vunpack.c.l.bf16 %v469
        %v561 = vunpack.c.h.bf16 %v469
        %v562 = vunpack.c.l.bf16 %v470
        %v563 = vunpack.c.h.bf16 %v470
        %v564 = vunpack.c.l.bf16 %v471
        %v565 = vunpack.c.h.bf16 %v471
        %v566 = vunpack.c.l.bf16 %v472
        %v567 = vunpack.c.h.bf16 %v472
        %v568 = vunpack.c.l.bf16 %v473
        %v569 = vunpack.c.h.bf16 %v473
        %v570 = vunpack.c.l.bf16 %v474
        %v571 = vunpack.c.h.bf16 %v474
        %v572 = vunpack.c.l.bf16 %v475
        %v573 = vunpack.c.h.bf16 %v475
        %v574 = vunpack.c.l.bf16 %v476
        %v575 = vunpack.c.h.bf16 %v476
        %v576 = vunpack.c.l.bf16 %v477
        %v577 = vunpack.c.h.bf16 %v477
        %v578 = vunpack.c.l.bf16 %v478
        %v579 = vunpack.c.h.bf16 %v478
        %v580 = vunpack.c.l.bf16 %v479
        %v581 = vunpack.c.h.bf16 %v479
        %v582 = vunpack.c.l.bf16 %v480
        %v583 = vunpack.c.h.bf16 %v480
        %v584 = vunpack.c.l.bf16 %v481
        %v585 = vunpack.c.h.bf16 %v481
        %v586 = vunpack.c.l.bf16 %v482
        %v587 = vunpack.c.h.bf16 %v482
        %v588 = vunpack.c.l.bf16 %v483
        %v589 = vunpack.c.h.bf16 %v483
        %v590 = vunpack.c.l.bf16 %v484
        %v591 = vunpack.c.h.bf16 %v484
        %v592 = vunpack.c.l.bf16 %v485
        %v593 = vunpack.c.h.bf16 %v485
        %v594 = vunpack.c.l.bf16 %v486
        %v595 = vunpack.c.h.bf16 %v486
        %v596 = vunpack.c.l.bf16 %v487
        %v597 = vunpack.c.h.bf16 %v487
        %v598 = vunpack.c.l.bf16 %v488
        %v599 = vunpack.c.h.bf16 %v488
        %v600 = vunpack.c.l.bf16 %v489
        %v601 = vunpack.c.h.bf16 %v489
        %v602 = vunpack.c.l.bf16 %v490
        %v603 = vunpack.c.h.bf16 %v490
        %v604 = vunpack.c.l.bf16 %v491
        %v605 = vunpack.c.h.bf16 %v491
        %v606 = vunpack.c.l.bf16 %v492
        %v607 = vunpack.c.h.bf16 %v492
        %v608 = vunpack.c.l.bf16 %v493
        %v609 = vunpack.c.h.bf16 %v493
        %v610 = vunpack.c.l.bf16 %v494
        %v611 = vunpack.c.h.bf16 %v494
        %v612 = vunpack.c.l.bf16 %v495
        %v613 = vunpack.c.h.bf16 %v495
        %v614 = vunpack.c.l.bf16 %v496
        %v615 = vunpack.c.h.bf16 %v496
        %v616 = vunpack.c.l.bf16 %v497
        %v617 = vunpack.c.h.bf16 %v497
        %v618 = vunpack.c.l.bf16 %v498
        %v619 = vunpack.c.h.bf16 %v498
        %v620 = vunpack.c.l.bf16 %v499
        %v621 = vunpack.c.h.bf16 %v499
        %v622 = vunpack.c.l.bf16 %v500
        %v623 = vunpack.c.h.bf16 %v500
        %v624 = vunpack.c.l.bf16 %v501
        %v625 = vunpack.c.h.bf16 %v501
        %v626 = vunpack.c.l.bf16 %v502
        %v627 = vunpack.c.h.bf16 %v502
        %v628 = vunpack.c.l.bf16 %v503
        %v629 = vunpack.c.h.bf16 %v503
        %v630 = vunpack.c.l.bf16 %v504
        %v631 = vunpack.c.h.bf16 %v504
        %v632 = vunpack.c.l.bf16 %v505
        %v633 = vunpack.c.h.bf16 %v505
        %v634 = vld [vmem:[#allocation5] sm:$0xf]
        %v635 = vmul.f32 %v506, %v506
        %v636 = vmul.f32 %v507, %v507
        %v637 = vmul.f32 %v508, %v508
        %v638 = vmul.f32 %v509, %v509
        %v639 = vmul.f32 %v510, %v510
        %v640 = vmul.f32 %v511, %v511
        %v641 = vmul.f32 %v512, %v512
        %v642 = vmul.f32 %v513, %v513
        %v643 = vmul.f32 %v514, %v514
        %v644 = vmul.f32 %v515, %v515
        %v645 = vmul.f32 %v516, %v516
        %v646 = vmul.f32 %v517, %v517
        %v647 = vmul.f32 %v518, %v518
        %v648 = vmul.f32 %v519, %v519
        %v649 = vmul.f32 %v520, %v520
        %v650 = vmul.f32 %v521, %v521
        %v651 = vmul.f32 %v522, %v522
        %v652 = vmul.f32 %v523, %v523
        %v653 = vmul.f32 %v524, %v524
        %v654 = vmul.f32 %v525, %v525
        %v655 = vmul.f32 %v526, %v526
        %v656 = vmul.f32 %v527, %v527
        %v657 = vmul.f32 %v528, %v528
        %v658 = vmul.f32 %v529, %v529
        %v659 = vmul.f32 %v530, %v530
        %v660 = vmul.f32 %v531, %v531
        %v661 = vmul.f32 %v532, %v532
        %v662 = vmul.f32 %v533, %v533
        %v663 = vmul.f32 %v534, %v534
        %v664 = vmul.f32 %v535, %v535
        %v665 = vmul.f32 %v536, %v536
        %v666 = vmul.f32 %v537, %v537
        %v667 = vmul.f32 %v538, %v538
        %v668 = vmul.f32 %v539, %v539
        %v669 = vmul.f32 %v540, %v540
        %v670 = vmul.f32 %v541, %v541
        %v671 = vmul.f32 %v542, %v542
        %v672 = vmul.f32 %v543, %v543
        %v673 = vmul.f32 %v544, %v544
        %v674 = vmul.f32 %v545, %v545
        %v675 = vmul.f32 %v546, %v546
        %v676 = vmul.f32 %v547, %v547
        %v677 = vmul.f32 %v548, %v548
        %v678 = vmul.f32 %v549, %v549
        %v679 = vmul.f32 %v550, %v550
        %v680 = vmul.f32 %v551, %v551
        %v681 = vmul.f32 %v552, %v552
        %v682 = vmul.f32 %v553, %v553
        %v683 = vmul.f32 %v554, %v554
        %v684 = vmul.f32 %v555, %v555
        %v685 = vmul.f32 %v556, %v556
        %v686 = vmul.f32 %v557, %v557
        %v687 = vmul.f32 %v558, %v558
        %v688 = vmul.f32 %v559, %v559
        %v689 = vmul.f32 %v560, %v560
        %v690 = vmul.f32 %v561, %v561
        %v691 = vmul.f32 %v562, %v562
        %v692 = vmul.f32 %v563, %v563
        %v693 = vmul.f32 %v564, %v564
        %v694 = vmul.f32 %v565, %v565
        %v695 = vmul.f32 %v566, %v566
        %v696 = vmul.f32 %v567, %v567
        %v697 = vmul.f32 %v568, %v568
        %v698 = vmul.f32 %v569, %v569
        %v699 = vmul.f32 %v570, %v570
        %v700 = vmul.f32 %v571, %v571
        %v701 = vmul.f32 %v572, %v572
        %v702 = vmul.f32 %v573, %v573
        %v703 = vmul.f32 %v574, %v574
        %v704 = vmul.f32 %v575, %v575
        %v705 = vmul.f32 %v576, %v576
        %v706 = vmul.f32 %v577, %v577
        %v707 = vmul.f32 %v578, %v578
        %v708 = vmul.f32 %v579, %v579
        %v709 = vmul.f32 %v580, %v580
        %v710 = vmul.f32 %v581, %v581
        %v711 = vmul.f32 %v582, %v582
        %v712 = vmul.f32 %v583, %v583
        %v713 = vmul.f32 %v584, %v584
        %v714 = vmul.f32 %v585, %v585
        %v715 = vmul.f32 %v586, %v586
        %v716 = vmul.f32 %v587, %v587
        %v717 = vmul.f32 %v588, %v588
        %v718 = vmul.f32 %v589, %v589
        %v719 = vmul.f32 %v590, %v590
        %v720 = vmul.f32 %v591, %v591
        %v721 = vmul.f32 %v592, %v592
        %v722 = vmul.f32 %v593, %v593
        %v723 = vmul.f32 %v594, %v594
        %v724 = vmul.f32 %v595, %v595
        %v725 = vmul.f32 %v596, %v596
        %v726 = vmul.f32 %v597, %v597
        %v727 = vmul.f32 %v598, %v598
        %v728 = vmul.f32 %v599, %v599
        %v729 = vmul.f32 %v600, %v600
        %v730 = vmul.f32 %v601, %v601
        %v731 = vmul.f32 %v602, %v602
        %v732 = vmul.f32 %v603, %v603
        %v733 = vmul.f32 %v604, %v604
        %v734 = vmul.f32 %v605, %v605
        %v735 = vmul.f32 %v606, %v606
        %v736 = vmul.f32 %v607, %v607
        %v737 = vmul.f32 %v608, %v608
        %v738 = vmul.f32 %v609, %v609
        %v739 = vmul.f32 %v610, %v610
        %v740 = vmul.f32 %v611, %v611
        %v741 = vmul.f32 %v612, %v612
        %v742 = vmul.f32 %v613, %v613
        %v743 = vmul.f32 %v614, %v614
        %v744 = vmul.f32 %v615, %v615
        %v745 = vmul.f32 %v616, %v616
        %v746 = vmul.f32 %v617, %v617
        %v747 = vmul.f32 %v618, %v618
        %v748 = vmul.f32 %v619, %v619
        %v749 = vmul.f32 %v620, %v620
        %v750 = vmul.f32 %v621, %v621
        %v751 = vmul.f32 %v622, %v622
        %v752 = vmul.f32 %v623, %v623
        %v753 = vmul.f32 %v624, %v624
        %v754 = vmul.f32 %v625, %v625
        %v755 = vmul.f32 %v626, %v626
        %v756 = vmul.f32 %v627, %v627
        %v757 = vmul.f32 %v628, %v628
        %v758 = vmul.f32 %v629, %v629
        %v759 = vmul.f32 %v630, %v630
        %v760 = vmul.f32 %v631, %v631
        %v761 = vmul.f32 %v632, %v632
        %v762 = vmul.f32 %v633, %v633
        %v763 = vadd.f32 %v635, %v636
        %v764 = vadd.f32 %v763, %v637
        %v765 = vadd.f32 %v764, %v638
        %766 = vadd.xlane.f32.xlu0 %v765
        %v767 = vpop.xlane.xlu0 %766
        %v768 = vadd.f32 %v639, %v640
        %v769 = vadd.f32 %v768, %v641
        %v770 = vadd.f32 %v769, %v642
        %771 = vadd.xlane.f32.xlu0 %v770
        %v772 = vpop.xlane.xlu0 %771
        %v773 = vadd.f32 %v643, %v644
        %v774 = vadd.f32 %v773, %v645
        %v775 = vadd.f32 %v774, %v646
        %776 = vadd.xlane.f32.xlu0 %v775
        %v777 = vpop.xlane.xlu0 %776
        %v778 = vadd.f32 %v647, %v648
        %v779 = vadd.f32 %v778, %v649
        %v780 = vadd.f32 %v779, %v650
        %781 = vadd.xlane.f32.xlu0 %v780
        %v782 = vpop.xlane.xlu0 %781
        %v783 = vadd.f32 %v651, %v652
        %v784 = vadd.f32 %v783, %v653
        %v785 = vadd.f32 %v784, %v654
        %786 = vadd.xlane.f32.xlu0 %v785
        %v787 = vpop.xlane.xlu0 %786
        %v788 = vadd.f32 %v655, %v656
        %v789 = vadd.f32 %v788, %v657
        %v790 = vadd.f32 %v789, %v658
        %791 = vadd.xlane.f32.xlu0 %v790
        %v792 = vpop.xlane.xlu0 %791
        %v793 = vadd.f32 %v659, %v660
        %v794 = vadd.f32 %v793, %v661
        %v795 = vadd.f32 %v794, %v662
        %796 = vadd.xlane.f32.xlu0 %v795
        %v797 = vpop.xlane.xlu0 %796
        %v798 = vadd.f32 %v663, %v664
        %v799 = vadd.f32 %v798, %v665
        %v800 = vadd.f32 %v799, %v666
        %801 = vadd.xlane.f32.xlu0 %v800
        %v802 = vpop.xlane.xlu0 %801
        %v803 = vadd.f32 %v667, %v668
        %v804 = vadd.f32 %v803, %v669
        %v805 = vadd.f32 %v804, %v670
        %806 = vadd.xlane.f32.xlu0 %v805
        %v807 = vpop.xlane.xlu0 %806
        %v808 = vadd.f32 %v671, %v672
        %v809 = vadd.f32 %v808, %v673
        %v810 = vadd.f32 %v809, %v674
        %811 = vadd.xlane.f32.xlu0 %v810
        %v812 = vpop.xlane.xlu0 %811
        %v813 = vadd.f32 %v675, %v676
        %v814 = vadd.f32 %v813, %v677
        %v815 = vadd.f32 %v814, %v678
        %816 = vadd.xlane.f32.xlu0 %v815
        %v817 = vpop.xlane.xlu0 %816
        %v818 = vadd.f32 %v679, %v680
        %v819 = vadd.f32 %v818, %v681
        %v820 = vadd.f32 %v819, %v682
        %821 = vadd.xlane.f32.xlu0 %v820
        %v822 = vpop.xlane.xlu0 %821
        %v823 = vadd.f32 %v683, %v684
        %v824 = vadd.f32 %v823, %v685
        %v825 = vadd.f32 %v824, %v686
        %826 = vadd.xlane.f32.xlu0 %v825
        %v827 = vpop.xlane.xlu0 %826
        %v828 = vadd.f32 %v687, %v688
        %v829 = vadd.f32 %v828, %v689
        %v830 = vadd.f32 %v829, %v690
        %831 = vadd.xlane.f32.xlu0 %v830
        %v832 = vpop.xlane.xlu0 %831
        %v833 = vadd.f32 %v691, %v692
        %v834 = vadd.f32 %v833, %v693
        %v835 = vadd.f32 %v834, %v694
        %836 = vadd.xlane.f32.xlu0 %v835
        %v837 = vpop.xlane.xlu0 %836
        %v838 = vadd.f32 %v695, %v696
        %v839 = vadd.f32 %v838, %v697
        %v840 = vadd.f32 %v839, %v698
        %841 = vadd.xlane.f32.xlu0 %v840
        %v842 = vpop.xlane.xlu0 %841
        %v843 = vadd.f32 %v699, %v700
        %v844 = vadd.f32 %v843, %v701
        %v845 = vadd.f32 %v844, %v702
        %846 = vadd.xlane.f32.xlu0 %v845
        %v847 = vpop.xlane.xlu0 %846
        %v848 = vadd.f32 %v703, %v704
        %v849 = vadd.f32 %v848, %v705
        %v850 = vadd.f32 %v849, %v706
        %851 = vadd.xlane.f32.xlu0 %v850
        %v852 = vpop.xlane.xlu0 %851
        %v853 = vadd.f32 %v707, %v708
        %v854 = vadd.f32 %v853, %v709
        %v855 = vadd.f32 %v854, %v710
        %856 = vadd.xlane.f32.xlu0 %v855
        %v857 = vpop.xlane.xlu0 %856
        %v858 = vadd.f32 %v711, %v712
        %v859 = vadd.f32 %v858, %v713
        %v860 = vadd.f32 %v859, %v714
        %861 = vadd.xlane.f32.xlu0 %v860
        %v862 = vpop.xlane.xlu0 %861
        %v863 = vadd.f32 %v715, %v716
        %v864 = vadd.f32 %v863, %v717
        %v865 = vadd.f32 %v864, %v718
        %866 = vadd.xlane.f32.xlu0 %v865
        %v867 = vpop.xlane.xlu0 %866
        %v868 = vadd.f32 %v719, %v720
        %v869 = vadd.f32 %v868, %v721
        %v870 = vadd.f32 %v869, %v722
        %871 = vadd.xlane.f32.xlu0 %v870
        %v872 = vpop.xlane.xlu0 %871
        %v873 = vadd.f32 %v723, %v724
        %v874 = vadd.f32 %v873, %v725
        %v875 = vadd.f32 %v874, %v726
        %876 = vadd.xlane.f32.xlu0 %v875
        %v877 = vpop.xlane.xlu0 %876
        %v878 = vadd.f32 %v727, %v728
        %v879 = vadd.f32 %v878, %v729
        %v880 = vadd.f32 %v879, %v730
        %881 = vadd.xlane.f32.xlu0 %v880
        %v882 = vpop.xlane.xlu0 %881
        %v883 = vadd.f32 %v731, %v732
        %v884 = vadd.f32 %v883, %v733
        %v885 = vadd.f32 %v884, %v734
        %886 = vadd.xlane.f32.xlu0 %v885
        %v887 = vpop.xlane.xlu0 %886
        %v888 = vadd.f32 %v735, %v736
        %v889 = vadd.f32 %v888, %v737
        %v890 = vadd.f32 %v889, %v738
        %891 = vadd.xlane.f32.xlu0 %v890
        %v892 = vpop.xlane.xlu0 %891
        %v893 = vadd.f32 %v739, %v740
        %v894 = vadd.f32 %v893, %v741
        %v895 = vadd.f32 %v894, %v742
        %896 = vadd.xlane.f32.xlu0 %v895
        %v897 = vpop.xlane.xlu0 %896
        %v898 = vadd.f32 %v743, %v744
        %v899 = vadd.f32 %v898, %v745
        %v900 = vadd.f32 %v899, %v746
        %901 = vadd.xlane.f32.xlu0 %v900
        %v902 = vpop.xlane.xlu0 %901
        %v903 = vadd.f32 %v747, %v748
        %v904 = vadd.f32 %v903, %v749
        %v905 = vadd.f32 %v904, %v750
        %906 = vadd.xlane.f32.xlu0 %v905
        %v907 = vpop.xlane.xlu0 %906
        %v908 = vadd.f32 %v751, %v752
        %v909 = vadd.f32 %v908, %v753
        %v910 = vadd.f32 %v909, %v754
        %911 = vadd.xlane.f32.xlu0 %v910
        %v912 = vpop.xlane.xlu0 %911
        %v913 = vadd.f32 %v755, %v756
        %v914 = vadd.f32 %v913, %v757
        %v915 = vadd.f32 %v914, %v758
        %916 = vadd.xlane.f32.xlu0 %v915
        %v917 = vpop.xlane.xlu0 %916
        %v918 = vadd.f32 %v759, %v760
        %v919 = vadd.f32 %v918, %v761
        %v920 = vadd.f32 %v919, %v762
        %921 = vadd.xlane.f32.xlu0 %v920
        %v922 = vpop.xlane.xlu0 %921
        %v923 = vrcp.pop 512.0
        %v924 = vmul.f32 512.0, %v923
        %v925 = vsub.f32 1.0, %v924
        %v926 = vmul.f32 %v923, %v925
        %v927 = vadd.f32 %v923, %v926
        %vm928 = vweird.f32 %v923
        %v929 = vsel %vm928, %v923, %v927
        %v930 = vmul.f32 %v767, %v929
        %v931 = vmul.f32 %v772, %v929
        %v932 = vmul.f32 %v777, %v929
        %v933 = vmul.f32 %v782, %v929
        %v934 = vmul.f32 %v787, %v929
        %v935 = vmul.f32 %v792, %v929
        %v936 = vmul.f32 %v797, %v929
        %v937 = vmul.f32 %v802, %v929
        %v938 = vmul.f32 %v807, %v929
        %v939 = vmul.f32 %v812, %v929
        %v940 = vmul.f32 %v817, %v929
        %v941 = vmul.f32 %v822, %v929
        %v942 = vmul.f32 %v827, %v929
        %v943 = vmul.f32 %v832, %v929
        %v944 = vmul.f32 %v837, %v929
        %v945 = vmul.f32 %v842, %v929
        %v946 = vmul.f32 %v847, %v929
        %v947 = vmul.f32 %v852, %v929
        %v948 = vmul.f32 %v857, %v929
        %v949 = vmul.f32 %v862, %v929
        %v950 = vmul.f32 %v867, %v929
        %v951 = vmul.f32 %v872, %v929
        %v952 = vmul.f32 %v877, %v929
        %v953 = vmul.f32 %v882, %v929
        %v954 = vmul.f32 %v887, %v929
        %v955 = vmul.f32 %v892, %v929
        %v956 = vmul.f32 %v897, %v929
        %v957 = vmul.f32 %v902, %v929
        %v958 = vmul.f32 %v907, %v929
        %v959 = vmul.f32 %v912, %v929
        %v960 = vmul.f32 %v917, %v929
        %v961 = vmul.f32 %v922, %v929
        %v962 = vadd.f32 %v930, 1e-05
        %v963 = vadd.f32 %v931, 1e-05
        %v964 = vadd.f32 %v932, 1e-05
        %v965 = vadd.f32 %v933, 1e-05
        %v966 = vadd.f32 %v934, 1e-05
        %v967 = vadd.f32 %v935, 1e-05
        %v968 = vadd.f32 %v936, 1e-05
        %v969 = vadd.f32 %v937, 1e-05
        %v970 = vadd.f32 %v938, 1e-05
        %v971 = vadd.f32 %v939, 1e-05
        %v972 = vadd.f32 %v940, 1e-05
        %v973 = vadd.f32 %v941, 1e-05
        %v974 = vadd.f32 %v942, 1e-05
        %v975 = vadd.f32 %v943, 1e-05
        %v976 = vadd.f32 %v944, 1e-05
        %v977 = vadd.f32 %v945, 1e-05
        %v978 = vadd.f32 %v946, 1e-05
        %v979 = vadd.f32 %v947, 1e-05
        %v980 = vadd.f32 %v948, 1e-05
        %v981 = vadd.f32 %v949, 1e-05
        %v982 = vadd.f32 %v950, 1e-05
        %v983 = vadd.f32 %v951, 1e-05
        %v984 = vadd.f32 %v952, 1e-05
        %v985 = vadd.f32 %v953, 1e-05
        %v986 = vadd.f32 %v954, 1e-05
        %v987 = vadd.f32 %v955, 1e-05
        %v988 = vadd.f32 %v956, 1e-05
        %v989 = vadd.f32 %v957, 1e-05
        %v990 = vadd.f32 %v958, 1e-05
        %v991 = vadd.f32 %v959, 1e-05
        %v992 = vadd.f32 %v960, 1e-05
        %v993 = vadd.f32 %v961, 1e-05
        %v994 = vrsqrt.pop %v962
        %v995 = vmul.f32 %v994, %v962
        %v996 = vmul.f32 %v995, %v994
        %v997 = vmul.f32 0.5, %v996
        %v998 = vsub.f32 1.5, %v997
        %v999 = vmul.f32 %v994, %v998
        %vm1000 = vweird.f32 %v962
        %vm1001 = vweird.f32 %v994
        %vm1002 = vmor %vm1000, %vm1001
        %v1003 = vsel %vm1002, %v994, %v999
        %v1004 = vrsqrt.pop %v963
        %v1005 = vmul.f32 %v1004, %v963
        %v1006 = vmul.f32 %v1005, %v1004
        %v1007 = vmul.f32 0.5, %v1006
        %v1008 = vsub.f32 1.5, %v1007
        %v1009 = vmul.f32 %v1004, %v1008
        %vm1010 = vweird.f32 %v963
        %vm1011 = vweird.f32 %v1004
        %vm1012 = vmor %vm1010, %vm1011
        %v1013 = vsel %vm1012, %v1004, %v1009
        %v1014 = vrsqrt.pop %v964
        %v1015 = vmul.f32 %v1014, %v964
        %v1016 = vmul.f32 %v1015, %v1014
        %v1017 = vmul.f32 0.5, %v1016
        %v1018 = vsub.f32 1.5, %v1017
        %v1019 = vmul.f32 %v1014, %v1018
        %vm1020 = vweird.f32 %v964
        %vm1021 = vweird.f32 %v1014
        %vm1022 = vmor %vm1020, %vm1021
        %v1023 = vsel %vm1022, %v1014, %v1019
        %v1024 = vrsqrt.pop %v965
        %v1025 = vmul.f32 %v1024, %v965
        %v1026 = vmul.f32 %v1025, %v1024
        %v1027 = vmul.f32 0.5, %v1026
        %v1028 = vsub.f32 1.5, %v1027
        %v1029 = vmul.f32 %v1024, %v1028
        %vm1030 = vweird.f32 %v965
        %vm1031 = vweird.f32 %v1024
        %vm1032 = vmor %vm1030, %vm1031
        %v1033 = vsel %vm1032, %v1024, %v1029
        %v1034 = vrsqrt.pop %v966
        %v1035 = vmul.f32 %v1034, %v966
        %v1036 = vmul.f32 %v1035, %v1034
        %v1037 = vmul.f32 0.5, %v1036
        %v1038 = vsub.f32 1.5, %v1037
        %v1039 = vmul.f32 %v1034, %v1038
        %vm1040 = vweird.f32 %v966
        %vm1041 = vweird.f32 %v1034
        %vm1042 = vmor %vm1040, %vm1041
        %v1043 = vsel %vm1042, %v1034, %v1039
        %v1044 = vrsqrt.pop %v967
        %v1045 = vmul.f32 %v1044, %v967
        %v1046 = vmul.f32 %v1045, %v1044
        %v1047 = vmul.f32 0.5, %v1046
        %v1048 = vsub.f32 1.5, %v1047
        %v1049 = vmul.f32 %v1044, %v1048
        %vm1050 = vweird.f32 %v967
        %vm1051 = vweird.f32 %v1044
        %vm1052 = vmor %vm1050, %vm1051
        %v1053 = vsel %vm1052, %v1044, %v1049
        %v1054 = vrsqrt.pop %v968
        %v1055 = vmul.f32 %v1054, %v968
        %v1056 = vmul.f32 %v1055, %v1054
        %v1057 = vmul.f32 0.5, %v1056
        %v1058 = vsub.f32 1.5, %v1057
        %v1059 = vmul.f32 %v1054, %v1058
        %vm1060 = vweird.f32 %v968
        %vm1061 = vweird.f32 %v1054
        %vm1062 = vmor %vm1060, %vm1061
        %v1063 = vsel %vm1062, %v1054, %v1059
        %v1064 = vrsqrt.pop %v969
        %v1065 = vmul.f32 %v1064, %v969
        %v1066 = vmul.f32 %v1065, %v1064
        %v1067 = vmul.f32 0.5, %v1066
        %v1068 = vsub.f32 1.5, %v1067
        %v1069 = vmul.f32 %v1064, %v1068
        %vm1070 = vweird.f32 %v969
        %vm1071 = vweird.f32 %v1064
        %vm1072 = vmor %vm1070, %vm1071
        %v1073 = vsel %vm1072, %v1064, %v1069
        %v1074 = vrsqrt.pop %v970
        %v1075 = vmul.f32 %v1074, %v970
        %v1076 = vmul.f32 %v1075, %v1074
        %v1077 = vmul.f32 0.5, %v1076
        %v1078 = vsub.f32 1.5, %v1077
        %v1079 = vmul.f32 %v1074, %v1078
        %vm1080 = vweird.f32 %v970
        %vm1081 = vweird.f32 %v1074
        %vm1082 = vmor %vm1080, %vm1081
        %v1083 = vsel %vm1082, %v1074, %v1079
        %v1084 = vrsqrt.pop %v971
        %v1085 = vmul.f32 %v1084, %v971
        %v1086 = vmul.f32 %v1085, %v1084
        %v1087 = vmul.f32 0.5, %v1086
        %v1088 = vsub.f32 1.5, %v1087
        %v1089 = vmul.f32 %v1084, %v1088
        %vm1090 = vweird.f32 %v971
        %vm1091 = vweird.f32 %v1084
        %vm1092 = vmor %vm1090, %vm1091
        %v1093 = vsel %vm1092, %v1084, %v1089
        %v1094 = vrsqrt.pop %v972
        %v1095 = vmul.f32 %v1094, %v972
        %v1096 = vmul.f32 %v1095, %v1094
        %v1097 = vmul.f32 0.5, %v1096
        %v1098 = vsub.f32 1.5, %v1097
        %v1099 = vmul.f32 %v1094, %v1098
        %vm1100 = vweird.f32 %v972
        %vm1101 = vweird.f32 %v1094
        %vm1102 = vmor %vm1100, %vm1101
        %v1103 = vsel %vm1102, %v1094, %v1099
        %v1104 = vrsqrt.pop %v973
        %v1105 = vmul.f32 %v1104, %v973
        %v1106 = vmul.f32 %v1105, %v1104
        %v1107 = vmul.f32 0.5, %v1106
        %v1108 = vsub.f32 1.5, %v1107
        %v1109 = vmul.f32 %v1104, %v1108
        %vm1110 = vweird.f32 %v973
        %vm1111 = vweird.f32 %v1104
        %vm1112 = vmor %vm1110, %vm1111
        %v1113 = vsel %vm1112, %v1104, %v1109
        %v1114 = vrsqrt.pop %v974
        %v1115 = vmul.f32 %v1114, %v974
        %v1116 = vmul.f32 %v1115, %v1114
        %v1117 = vmul.f32 0.5, %v1116
        %v1118 = vsub.f32 1.5, %v1117
        %v1119 = vmul.f32 %v1114, %v1118
        %vm1120 = vweird.f32 %v974
        %vm1121 = vweird.f32 %v1114
        %vm1122 = vmor %vm1120, %vm1121
        %v1123 = vsel %vm1122, %v1114, %v1119
        %v1124 = vrsqrt.pop %v975
        %v1125 = vmul.f32 %v1124, %v975
        %v1126 = vmul.f32 %v1125, %v1124
        %v1127 = vmul.f32 0.5, %v1126
        %v1128 = vsub.f32 1.5, %v1127
        %v1129 = vmul.f32 %v1124, %v1128
        %vm1130 = vweird.f32 %v975
        %vm1131 = vweird.f32 %v1124
        %vm1132 = vmor %vm1130, %vm1131
        %v1133 = vsel %vm1132, %v1124, %v1129
        %v1134 = vrsqrt.pop %v976
        %v1135 = vmul.f32 %v1134, %v976
        %v1136 = vmul.f32 %v1135, %v1134
        %v1137 = vmul.f32 0.5, %v1136
        %v1138 = vsub.f32 1.5, %v1137
        %v1139 = vmul.f32 %v1134, %v1138
        %vm1140 = vweird.f32 %v976
        %vm1141 = vweird.f32 %v1134
        %vm1142 = vmor %vm1140, %vm1141
        %v1143 = vsel %vm1142, %v1134, %v1139
        %v1144 = vrsqrt.pop %v977
        %v1145 = vmul.f32 %v1144, %v977
        %v1146 = vmul.f32 %v1145, %v1144
        %v1147 = vmul.f32 0.5, %v1146
        %v1148 = vsub.f32 1.5, %v1147
        %v1149 = vmul.f32 %v1144, %v1148
        %vm1150 = vweird.f32 %v977
        %vm1151 = vweird.f32 %v1144
        %vm1152 = vmor %vm1150, %vm1151
        %v1153 = vsel %vm1152, %v1144, %v1149
        %v1154 = vrsqrt.pop %v978
        %v1155 = vmul.f32 %v1154, %v978
        %v1156 = vmul.f32 %v1155, %v1154
        %v1157 = vmul.f32 0.5, %v1156
        %v1158 = vsub.f32 1.5, %v1157
        %v1159 = vmul.f32 %v1154, %v1158
        %vm1160 = vweird.f32 %v978
        %vm1161 = vweird.f32 %v1154
        %vm1162 = vmor %vm1160, %vm1161
        %v1163 = vsel %vm1162, %v1154, %v1159
        %v1164 = vrsqrt.pop %v979
        %v1165 = vmul.f32 %v1164, %v979
        %v1166 = vmul.f32 %v1165, %v1164
        %v1167 = vmul.f32 0.5, %v1166
        %v1168 = vsub.f32 1.5, %v1167
        %v1169 = vmul.f32 %v1164, %v1168
        %vm1170 = vweird.f32 %v979
        %vm1171 = vweird.f32 %v1164
        %vm1172 = vmor %vm1170, %vm1171
        %v1173 = vsel %vm1172, %v1164, %v1169
        %v1174 = vrsqrt.pop %v980
        %v1175 = vmul.f32 %v1174, %v980
        %v1176 = vmul.f32 %v1175, %v1174
        %v1177 = vmul.f32 0.5, %v1176
        %v1178 = vsub.f32 1.5, %v1177
        %v1179 = vmul.f32 %v1174, %v1178
        %vm1180 = vweird.f32 %v980
        %vm1181 = vweird.f32 %v1174
        %vm1182 = vmor %vm1180, %vm1181
        %v1183 = vsel %vm1182, %v1174, %v1179
        %v1184 = vrsqrt.pop %v981
        %v1185 = vmul.f32 %v1184, %v981
        %v1186 = vmul.f32 %v1185, %v1184
        %v1187 = vmul.f32 0.5, %v1186
        %v1188 = vsub.f32 1.5, %v1187
        %v1189 = vmul.f32 %v1184, %v1188
        %vm1190 = vweird.f32 %v981
        %vm1191 = vweird.f32 %v1184
        %vm1192 = vmor %vm1190, %vm1191
        %v1193 = vsel %vm1192, %v1184, %v1189
        %v1194 = vrsqrt.pop %v982
        %v1195 = vmul.f32 %v1194, %v982
        %v1196 = vmul.f32 %v1195, %v1194
        %v1197 = vmul.f32 0.5, %v1196
        %v1198 = vsub.f32 1.5, %v1197
        %v1199 = vmul.f32 %v1194, %v1198
        %vm1200 = vweird.f32 %v982
        %vm1201 = vweird.f32 %v1194
        %vm1202 = vmor %vm1200, %vm1201
        %v1203 = vsel %vm1202, %v1194, %v1199
        %v1204 = vrsqrt.pop %v983
        %v1205 = vmul.f32 %v1204, %v983
        %v1206 = vmul.f32 %v1205, %v1204
        %v1207 = vmul.f32 0.5, %v1206
        %v1208 = vsub.f32 1.5, %v1207
        %v1209 = vmul.f32 %v1204, %v1208
        %vm1210 = vweird.f32 %v983
        %vm1211 = vweird.f32 %v1204
        %vm1212 = vmor %vm1210, %vm1211
        %v1213 = vsel %vm1212, %v1204, %v1209
        %v1214 = vrsqrt.pop %v984
        %v1215 = vmul.f32 %v1214, %v984
        %v1216 = vmul.f32 %v1215, %v1214
        %v1217 = vmul.f32 0.5, %v1216
        %v1218 = vsub.f32 1.5, %v1217
        %v1219 = vmul.f32 %v1214, %v1218
        %vm1220 = vweird.f32 %v984
        %vm1221 = vweird.f32 %v1214
        %vm1222 = vmor %vm1220, %vm1221
        %v1223 = vsel %vm1222, %v1214, %v1219
        %v1224 = vrsqrt.pop %v985
        %v1225 = vmul.f32 %v1224, %v985
        %v1226 = vmul.f32 %v1225, %v1224
        %v1227 = vmul.f32 0.5, %v1226
        %v1228 = vsub.f32 1.5, %v1227
        %v1229 = vmul.f32 %v1224, %v1228
        %vm1230 = vweird.f32 %v985
        %vm1231 = vweird.f32 %v1224
        %vm1232 = vmor %vm1230, %vm1231
        %v1233 = vsel %vm1232, %v1224, %v1229
        %v1234 = vrsqrt.pop %v986
        %v1235 = vmul.f32 %v1234, %v986
        %v1236 = vmul.f32 %v1235, %v1234
        %v1237 = vmul.f32 0.5, %v1236
        %v1238 = vsub.f32 1.5, %v1237
        %v1239 = vmul.f32 %v1234, %v1238
        %vm1240 = vweird.f32 %v986
        %vm1241 = vweird.f32 %v1234
        %vm1242 = vmor %vm1240, %vm1241
        %v1243 = vsel %vm1242, %v1234, %v1239
        %v1244 = vrsqrt.pop %v987
        %v1245 = vmul.f32 %v1244, %v987
        %v1246 = vmul.f32 %v1245, %v1244
        %v1247 = vmul.f32 0.5, %v1246
        %v1248 = vsub.f32 1.5, %v1247
        %v1249 = vmul.f32 %v1244, %v1248
        %vm1250 = vweird.f32 %v987
        %vm1251 = vweird.f32 %v1244
        %vm1252 = vmor %vm1250, %vm1251
        %v1253 = vsel %vm1252, %v1244, %v1249
        %v1254 = vrsqrt.pop %v988
        %v1255 = vmul.f32 %v1254, %v988
        %v1256 = vmul.f32 %v1255, %v1254
        %v1257 = vmul.f32 0.5, %v1256
        %v1258 = vsub.f32 1.5, %v1257
        %v1259 = vmul.f32 %v1254, %v1258
        %vm1260 = vweird.f32 %v988
        %vm1261 = vweird.f32 %v1254
        %vm1262 = vmor %vm1260, %vm1261
        %v1263 = vsel %vm1262, %v1254, %v1259
        %v1264 = vrsqrt.pop %v989
        %v1265 = vmul.f32 %v1264, %v989
        %v1266 = vmul.f32 %v1265, %v1264
        %v1267 = vmul.f32 0.5, %v1266
        %v1268 = vsub.f32 1.5, %v1267
        %v1269 = vmul.f32 %v1264, %v1268
        %vm1270 = vweird.f32 %v989
        %vm1271 = vweird.f32 %v1264
        %vm1272 = vmor %vm1270, %vm1271
        %v1273 = vsel %vm1272, %v1264, %v1269
        %v1274 = vrsqrt.pop %v990
        %v1275 = vmul.f32 %v1274, %v990
        %v1276 = vmul.f32 %v1275, %v1274
        %v1277 = vmul.f32 0.5, %v1276
        %v1278 = vsub.f32 1.5, %v1277
        %v1279 = vmul.f32 %v1274, %v1278
        %vm1280 = vweird.f32 %v990
        %vm1281 = vweird.f32 %v1274
        %vm1282 = vmor %vm1280, %vm1281
        %v1283 = vsel %vm1282, %v1274, %v1279
        %v1284 = vrsqrt.pop %v991
        %v1285 = vmul.f32 %v1284, %v991
        %v1286 = vmul.f32 %v1285, %v1284
        %v1287 = vmul.f32 0.5, %v1286
        %v1288 = vsub.f32 1.5, %v1287
        %v1289 = vmul.f32 %v1284, %v1288
        %vm1290 = vweird.f32 %v991
        %vm1291 = vweird.f32 %v1284
        %vm1292 = vmor %vm1290, %vm1291
        %v1293 = vsel %vm1292, %v1284, %v1289
        %v1294 = vrsqrt.pop %v992
        %v1295 = vmul.f32 %v1294, %v992
        %v1296 = vmul.f32 %v1295, %v1294
        %v1297 = vmul.f32 0.5, %v1296
        %v1298 = vsub.f32 1.5, %v1297
        %v1299 = vmul.f32 %v1294, %v1298
        %vm1300 = vweird.f32 %v992
        %vm1301 = vweird.f32 %v1294
        %vm1302 = vmor %vm1300, %vm1301
        %v1303 = vsel %vm1302, %v1294, %v1299
        %v1304 = vrsqrt.pop %v993
        %v1305 = vmul.f32 %v1304, %v993
        %v1306 = vmul.f32 %v1305, %v1304
        %v1307 = vmul.f32 0.5, %v1306
        %v1308 = vsub.f32 1.5, %v1307
        %v1309 = vmul.f32 %v1304, %v1308
        %vm1310 = vweird.f32 %v993
        %vm1311 = vweird.f32 %v1304
        %vm1312 = vmor %vm1310, %vm1311
        %v1313 = vsel %vm1312, %v1304, %v1309
        %v1314 = vmul.f32 %v506, %v1003
        %v1315 = vmul.f32 %v507, %v1003
        %v1316 = vmul.f32 %v508, %v1003
        %v1317 = vmul.f32 %v509, %v1003
        %v1318 = vmul.f32 %v510, %v1013
        %v1319 = vmul.f32 %v511, %v1013
        %v1320 = vmul.f32 %v512, %v1013
        %v1321 = vmul.f32 %v513, %v1013
        %v1322 = vmul.f32 %v514, %v1023
        %v1323 = vmul.f32 %v515, %v1023
        %v1324 = vmul.f32 %v516, %v1023
        %v1325 = vmul.f32 %v517, %v1023
        %v1326 = vmul.f32 %v518, %v1033
        %v1327 = vmul.f32 %v519, %v1033
        %v1328 = vmul.f32 %v520, %v1033
        %v1329 = vmul.f32 %v521, %v1033
        %v1330 = vmul.f32 %v522, %v1043
        %v1331 = vmul.f32 %v523, %v1043
        %v1332 = vmul.f32 %v524, %v1043
        %v1333 = vmul.f32 %v525, %v1043
        %v1334 = vmul.f32 %v526, %v1053
        %v1335 = vmul.f32 %v527, %v1053
        %v1336 = vmul.f32 %v528, %v1053
        %v1337 = vmul.f32 %v529, %v1053
        %v1338 = vmul.f32 %v530, %v1063
        %v1339 = vmul.f32 %v531, %v1063
        %v1340 = vmul.f32 %v532, %v1063
        %v1341 = vmul.f32 %v533, %v1063
        %v1342 = vmul.f32 %v534, %v1073
        %v1343 = vmul.f32 %v535, %v1073
        %v1344 = vmul.f32 %v536, %v1073
        %v1345 = vmul.f32 %v537, %v1073
        %v1346 = vmul.f32 %v538, %v1083
        %v1347 = vmul.f32 %v539, %v1083
        %v1348 = vmul.f32 %v540, %v1083
        %v1349 = vmul.f32 %v541, %v1083
        %v1350 = vmul.f32 %v542, %v1093
        %v1351 = vmul.f32 %v543, %v1093
        %v1352 = vmul.f32 %v544, %v1093
        %v1353 = vmul.f32 %v545, %v1093
        %v1354 = vmul.f32 %v546, %v1103
        %v1355 = vmul.f32 %v547, %v1103
        %v1356 = vmul.f32 %v548, %v1103
        %v1357 = vmul.f32 %v549, %v1103
        %v1358 = vmul.f32 %v550, %v1113
        %v1359 = vmul.f32 %v551, %v1113
        %v1360 = vmul.f32 %v552, %v1113
        %v1361 = vmul.f32 %v553, %v1113
        %v1362 = vmul.f32 %v554, %v1123
        %v1363 = vmul.f32 %v555, %v1123
        %v1364 = vmul.f32 %v556, %v1123
        %v1365 = vmul.f32 %v557, %v1123
        %v1366 = vmul.f32 %v558, %v1133
        %v1367 = vmul.f32 %v559, %v1133
        %v1368 = vmul.f32 %v560, %v1133
        %v1369 = vmul.f32 %v561, %v1133
        %v1370 = vmul.f32 %v562, %v1143
        %v1371 = vmul.f32 %v563, %v1143
        %v1372 = vmul.f32 %v564, %v1143
        %v1373 = vmul.f32 %v565, %v1143
        %v1374 = vmul.f32 %v566, %v1153
        %v1375 = vmul.f32 %v567, %v1153
        %v1376 = vmul.f32 %v568, %v1153
        %v1377 = vmul.f32 %v569, %v1153
        %v1378 = vmul.f32 %v570, %v1163
        %v1379 = vmul.f32 %v571, %v1163
        %v1380 = vmul.f32 %v572, %v1163
        %v1381 = vmul.f32 %v573, %v1163
        %v1382 = vmul.f32 %v574, %v1173
        %v1383 = vmul.f32 %v575, %v1173
        %v1384 = vmul.f32 %v576, %v1173
        %v1385 = vmul.f32 %v577, %v1173
        %v1386 = vmul.f32 %v578, %v1183
        %v1387 = vmul.f32 %v579, %v1183
        %v1388 = vmul.f32 %v580, %v1183
        %v1389 = vmul.f32 %v581, %v1183
        %v1390 = vmul.f32 %v582, %v1193
        %v1391 = vmul.f32 %v583, %v1193
        %v1392 = vmul.f32 %v584, %v1193
        %v1393 = vmul.f32 %v585, %v1193
        %v1394 = vmul.f32 %v586, %v1203
        %v1395 = vmul.f32 %v587, %v1203
        %v1396 = vmul.f32 %v588, %v1203
        %v1397 = vmul.f32 %v589, %v1203
        %v1398 = vmul.f32 %v590, %v1213
        %v1399 = vmul.f32 %v591, %v1213
        %v1400 = vmul.f32 %v592, %v1213
        %v1401 = vmul.f32 %v593, %v1213
        %v1402 = vmul.f32 %v594, %v1223
        %v1403 = vmul.f32 %v595, %v1223
        %v1404 = vmul.f32 %v596, %v1223
        %v1405 = vmul.f32 %v597, %v1223
        %v1406 = vmul.f32 %v598, %v1233
        %v1407 = vmul.f32 %v599, %v1233
        %v1408 = vmul.f32 %v600, %v1233
        %v1409 = vmul.f32 %v601, %v1233
        %v1410 = vmul.f32 %v602, %v1243
        %v1411 = vmul.f32 %v603, %v1243
        %v1412 = vmul.f32 %v604, %v1243
        %v1413 = vmul.f32 %v605, %v1243
        %v1414 = vmul.f32 %v606, %v1253
        %v1415 = vmul.f32 %v607, %v1253
        %v1416 = vmul.f32 %v608, %v1253
        %v1417 = vmul.f32 %v609, %v1253
        %v1418 = vmul.f32 %v610, %v1263
        %v1419 = vmul.f32 %v611, %v1263
        %v1420 = vmul.f32 %v612, %v1263
        %v1421 = vmul.f32 %v613, %v1263
        %v1422 = vmul.f32 %v614, %v1273
        %v1423 = vmul.f32 %v615, %v1273
        %v1424 = vmul.f32 %v616, %v1273
        %v1425 = vmul.f32 %v617, %v1273
        %v1426 = vmul.f32 %v618, %v1283
        %v1427 = vmul.f32 %v619, %v1283
        %v1428 = vmul.f32 %v620, %v1283
        %v1429 = vmul.f32 %v621, %v1283
        %v1430 = vmul.f32 %v622, %v1293
        %v1431 = vmul.f32 %v623, %v1293
        %v1432 = vmul.f32 %v624, %v1293
        %v1433 = vmul.f32 %v625, %v1293
        %v1434 = vmul.f32 %v626, %v1303
        %v1435 = vmul.f32 %v627, %v1303
        %v1436 = vmul.f32 %v628, %v1303
        %v1437 = vmul.f32 %v629, %v1303
        %v1438 = vmul.f32 %v630, %v1313
        %v1439 = vmul.f32 %v631, %v1313
        %v1440 = vmul.f32 %v632, %v1313
        %v1441 = vmul.f32 %v633, %v1313
        %v1442 = vunpack.c.l.bf16 %v634
        %v1444 = vperm.slane %v1442, 0
        %v1445 = vperm.slane %v1442, 2
        %v1446 = vperm.slane %v1442, 4
        %v1447 = vperm.slane %v1442, 6
        %v1452 = vperm.slane %v1444, 0
        %v1453 = vperm.slane %v1445, 0
        %v1454 = vperm.slane %v1446, 0
        %v1455 = vperm.slane %v1447, 0
        %v1456 = vmul.f32 %v1314, %v1452
        %v1457 = vmul.f32 %v1315, %v1453
        %v1458 = vmul.f32 %v1316, %v1454
        %v1459 = vmul.f32 %v1317, %v1455
        %v1460 = vmul.f32 %v1318, %v1452
        %v1461 = vmul.f32 %v1319, %v1453
        %v1462 = vmul.f32 %v1320, %v1454
        %v1463 = vmul.f32 %v1321, %v1455
        %v1464 = vmul.f32 %v1322, %v1452
        %v1465 = vmul.f32 %v1323, %v1453
        %v1466 = vmul.f32 %v1324, %v1454
        %v1467 = vmul.f32 %v1325, %v1455
        %v1468 = vmul.f32 %v1326, %v1452
        %v1469 = vmul.f32 %v1327, %v1453
        %v1470 = vmul.f32 %v1328, %v1454
        %v1471 = vmul.f32 %v1329, %v1455
        %v1472 = vmul.f32 %v1330, %v1452
        %v1473 = vmul.f32 %v1331, %v1453
        %v1474 = vmul.f32 %v1332, %v1454
        %v1475 = vmul.f32 %v1333, %v1455
        %v1476 = vmul.f32 %v1334, %v1452
        %v1477 = vmul.f32 %v1335, %v1453
        %v1478 = vmul.f32 %v1336, %v1454
        %v1479 = vmul.f32 %v1337, %v1455
        %v1480 = vmul.f32 %v1338, %v1452
        %v1481 = vmul.f32 %v1339, %v1453
        %v1482 = vmul.f32 %v1340, %v1454
        %v1483 = vmul.f32 %v1341, %v1455
        %v1484 = vmul.f32 %v1342, %v1452
        %v1485 = vmul.f32 %v1343, %v1453
        %v1486 = vmul.f32 %v1344, %v1454
        %v1487 = vmul.f32 %v1345, %v1455
        %v1488 = vmul.f32 %v1346, %v1452
        %v1489 = vmul.f32 %v1347, %v1453
        %v1490 = vmul.f32 %v1348, %v1454
        %v1491 = vmul.f32 %v1349, %v1455
        %v1492 = vmul.f32 %v1350, %v1452
        %v1493 = vmul.f32 %v1351, %v1453
        %v1494 = vmul.f32 %v1352, %v1454
        %v1495 = vmul.f32 %v1353, %v1455
        %v1496 = vmul.f32 %v1354, %v1452
        %v1497 = vmul.f32 %v1355, %v1453
        %v1498 = vmul.f32 %v1356, %v1454
        %v1499 = vmul.f32 %v1357, %v1455
        %v1500 = vmul.f32 %v1358, %v1452
        %v1501 = vmul.f32 %v1359, %v1453
        %v1502 = vmul.f32 %v1360, %v1454
        %v1503 = vmul.f32 %v1361, %v1455
        %v1504 = vmul.f32 %v1362, %v1452
        %v1505 = vmul.f32 %v1363, %v1453
        %v1506 = vmul.f32 %v1364, %v1454
        %v1507 = vmul.f32 %v1365, %v1455
        %v1508 = vmul.f32 %v1366, %v1452
        %v1509 = vmul.f32 %v1367, %v1453
        %v1510 = vmul.f32 %v1368, %v1454
        %v1511 = vmul.f32 %v1369, %v1455
        %v1512 = vmul.f32 %v1370, %v1452
        %v1513 = vmul.f32 %v1371, %v1453
        %v1514 = vmul.f32 %v1372, %v1454
        %v1515 = vmul.f32 %v1373, %v1455
        %v1516 = vmul.f32 %v1374, %v1452
        %v1517 = vmul.f32 %v1375, %v1453
        %v1518 = vmul.f32 %v1376, %v1454
        %v1519 = vmul.f32 %v1377, %v1455
        %v1520 = vmul.f32 %v1378, %v1452
        %v1521 = vmul.f32 %v1379, %v1453
        %v1522 = vmul.f32 %v1380, %v1454
        %v1523 = vmul.f32 %v1381, %v1455
        %v1524 = vmul.f32 %v1382, %v1452
        %v1525 = vmul.f32 %v1383, %v1453
        %v1526 = vmul.f32 %v1384, %v1454
        %v1527 = vmul.f32 %v1385, %v1455
        %v1528 = vmul.f32 %v1386, %v1452
        %v1529 = vmul.f32 %v1387, %v1453
        %v1530 = vmul.f32 %v1388, %v1454
        %v1531 = vmul.f32 %v1389, %v1455
        %v1532 = vmul.f32 %v1390, %v1452
        %v1533 = vmul.f32 %v1391, %v1453
        %v1534 = vmul.f32 %v1392, %v1454
        %v1535 = vmul.f32 %v1393, %v1455
        %v1536 = vmul.f32 %v1394, %v1452
        %v1537 = vmul.f32 %v1395, %v1453
        %v1538 = vmul.f32 %v1396, %v1454
        %v1539 = vmul.f32 %v1397, %v1455
        %v1540 = vmul.f32 %v1398, %v1452
        %v1541 = vmul.f32 %v1399, %v1453
        %v1542 = vmul.f32 %v1400, %v1454
        %v1543 = vmul.f32 %v1401, %v1455
        %v1544 = vmul.f32 %v1402, %v1452
        %v1545 = vmul.f32 %v1403, %v1453
        %v1546 = vmul.f32 %v1404, %v1454
        %v1547 = vmul.f32 %v1405, %v1455
        %v1548 = vmul.f32 %v1406, %v1452
        %v1549 = vmul.f32 %v1407, %v1453
        %v1550 = vmul.f32 %v1408, %v1454
        %v1551 = vmul.f32 %v1409, %v1455
        %v1552 = vmul.f32 %v1410, %v1452
        %v1553 = vmul.f32 %v1411, %v1453
        %v1554 = vmul.f32 %v1412, %v1454
        %v1555 = vmul.f32 %v1413, %v1455
        %v1556 = vmul.f32 %v1414, %v1452
        %v1557 = vmul.f32 %v1415, %v1453
        %v1558 = vmul.f32 %v1416, %v1454
        %v1559 = vmul.f32 %v1417, %v1455
        %v1560 = vmul.f32 %v1418, %v1452
        %v1561 = vmul.f32 %v1419, %v1453
        %v1562 = vmul.f32 %v1420, %v1454
        %v1563 = vmul.f32 %v1421, %v1455
        %v1564 = vmul.f32 %v1422, %v1452
        %v1565 = vmul.f32 %v1423, %v1453
        %v1566 = vmul.f32 %v1424, %v1454
        %v1567 = vmul.f32 %v1425, %v1455
        %v1568 = vmul.f32 %v1426, %v1452
        %v1569 = vmul.f32 %v1427, %v1453
        %v1570 = vmul.f32 %v1428, %v1454
        %v1571 = vmul.f32 %v1429, %v1455
        %v1572 = vmul.f32 %v1430, %v1452
        %v1573 = vmul.f32 %v1431, %v1453
        %v1574 = vmul.f32 %v1432, %v1454
        %v1575 = vmul.f32 %v1433, %v1455
        %v1576 = vmul.f32 %v1434, %v1452
        %v1577 = vmul.f32 %v1435, %v1453
        %v1578 = vmul.f32 %v1436, %v1454
        %v1579 = vmul.f32 %v1437, %v1455
        %v1580 = vmul.f32 %v1438, %v1452
        %v1581 = vmul.f32 %v1439, %v1453
        %v1582 = vmul.f32 %v1440, %v1454
        %v1583 = vmul.f32 %v1441, %v1455
        %v1584 = vpack.c.bf16 %v1460, %v1456
        %v1585 = vpack.c.bf16 %v1461, %v1457
        %v1586 = vpack.c.bf16 %v1462, %v1458
        %v1587 = vpack.c.bf16 %v1463, %v1459
        %v1588 = vpack.c.bf16 %v1468, %v1464
        %v1589 = vpack.c.bf16 %v1469, %v1465
        %v1590 = vpack.c.bf16 %v1470, %v1466
        %v1591 = vpack.c.bf16 %v1471, %v1467
        %v1592 = vpack.c.bf16 %v1476, %v1472
        %v1593 = vpack.c.bf16 %v1477, %v1473
        %v1594 = vpack.c.bf16 %v1478, %v1474
        %v1595 = vpack.c.bf16 %v1479, %v1475
        %v1596 = vpack.c.bf16 %v1484, %v1480
        %v1597 = vpack.c.bf16 %v1485, %v1481
        %v1598 = vpack.c.bf16 %v1486, %v1482
        %v1599 = vpack.c.bf16 %v1487, %v1483
        %v1600 = vpack.c.bf16 %v1492, %v1488
        %v1601 = vpack.c.bf16 %v1493, %v1489
        %v1602 = vpack.c.bf16 %v1494, %v1490
        %v1603 = vpack.c.bf16 %v1495, %v1491
        %v1604 = vpack.c.bf16 %v1500, %v1496
        %v1605 = vpack.c.bf16 %v1501, %v1497
        %v1606 = vpack.c.bf16 %v1502, %v1498
        %v1607 = vpack.c.bf16 %v1503, %v1499
        %v1608 = vpack.c.bf16 %v1508, %v1504
        %v1609 = vpack.c.bf16 %v1509, %v1505
        %v1610 = vpack.c.bf16 %v1510, %v1506
        %v1611 = vpack.c.bf16 %v1511, %v1507
        %v1612 = vpack.c.bf16 %v1516, %v1512
        %v1613 = vpack.c.bf16 %v1517, %v1513
        %v1614 = vpack.c.bf16 %v1518, %v1514
        %v1615 = vpack.c.bf16 %v1519, %v1515
        %v1616 = vpack.c.bf16 %v1524, %v1520
        %v1617 = vpack.c.bf16 %v1525, %v1521
        %v1618 = vpack.c.bf16 %v1526, %v1522
        %v1619 = vpack.c.bf16 %v1527, %v1523
        %v1620 = vpack.c.bf16 %v1532, %v1528
        %v1621 = vpack.c.bf16 %v1533, %v1529
        %v1622 = vpack.c.bf16 %v1534, %v1530
        %v1623 = vpack.c.bf16 %v1535, %v1531
        %v1624 = vpack.c.bf16 %v1540, %v1536
        %v1625 = vpack.c.bf16 %v1541, %v1537
        %v1626 = vpack.c.bf16 %v1542, %v1538
        %v1627 = vpack.c.bf16 %v1543, %v1539
        %v1628 = vpack.c.bf16 %v1548, %v1544
        %v1629 = vpack.c.bf16 %v1549, %v1545
        %v1630 = vpack.c.bf16 %v1550, %v1546
        %v1631 = vpack.c.bf16 %v1551, %v1547
        %v1632 = vpack.c.bf16 %v1556, %v1552
        %v1633 = vpack.c.bf16 %v1557, %v1553
        %v1634 = vpack.c.bf16 %v1558, %v1554
        %v1635 = vpack.c.bf16 %v1559, %v1555
        %v1636 = vpack.c.bf16 %v1564, %v1560
        %v1637 = vpack.c.bf16 %v1565, %v1561
        %v1638 = vpack.c.bf16 %v1566, %v1562
        %v1639 = vpack.c.bf16 %v1567, %v1563
        %v1640 = vpack.c.bf16 %v1572, %v1568
        %v1641 = vpack.c.bf16 %v1573, %v1569
        %v1642 = vpack.c.bf16 %v1574, %v1570
        %v1643 = vpack.c.bf16 %v1575, %v1571
        %v1644 = vpack.c.bf16 %v1580, %v1576
        %v1645 = vpack.c.bf16 %v1581, %v1577
        %v1646 = vpack.c.bf16 %v1582, %v1578
        %v1647 = vpack.c.bf16 %v1583, %v1579
        %v1648 = vld [vmem:[#allocation7] sm:$0xff]
        %v1649 = vld [vmem:[#allocation7 + $0x8] sm:$0xff]
        %v1650 = vld [vmem:[#allocation7 + $0x10] sm:$0xff]
        %v1651 = vld [vmem:[#allocation7 + $0x18] sm:$0xff]
        %v1652 = vld [vmem:[#allocation7 + $0x20] sm:$0xff]
        %v1653 = vld [vmem:[#allocation7 + $0x28] sm:$0xff]
        %v1654 = vld [vmem:[#allocation7 + $0x30] sm:$0xff]
        %v1655 = vld [vmem:[#allocation7 + $0x38] sm:$0xff]
        %v1656 = vld [vmem:[#allocation7 + $0x40] sm:$0xff]
        %v1657 = vld [vmem:[#allocation7 + $0x48] sm:$0xff]
        %v1658 = vld [vmem:[#allocation7 + $0x50] sm:$0xff]
        %v1659 = vld [vmem:[#allocation7 + $0x58] sm:$0xff]
        %v1660 = vld [vmem:[#allocation7 + $0x60] sm:$0xff]
        %v1661 = vld [vmem:[#allocation7 + $0x68] sm:$0xff]
        %v1662 = vld [vmem:[#allocation7 + $0x70] sm:$0xff]
        %v1663 = vld [vmem:[#allocation7 + $0x78] sm:$0xff]
        %v1664 = vld [vmem:[#allocation7 + $0x80] sm:$0xff]
        %v1665 = vld [vmem:[#allocation7 + $0x88] sm:$0xff]
        %v1666 = vld [vmem:[#allocation7 + $0x90] sm:$0xff]
        %v1667 = vld [vmem:[#allocation7 + $0x98] sm:$0xff]
        %v1668 = vld [vmem:[#allocation7 + $0xa0] sm:$0xff]
        %v1669 = vld [vmem:[#allocation7 + $0xa8] sm:$0xff]
        %v1670 = vld [vmem:[#allocation7 + $0xb0] sm:$0xff]
        %v1671 = vld [vmem:[#allocation7 + $0xb8] sm:$0xff]
        %v1672 = vld [vmem:[#allocation7 + $0xc0] sm:$0xff]
        %v1673 = vld [vmem:[#allocation7 + $0xc8] sm:$0xff]
        %v1674 = vld [vmem:[#allocation7 + $0xd0] sm:$0xff]
        %v1675 = vld [vmem:[#allocation7 + $0xd8] sm:$0xff]
        %v1676 = vld [vmem:[#allocation7 + $0xe0] sm:$0xff]
        %v1677 = vld [vmem:[#allocation7 + $0xe8] sm:$0xff]
        %v1678 = vld [vmem:[#allocation7 + $0xf0] sm:$0xff]
        %v1679 = vld [vmem:[#allocation7 + $0xf8] sm:$0xff]
        %v1680 = vld [vmem:[#allocation7 + $0x100] sm:$0xff]
        %v1681 = vld [vmem:[#allocation7 + $0x108] sm:$0xff]
        %v1682 = vld [vmem:[#allocation7 + $0x110] sm:$0xff]
        %v1683 = vld [vmem:[#allocation7 + $0x118] sm:$0xff]
        %v1684 = vld [vmem:[#allocation7 + $0x120] sm:$0xff]
        %v1685 = vld [vmem:[#allocation7 + $0x128] sm:$0xff]
        %v1686 = vld [vmem:[#allocation7 + $0x130] sm:$0xff]
        %v1687 = vld [vmem:[#allocation7 + $0x138] sm:$0xff]
        %v1688 = vld [vmem:[#allocation7 + $0x140] sm:$0xff]
        %v1689 = vld [vmem:[#allocation7 + $0x148] sm:$0xff]
        %v1690 = vld [vmem:[#allocation7 + $0x150] sm:$0xff]
        %v1691 = vld [vmem:[#allocation7 + $0x158] sm:$0xff]
        %v1692 = vld [vmem:[#allocation7 + $0x160] sm:$0xff]
        %v1693 = vld [vmem:[#allocation7 + $0x168] sm:$0xff]
        %v1694 = vld [vmem:[#allocation7 + $0x170] sm:$0xff]
        %v1695 = vld [vmem:[#allocation7 + $0x178] sm:$0xff]
        %v1696 = vld [vmem:[#allocation7 + $0x180] sm:$0xff]
        %v1697 = vld [vmem:[#allocation7 + $0x188] sm:$0xff]
        %v1698 = vld [vmem:[#allocation7 + $0x190] sm:$0xff]
        %v1699 = vld [vmem:[#allocation7 + $0x198] sm:$0xff]
        %v1700 = vld [vmem:[#allocation7 + $0x1a0] sm:$0xff]
        %v1701 = vld [vmem:[#allocation7 + $0x1a8] sm:$0xff]
        %v1702 = vld [vmem:[#allocation7 + $0x1b0] sm:$0xff]
        %v1703 = vld [vmem:[#allocation7 + $0x1b8] sm:$0xff]
        %v1704 = vld [vmem:[#allocation7 + $0x1c0] sm:$0xff]
        %v1705 = vld [vmem:[#allocation7 + $0x1c8] sm:$0xff]
        %v1706 = vld [vmem:[#allocation7 + $0x1d0] sm:$0xff]
        %v1707 = vld [vmem:[#allocation7 + $0x1d8] sm:$0xff]
        %v1708 = vld [vmem:[#allocation7 + $0x1e0] sm:$0xff]
        %v1709 = vld [vmem:[#allocation7 + $0x1e8] sm:$0xff]
        %v1710 = vld [vmem:[#allocation7 + $0x1f0] sm:$0xff]
        %v1711 = vld [vmem:[#allocation7 + $0x1f8] sm:$0xff]
        %v1776 = vunpack.c.l.b16 %v1648
        %v1777 = vunpack.c.h.b16 %v1648
        %v1778 = vunpack.c.l.b16 %v1649
        %v1779 = vunpack.c.h.b16 %v1649
        %v1780 = vunpack.c.l.b16 %v1650
        %v1781 = vunpack.c.h.b16 %v1650
        %v1782 = vunpack.c.l.b16 %v1651
        %v1783 = vunpack.c.h.b16 %v1651
        %v1784 = vunpack.c.l.b16 %v1652
        %v1785 = vunpack.c.h.b16 %v1652
        %v1786 = vunpack.c.l.b16 %v1653
        %v1787 = vunpack.c.h.b16 %v1653
        %v1788 = vunpack.c.l.b16 %v1654
        %v1789 = vunpack.c.h.b16 %v1654
        %v1790 = vunpack.c.l.b16 %v1655
        %v1791 = vunpack.c.h.b16 %v1655
        %v1792 = vunpack.c.l.b16 %v1656
        %v1793 = vunpack.c.h.b16 %v1656
        %v1794 = vunpack.c.l.b16 %v1657
        %v1795 = vunpack.c.h.b16 %v1657
        %v1796 = vunpack.c.l.b16 %v1658
        %v1797 = vunpack.c.h.b16 %v1658
        %v1798 = vunpack.c.l.b16 %v1659
        %v1799 = vunpack.c.h.b16 %v1659
        %v1800 = vunpack.c.l.b16 %v1660
        %v1801 = vunpack.c.h.b16 %v1660
        %v1802 = vunpack.c.l.b16 %v1661
        %v1803 = vunpack.c.h.b16 %v1661
        %v1804 = vunpack.c.l.b16 %v1662
        %v1805 = vunpack.c.h.b16 %v1662
        %v1806 = vunpack.c.l.b16 %v1663
        %v1807 = vunpack.c.h.b16 %v1663
        %v1808 = vunpack.c.l.b16 %v1664
        %v1809 = vunpack.c.h.b16 %v1664
        %v1810 = vunpack.c.l.b16 %v1665
        %v1811 = vunpack.c.h.b16 %v1665
        %v1812 = vunpack.c.l.b16 %v1666
        %v1813 = vunpack.c.h.b16 %v1666
        %v1814 = vunpack.c.l.b16 %v1667
        %v1815 = vunpack.c.h.b16 %v1667
        %v1816 = vunpack.c.l.b16 %v1668
        %v1817 = vunpack.c.h.b16 %v1668
        %v1818 = vunpack.c.l.b16 %v1669
        %v1819 = vunpack.c.h.b16 %v1669
        %v1820 = vunpack.c.l.b16 %v1670
        %v1821 = vunpack.c.h.b16 %v1670
        %v1822 = vunpack.c.l.b16 %v1671
        %v1823 = vunpack.c.h.b16 %v1671
        %v1824 = vunpack.c.l.b16 %v1672
        %v1825 = vunpack.c.h.b16 %v1672
        %v1826 = vunpack.c.l.b16 %v1673
        %v1827 = vunpack.c.h.b16 %v1673
        %v1828 = vunpack.c.l.b16 %v1674
        %v1829 = vunpack.c.h.b16 %v1674
        %v1830 = vunpack.c.l.b16 %v1675
        %v1831 = vunpack.c.h.b16 %v1675
        %v1832 = vunpack.c.l.b16 %v1676
        %v1833 = vunpack.c.h.b16 %v1676
        %v1834 = vunpack.c.l.b16 %v1677
        %v1835 = vunpack.c.h.b16 %v1677
        %v1836 = vunpack.c.l.b16 %v1678
        %v1837 = vunpack.c.h.b16 %v1678
        %v1838 = vunpack.c.l.b16 %v1679
        %v1839 = vunpack.c.h.b16 %v1679
        %v1840 = vunpack.c.l.b16 %v1680
        %v1841 = vunpack.c.h.b16 %v1680
        %v1842 = vunpack.c.l.b16 %v1681
        %v1843 = vunpack.c.h.b16 %v1681
        %v1844 = vunpack.c.l.b16 %v1682
        %v1845 = vunpack.c.h.b16 %v1682
        %v1846 = vunpack.c.l.b16 %v1683
        %v1847 = vunpack.c.h.b16 %v1683
        %v1848 = vunpack.c.l.b16 %v1684
        %v1849 = vunpack.c.h.b16 %v1684
        %v1850 = vunpack.c.l.b16 %v1685
        %v1851 = vunpack.c.h.b16 %v1685
        %v1852 = vunpack.c.l.b16 %v1686
        %v1853 = vunpack.c.h.b16 %v1686
        %v1854 = vunpack.c.l.b16 %v1687
        %v1855 = vunpack.c.h.b16 %v1687
        %v1856 = vunpack.c.l.b16 %v1688
        %v1857 = vunpack.c.h.b16 %v1688
        %v1858 = vunpack.c.l.b16 %v1689
        %v1859 = vunpack.c.h.b16 %v1689
        %v1860 = vunpack.c.l.b16 %v1690
        %v1861 = vunpack.c.h.b16 %v1690
        %v1862 = vunpack.c.l.b16 %v1691
        %v1863 = vunpack.c.h.b16 %v1691
        %v1864 = vunpack.c.l.b16 %v1692
        %v1865 = vunpack.c.h.b16 %v1692
        %v1866 = vunpack.c.l.b16 %v1693
        %v1867 = vunpack.c.h.b16 %v1693
        %v1868 = vunpack.c.l.b16 %v1694
        %v1869 = vunpack.c.h.b16 %v1694
        %v1870 = vunpack.c.l.b16 %v1695
        %v1871 = vunpack.c.h.b16 %v1695
        %v1872 = vunpack.c.l.b16 %v1696
        %v1873 = vunpack.c.h.b16 %v1696
        %v1874 = vunpack.c.l.b16 %v1697
        %v1875 = vunpack.c.h.b16 %v1697
        %v1876 = vunpack.c.l.b16 %v1698
        %v1877 = vunpack.c.h.b16 %v1698
        %v1878 = vunpack.c.l.b16 %v1699
        %v1879 = vunpack.c.h.b16 %v1699
        %v1880 = vunpack.c.l.b16 %v1700
        %v1881 = vunpack.c.h.b16 %v1700
        %v1882 = vunpack.c.l.b16 %v1701
        %v1883 = vunpack.c.h.b16 %v1701
        %v1884 = vunpack.c.l.b16 %v1702
        %v1885 = vunpack.c.h.b16 %v1702
        %v1886 = vunpack.c.l.b16 %v1703
        %v1887 = vunpack.c.h.b16 %v1703
        %v1888 = vunpack.c.l.b16 %v1704
        %v1889 = vunpack.c.h.b16 %v1704
        %v1890 = vunpack.c.l.b16 %v1705
        %v1891 = vunpack.c.h.b16 %v1705
        %v1892 = vunpack.c.l.b16 %v1706
        %v1893 = vunpack.c.h.b16 %v1706
        %v1894 = vunpack.c.l.b16 %v1707
        %v1895 = vunpack.c.h.b16 %v1707
        %v1896 = vunpack.c.l.b16 %v1708
        %v1897 = vunpack.c.h.b16 %v1708
        %v1898 = vunpack.c.l.b16 %v1709
        %v1899 = vunpack.c.h.b16 %v1709
        %v1900 = vunpack.c.l.b16 %v1710
        %v1901 = vunpack.c.h.b16 %v1710
        %v1902 = vunpack.c.l.b16 %v1711
        %v1903 = vunpack.c.h.b16 %v1711
        %v1904 = vpack.c.b16 %v1778, %v1776
        %v1905 = vpack.c.b16 %v1779, %v1777
        %v1906 = vpack.c.b16 %v1782, %v1780
        %v1907 = vpack.c.b16 %v1783, %v1781
        %v1908 = vpack.c.b16 %v1786, %v1784
        %v1909 = vpack.c.b16 %v1787, %v1785
        %v1910 = vpack.c.b16 %v1790, %v1788
        %v1911 = vpack.c.b16 %v1791, %v1789
        %v1912 = vpack.c.b16 %v1794, %v1792
        %v1913 = vpack.c.b16 %v1795, %v1793
        %v1914 = vpack.c.b16 %v1798, %v1796
        %v1915 = vpack.c.b16 %v1799, %v1797
        %v1916 = vpack.c.b16 %v1802, %v1800
        %v1917 = vpack.c.b16 %v1803, %v1801
        %v1918 = vpack.c.b16 %v1806, %v1804
        %v1919 = vpack.c.b16 %v1807, %v1805
        %v1920 = vpack.c.b16 %v1810, %v1808
        %v1921 = vpack.c.b16 %v1811, %v1809
        %v1922 = vpack.c.b16 %v1814, %v1812
        %v1923 = vpack.c.b16 %v1815, %v1813
        %v1924 = vpack.c.b16 %v1818, %v1816
        %v1925 = vpack.c.b16 %v1819, %v1817
        %v1926 = vpack.c.b16 %v1822, %v1820
        %v1927 = vpack.c.b16 %v1823, %v1821
        %v1928 = vpack.c.b16 %v1826, %v1824
        %v1929 = vpack.c.b16 %v1827, %v1825
        %v1930 = vpack.c.b16 %v1830, %v1828
        %v1931 = vpack.c.b16 %v1831, %v1829
        %v1932 = vpack.c.b16 %v1834, %v1832
        %v1933 = vpack.c.b16 %v1835, %v1833
        %v1934 = vpack.c.b16 %v1838, %v1836
        %v1935 = vpack.c.b16 %v1839, %v1837
        %v1936 = vpack.c.b16 %v1842, %v1840
        %v1937 = vpack.c.b16 %v1843, %v1841
        %v1938 = vpack.c.b16 %v1846, %v1844
        %v1939 = vpack.c.b16 %v1847, %v1845
        %v1940 = vpack.c.b16 %v1850, %v1848
        %v1941 = vpack.c.b16 %v1851, %v1849
        %v1942 = vpack.c.b16 %v1854, %v1852
        %v1943 = vpack.c.b16 %v1855, %v1853
        %v1944 = vpack.c.b16 %v1858, %v1856
        %v1945 = vpack.c.b16 %v1859, %v1857
        %v1946 = vpack.c.b16 %v1862, %v1860
        %v1947 = vpack.c.b16 %v1863, %v1861
        %v1948 = vpack.c.b16 %v1866, %v1864
        %v1949 = vpack.c.b16 %v1867, %v1865
        %v1950 = vpack.c.b16 %v1870, %v1868
        %v1951 = vpack.c.b16 %v1871, %v1869
        %v1952 = vpack.c.b16 %v1874, %v1872
        %v1953 = vpack.c.b16 %v1875, %v1873
        %v1954 = vpack.c.b16 %v1878, %v1876
        %v1955 = vpack.c.b16 %v1879, %v1877
        %v1956 = vpack.c.b16 %v1882, %v1880
        %v1957 = vpack.c.b16 %v1883, %v1881
        %v1958 = vpack.c.b16 %v1886, %v1884
        %v1959 = vpack.c.b16 %v1887, %v1885
        %v1960 = vpack.c.b16 %v1890, %v1888
        %v1961 = vpack.c.b16 %v1891, %v1889
        %v1962 = vpack.c.b16 %v1894, %v1892
        %v1963 = vpack.c.b16 %v1895, %v1893
        %v1964 = vpack.c.b16 %v1898, %v1896
        %v1965 = vpack.c.b16 %v1899, %v1897
        %v1966 = vpack.c.b16 %v1902, %v1900
        %v1967 = vpack.c.b16 %v1903, %v1901
        %2032 = vmatpush.bf16.msra.mxu0 %v1918
        %2033 = vmatpush.bf16.msra.mxu0 %v1916
        %2034 = vmatpush.bf16.msra.mxu0 %v1914
        %2035 = vmatpush.bf16.msra.mxu0 %v1912
        %2036 = vmatpush.bf16.msra.mxu0 %v1910
        %2037 = vmatpush.bf16.msra.mxu0 %v1908
        %2038 = vmatpush.bf16.msra.mxu0 %v1906
        %2039 = vmatpush.bf16.msra.mxu0 %v1904
        %2040 = vmatmul.bf16.gmra.mxu0 %v1584
        %v2041 = vpop.f32.mrf.mxu0
        %v2042 = vadd.f32 0.0, %v2041
        %v2043 = vpop.f32.mrf.mxu0
        %v2044 = vadd.f32 0.0, %v2043
        %2045 = vmatmul.bf16.gmra.mxu0 %v1588
        %v2046 = vpop.f32.mrf.mxu0
        %v2047 = vadd.f32 0.0, %v2046
        %v2048 = vpop.f32.mrf.mxu0
        %v2049 = vadd.f32 0.0, %v2048
        %2050 = vmatmul.bf16.gmra.mxu0 %v1592
        %v2051 = vpop.f32.mrf.mxu0
        %v2052 = vadd.f32 0.0, %v2051
        %v2053 = vpop.f32.mrf.mxu0
        %v2054 = vadd.f32 0.0, %v2053
        %2055 = vmatmul.bf16.gmra.mxu0 %v1596
        %v2056 = vpop.f32.mrf.mxu0
        %v2057 = vadd.f32 0.0, %v2056
        %v2058 = vpop.f32.mrf.mxu0
        %v2059 = vadd.f32 0.0, %v2058
        %2060 = vmatmul.bf16.gmra.mxu0 %v1600
        %v2061 = vpop.f32.mrf.mxu0
        %v2062 = vadd.f32 0.0, %v2061
        %v2063 = vpop.f32.mrf.mxu0
        %v2064 = vadd.f32 0.0, %v2063
        %2065 = vmatmul.bf16.gmra.mxu0 %v1604
        %v2066 = vpop.f32.mrf.mxu0
        %v2067 = vadd.f32 0.0, %v2066
        %v2068 = vpop.f32.mrf.mxu0
        %v2069 = vadd.f32 0.0, %v2068
        %2070 = vmatmul.bf16.gmra.mxu0 %v1608
        %v2071 = vpop.f32.mrf.mxu0
        %v2072 = vadd.f32 0.0, %v2071
        %v2073 = vpop.f32.mrf.mxu0
        %v2074 = vadd.f32 0.0, %v2073
        %2075 = vmatmul.bf16.gmra.mxu0 %v1612
        %v2076 = vpop.f32.mrf.mxu0
        %v2077 = vadd.f32 0.0, %v2076
        %v2078 = vpop.f32.mrf.mxu0
        %v2079 = vadd.f32 0.0, %v2078
        %2080 = vmatmul.bf16.gmra.mxu0 %v1616
        %v2081 = vpop.f32.mrf.mxu0
        %v2082 = vadd.f32 0.0, %v2081
        %v2083 = vpop.f32.mrf.mxu0
        %v2084 = vadd.f32 0.0, %v2083
        %2085 = vmatmul.bf16.gmra.mxu0 %v1620
        %v2086 = vpop.f32.mrf.mxu0
        %v2087 = vadd.f32 0.0, %v2086
        %v2088 = vpop.f32.mrf.mxu0
        %v2089 = vadd.f32 0.0, %v2088
        %2090 = vmatmul.bf16.gmra.mxu0 %v1624
        %v2091 = vpop.f32.mrf.mxu0
        %v2092 = vadd.f32 0.0, %v2091
        %v2093 = vpop.f32.mrf.mxu0
        %v2094 = vadd.f32 0.0, %v2093
        %2095 = vmatmul.bf16.gmra.mxu0 %v1628
        %v2096 = vpop.f32.mrf.mxu0
        %v2097 = vadd.f32 0.0, %v2096
        %v2098 = vpop.f32.mrf.mxu0
        %v2099 = vadd.f32 0.0, %v2098
        %2100 = vmatmul.bf16.gmra.mxu0 %v1632
        %v2101 = vpop.f32.mrf.mxu0
        %v2102 = vadd.f32 0.0, %v2101
        %v2103 = vpop.f32.mrf.mxu0
        %v2104 = vadd.f32 0.0, %v2103
        %2105 = vmatmul.bf16.gmra.mxu0 %v1636
        %v2106 = vpop.f32.mrf.mxu0
        %v2107 = vadd.f32 0.0, %v2106
        %v2108 = vpop.f32.mrf.mxu0
        %v2109 = vadd.f32 0.0, %v2108
        %2110 = vmatmul.bf16.gmra.mxu0 %v1640
        %v2111 = vpop.f32.mrf.mxu0
        %v2112 = vadd.f32 0.0, %v2111
        %v2113 = vpop.f32.mrf.mxu0
        %v2114 = vadd.f32 0.0, %v2113
        %2115 = vmatmul.bf16.gmra.mxu0 %v1644
        %v2116 = vpop.f32.mrf.mxu0
        %v2117 = vadd.f32 0.0, %v2116
        %v2118 = vpop.f32.mrf.mxu0
        %v2119 = vadd.f32 0.0, %v2118
        %2120 = vdwg.mxu0
        %2121 = vmatpush.bf16.msra.mxu0 %v1934
        %2122 = vmatpush.bf16.msra.mxu0 %v1932
        %2123 = vmatpush.bf16.msra.mxu0 %v1930
        %2124 = vmatpush.bf16.msra.mxu0 %v1928
        %2125 = vmatpush.bf16.msra.mxu0 %v1926
        %2126 = vmatpush.bf16.msra.mxu0 %v1924
        %2127 = vmatpush.bf16.msra.mxu0 %v1922
        %2128 = vmatpush.bf16.msra.mxu0 %v1920
        %2129 = vmatmul.bf16.gmra.mxu0 %v1585
        %v2130 = vpop.f32.mrf.mxu0
        %v2131 = vadd.f32 %v2042, %v2130
        %v2132 = vpop.f32.mrf.mxu0
        %v2133 = vadd.f32 %v2044, %v2132
        %2134 = vmatmul.bf16.gmra.mxu0 %v1589
        %v2135 = vpop.f32.mrf.mxu0
        %v2136 = vadd.f32 %v2047, %v2135
        %v2137 = vpop.f32.mrf.mxu0
        %v2138 = vadd.f32 %v2049, %v2137
        %2139 = vmatmul.bf16.gmra.mxu0 %v1593
        %v2140 = vpop.f32.mrf.mxu0
        %v2141 = vadd.f32 %v2052, %v2140
        %v2142 = vpop.f32.mrf.mxu0
        %v2143 = vadd.f32 %v2054, %v2142
        %2144 = vmatmul.bf16.gmra.mxu0 %v1597
        %v2145 = vpop.f32.mrf.mxu0
        %v2146 = vadd.f32 %v2057, %v2145
        %v2147 = vpop.f32.mrf.mxu0
        %v2148 = vadd.f32 %v2059, %v2147
        %2149 = vmatmul.bf16.gmra.mxu0 %v1601
        %v2150 = vpop.f32.mrf.mxu0
        %v2151 = vadd.f32 %v2062, %v2150
        %v2152 = vpop.f32.mrf.mxu0
        %v2153 = vadd.f32 %v2064, %v2152
        %2154 = vmatmul.bf16.gmra.mxu0 %v1605
        %v2155 = vpop.f32.mrf.mxu0
        %v2156 = vadd.f32 %v2067, %v2155
        %v2157 = vpop.f32.mrf.mxu0
        %v2158 = vadd.f32 %v2069, %v2157
        %2159 = vmatmul.bf16.gmra.mxu0 %v1609
        %v2160 = vpop.f32.mrf.mxu0
        %v2161 = vadd.f32 %v2072, %v2160
        %v2162 = vpop.f32.mrf.mxu0
        %v2163 = vadd.f32 %v2074, %v2162
        %2164 = vmatmul.bf16.gmra.mxu0 %v1613
        %v2165 = vpop.f32.mrf.mxu0
        %v2166 = vadd.f32 %v2077, %v2165
        %v2167 = vpop.f32.mrf.mxu0
        %v2168 = vadd.f32 %v2079, %v2167
        %2169 = vmatmul.bf16.gmra.mxu0 %v1617
        %v2170 = vpop.f32.mrf.mxu0
        %v2171 = vadd.f32 %v2082, %v2170
        %v2172 = vpop.f32.mrf.mxu0
        %v2173 = vadd.f32 %v2084, %v2172
        %2174 = vmatmul.bf16.gmra.mxu0 %v1621
        %v2175 = vpop.f32.mrf.mxu0
        %v2176 = vadd.f32 %v2087, %v2175
        %v2177 = vpop.f32.mrf.mxu0
        %v2178 = vadd.f32 %v2089, %v2177
        %2179 = vmatmul.bf16.gmra.mxu0 %v1625
        %v2180 = vpop.f32.mrf.mxu0
        %v2181 = vadd.f32 %v2092, %v2180
        %v2182 = vpop.f32.mrf.mxu0
        %v2183 = vadd.f32 %v2094, %v2182
        %2184 = vmatmul.bf16.gmra.mxu0 %v1629
        %v2185 = vpop.f32.mrf.mxu0
        %v2186 = vadd.f32 %v2097, %v2185
        %v2187 = vpop.f32.mrf.mxu0
        %v2188 = vadd.f32 %v2099, %v2187
        %2189 = vmatmul.bf16.gmra.mxu0 %v1633
        %v2190 = vpop.f32.mrf.mxu0
        %v2191 = vadd.f32 %v2102, %v2190
        %v2192 = vpop.f32.mrf.mxu0
        %v2193 = vadd.f32 %v2104, %v2192
        %2194 = vmatmul.bf16.gmra.mxu0 %v1637
        %v2195 = vpop.f32.mrf.mxu0
        %v2196 = vadd.f32 %v2107, %v2195
        %v2197 = vpop.f32.mrf.mxu0
        %v2198 = vadd.f32 %v2109, %v2197
        %2199 = vmatmul.bf16.gmra.mxu0 %v1641
        %v2200 = vpop.f32.mrf.mxu0
        %v2201 = vadd.f32 %v2112, %v2200
        %v2202 = vpop.f32.mrf.mxu0
        %v2203 = vadd.f32 %v2114, %v2202
        %2204 = vmatmul.bf16.gmra.mxu0 %v1645
        %v2205 = vpop.f32.mrf.mxu0
        %v2206 = vadd.f32 %v2117, %v2205
        %v2207 = vpop.f32.mrf.mxu0
        %v2208 = vadd.f32 %v2119, %v2207
        %2209 = vdwg.mxu0
        %2210 = vmatpush.bf16.msra.mxu0 %v1950
        %2211 = vmatpush.bf16.msra.mxu0 %v1948
        %2212 = vmatpush.bf16.msra.mxu0 %v1946
        %2213 = vmatpush.bf16.msra.mxu0 %v1944
        %2214 = vmatpush.bf16.msra.mxu0 %v1942
        %2215 = vmatpush.bf16.msra.mxu0 %v1940
        %2216 = vmatpush.bf16.msra.mxu0 %v1938
        %2217 = vmatpush.bf16.msra.mxu0 %v1936
        %2218 = vmatmul.bf16.gmra.mxu0 %v1586
        %v2219 = vpop.f32.mrf.mxu0
        %v2220 = vadd.f32 %v2131, %v2219
        %v2221 = vpop.f32.mrf.mxu0
        %v2222 = vadd.f32 %v2133, %v2221
        %2223 = vmatmul.bf16.gmra.mxu0 %v1590
        %v2224 = vpop.f32.mrf.mxu0
        %v2225 = vadd.f32 %v2136, %v2224
        %v2226 = vpop.f32.mrf.mxu0
        %v2227 = vadd.f32 %v2138, %v2226
        %2228 = vmatmul.bf16.gmra.mxu0 %v1594
        %v2229 = vpop.f32.mrf.mxu0
        %v2230 = vadd.f32 %v2141, %v2229
        %v2231 = vpop.f32.mrf.mxu0
        %v2232 = vadd.f32 %v2143, %v2231
        %2233 = vmatmul.bf16.gmra.mxu0 %v1598
        %v2234 = vpop.f32.mrf.mxu0
        %v2235 = vadd.f32 %v2146, %v2234
        %v2236 = vpop.f32.mrf.mxu0
        %v2237 = vadd.f32 %v2148, %v2236
        %2238 = vmatmul.bf16.gmra.mxu0 %v1602
        %v2239 = vpop.f32.mrf.mxu0
        %v2240 = vadd.f32 %v2151, %v2239
        %v2241 = vpop.f32.mrf.mxu0
        %v2242 = vadd.f32 %v2153, %v2241
        %2243 = vmatmul.bf16.gmra.mxu0 %v1606
        %v2244 = vpop.f32.mrf.mxu0
        %v2245 = vadd.f32 %v2156, %v2244
        %v2246 = vpop.f32.mrf.mxu0
        %v2247 = vadd.f32 %v2158, %v2246
        %2248 = vmatmul.bf16.gmra.mxu0 %v1610
        %v2249 = vpop.f32.mrf.mxu0
        %v2250 = vadd.f32 %v2161, %v2249
        %v2251 = vpop.f32.mrf.mxu0
        %v2252 = vadd.f32 %v2163, %v2251
        %2253 = vmatmul.bf16.gmra.mxu0 %v1614
        %v2254 = vpop.f32.mrf.mxu0
        %v2255 = vadd.f32 %v2166, %v2254
        %v2256 = vpop.f32.mrf.mxu0
        %v2257 = vadd.f32 %v2168, %v2256
        %2258 = vmatmul.bf16.gmra.mxu0 %v1618
        %v2259 = vpop.f32.mrf.mxu0
        %v2260 = vadd.f32 %v2171, %v2259
        %v2261 = vpop.f32.mrf.mxu0
        %v2262 = vadd.f32 %v2173, %v2261
        %2263 = vmatmul.bf16.gmra.mxu0 %v1622
        %v2264 = vpop.f32.mrf.mxu0
        %v2265 = vadd.f32 %v2176, %v2264
        %v2266 = vpop.f32.mrf.mxu0
        %v2267 = vadd.f32 %v2178, %v2266
        %2268 = vmatmul.bf16.gmra.mxu0 %v1626
        %v2269 = vpop.f32.mrf.mxu0
        %v2270 = vadd.f32 %v2181, %v2269
        %v2271 = vpop.f32.mrf.mxu0
        %v2272 = vadd.f32 %v2183, %v2271
        %2273 = vmatmul.bf16.gmra.mxu0 %v1630
        %v2274 = vpop.f32.mrf.mxu0
        %v2275 = vadd.f32 %v2186, %v2274
        %v2276 = vpop.f32.mrf.mxu0
        %v2277 = vadd.f32 %v2188, %v2276
        %2278 = vmatmul.bf16.gmra.mxu0 %v1634
        %v2279 = vpop.f32.mrf.mxu0
        %v2280 = vadd.f32 %v2191, %v2279
        %v2281 = vpop.f32.mrf.mxu0
        %v2282 = vadd.f32 %v2193, %v2281
        %2283 = vmatmul.bf16.gmra.mxu0 %v1638
        %v2284 = vpop.f32.mrf.mxu0
        %v2285 = vadd.f32 %v2196, %v2284
        %v2286 = vpop.f32.mrf.mxu0
        %v2287 = vadd.f32 %v2198, %v2286
        %2288 = vmatmul.bf16.gmra.mxu0 %v1642
        %v2289 = vpop.f32.mrf.mxu0
        %v2290 = vadd.f32 %v2201, %v2289
        %v2291 = vpop.f32.mrf.mxu0
        %v2292 = vadd.f32 %v2203, %v2291
        %2293 = vmatmul.bf16.gmra.mxu0 %v1646
        %v2294 = vpop.f32.mrf.mxu0
        %v2295 = vadd.f32 %v2206, %v2294
        %v2296 = vpop.f32.mrf.mxu0
        %v2297 = vadd.f32 %v2208, %v2296
        %2298 = vdwg.mxu0
        %2299 = vmatpush.bf16.msra.mxu0 %v1966
        %2300 = vmatpush.bf16.msra.mxu0 %v1964
        %2301 = vmatpush.bf16.msra.mxu0 %v1962
        %2302 = vmatpush.bf16.msra.mxu0 %v1960
        %2303 = vmatpush.bf16.msra.mxu0 %v1958
        %2304 = vmatpush.bf16.msra.mxu0 %v1956
        %2305 = vmatpush.bf16.msra.mxu0 %v1954
        %2306 = vmatpush.bf16.msra.mxu0 %v1952
        %2307 = vmatmul.bf16.gmra.mxu0 %v1587
        %v2308 = vpop.f32.mrf.mxu0
        %v2309 = vadd.f32 %v2220, %v2308
        %v2310 = vpop.f32.mrf.mxu0
        %v2311 = vadd.f32 %v2222, %v2310
        %2312 = vmatmul.bf16.gmra.mxu0 %v1591
        %v2313 = vpop.f32.mrf.mxu0
        %v2314 = vadd.f32 %v2225, %v2313
        %v2315 = vpop.f32.mrf.mxu0
        %v2316 = vadd.f32 %v2227, %v2315
        %2317 = vmatmul.bf16.gmra.mxu0 %v1595
        %v2318 = vpop.f32.mrf.mxu0
        %v2319 = vadd.f32 %v2230, %v2318
        %v2320 = vpop.f32.mrf.mxu0
        %v2321 = vadd.f32 %v2232, %v2320
        %2322 = vmatmul.bf16.gmra.mxu0 %v1599
        %v2323 = vpop.f32.mrf.mxu0
        %v2324 = vadd.f32 %v2235, %v2323
        %v2325 = vpop.f32.mrf.mxu0
        %v2326 = vadd.f32 %v2237, %v2325
        %2327 = vmatmul.bf16.gmra.mxu0 %v1603
        %v2328 = vpop.f32.mrf.mxu0
        %v2329 = vadd.f32 %v2240, %v2328
        %v2330 = vpop.f32.mrf.mxu0
        %v2331 = vadd.f32 %v2242, %v2330
        %2332 = vmatmul.bf16.gmra.mxu0 %v1607
        %v2333 = vpop.f32.mrf.mxu0
        %v2334 = vadd.f32 %v2245, %v2333
        %v2335 = vpop.f32.mrf.mxu0
        %v2336 = vadd.f32 %v2247, %v2335
        %2337 = vmatmul.bf16.gmra.mxu0 %v1611
        %v2338 = vpop.f32.mrf.mxu0
        %v2339 = vadd.f32 %v2250, %v2338
        %v2340 = vpop.f32.mrf.mxu0
        %v2341 = vadd.f32 %v2252, %v2340
        %2342 = vmatmul.bf16.gmra.mxu0 %v1615
        %v2343 = vpop.f32.mrf.mxu0
        %v2344 = vadd.f32 %v2255, %v2343
        %v2345 = vpop.f32.mrf.mxu0
        %v2346 = vadd.f32 %v2257, %v2345
        %2347 = vmatmul.bf16.gmra.mxu0 %v1619
        %v2348 = vpop.f32.mrf.mxu0
        %v2349 = vadd.f32 %v2260, %v2348
        %v2350 = vpop.f32.mrf.mxu0
        %v2351 = vadd.f32 %v2262, %v2350
        %2352 = vmatmul.bf16.gmra.mxu0 %v1623
        %v2353 = vpop.f32.mrf.mxu0
        %v2354 = vadd.f32 %v2265, %v2353
        %v2355 = vpop.f32.mrf.mxu0
        %v2356 = vadd.f32 %v2267, %v2355
        %2357 = vmatmul.bf16.gmra.mxu0 %v1627
        %v2358 = vpop.f32.mrf.mxu0
        %v2359 = vadd.f32 %v2270, %v2358
        %v2360 = vpop.f32.mrf.mxu0
        %v2361 = vadd.f32 %v2272, %v2360
        %2362 = vmatmul.bf16.gmra.mxu0 %v1631
        %v2363 = vpop.f32.mrf.mxu0
        %v2364 = vadd.f32 %v2275, %v2363
        %v2365 = vpop.f32.mrf.mxu0
        %v2366 = vadd.f32 %v2277, %v2365
        %2367 = vmatmul.bf16.gmra.mxu0 %v1635
        %v2368 = vpop.f32.mrf.mxu0
        %v2369 = vadd.f32 %v2280, %v2368
        %v2370 = vpop.f32.mrf.mxu0
        %v2371 = vadd.f32 %v2282, %v2370
        %2372 = vmatmul.bf16.gmra.mxu0 %v1639
        %v2373 = vpop.f32.mrf.mxu0
        %v2374 = vadd.f32 %v2285, %v2373
        %v2375 = vpop.f32.mrf.mxu0
        %v2376 = vadd.f32 %v2287, %v2375
        %2377 = vmatmul.bf16.gmra.mxu0 %v1643
        %v2378 = vpop.f32.mrf.mxu0
        %v2379 = vadd.f32 %v2290, %v2378
        %v2380 = vpop.f32.mrf.mxu0
        %v2381 = vadd.f32 %v2292, %v2380
        %2382 = vmatmul.bf16.gmra.mxu0 %v1647
        %v2383 = vpop.f32.mrf.mxu0
        %v2384 = vadd.f32 %v2295, %v2383
        %v2385 = vpop.f32.mrf.mxu0
        %v2386 = vadd.f32 %v2297, %v2385
        %2387 = vdwg.mxu0
        %2388 = vmatpush.bf16.msra.mxu0 %v1919
        %2389 = vmatpush.bf16.msra.mxu0 %v1917
        %2390 = vmatpush.bf16.msra.mxu0 %v1915
        %2391 = vmatpush.bf16.msra.mxu0 %v1913
        %2392 = vmatpush.bf16.msra.mxu0 %v1911
        %2393 = vmatpush.bf16.msra.mxu0 %v1909
        %2394 = vmatpush.bf16.msra.mxu0 %v1907
        %2395 = vmatpush.bf16.msra.mxu0 %v1905
        %2396 = vmatmul.bf16.gmra.mxu0 %v1584
        %v2397 = vpop.f32.mrf.mxu0
        %v2398 = vadd.f32 0.0, %v2397
        %v2399 = vpop.f32.mrf.mxu0
        %v2400 = vadd.f32 0.0, %v2399
        %2401 = vmatmul.bf16.gmra.mxu0 %v1588
        %v2402 = vpop.f32.mrf.mxu0
        %v2403 = vadd.f32 0.0, %v2402
        %v2404 = vpop.f32.mrf.mxu0
        %v2405 = vadd.f32 0.0, %v2404
        %2406 = vmatmul.bf16.gmra.mxu0 %v1592
        %v2407 = vpop.f32.mrf.mxu0
        %v2408 = vadd.f32 0.0, %v2407
        %v2409 = vpop.f32.mrf.mxu0
        %v2410 = vadd.f32 0.0, %v2409
        %2411 = vmatmul.bf16.gmra.mxu0 %v1596
        %v2412 = vpop.f32.mrf.mxu0
        %v2413 = vadd.f32 0.0, %v2412
        %v2414 = vpop.f32.mrf.mxu0
        %v2415 = vadd.f32 0.0, %v2414
        %2416 = vmatmul.bf16.gmra.mxu0 %v1600
        %v2417 = vpop.f32.mrf.mxu0
        %v2418 = vadd.f32 0.0, %v2417
        %v2419 = vpop.f32.mrf.mxu0
        %v2420 = vadd.f32 0.0, %v2419
        %2421 = vmatmul.bf16.gmra.mxu0 %v1604
        %v2422 = vpop.f32.mrf.mxu0
        %v2423 = vadd.f32 0.0, %v2422
        %v2424 = vpop.f32.mrf.mxu0
        %v2425 = vadd.f32 0.0, %v2424
        %2426 = vmatmul.bf16.gmra.mxu0 %v1608
        %v2427 = vpop.f32.mrf.mxu0
        %v2428 = vadd.f32 0.0, %v2427
        %v2429 = vpop.f32.mrf.mxu0
        %v2430 = vadd.f32 0.0, %v2429
        %2431 = vmatmul.bf16.gmra.mxu0 %v1612
        %v2432 = vpop.f32.mrf.mxu0
        %v2433 = vadd.f32 0.0, %v2432
        %v2434 = vpop.f32.mrf.mxu0
        %v2435 = vadd.f32 0.0, %v2434
        %2436 = vmatmul.bf16.gmra.mxu0 %v1616
        %v2437 = vpop.f32.mrf.mxu0
        %v2438 = vadd.f32 0.0, %v2437
        %v2439 = vpop.f32.mrf.mxu0
        %v2440 = vadd.f32 0.0, %v2439
        %2441 = vmatmul.bf16.gmra.mxu0 %v1620
        %v2442 = vpop.f32.mrf.mxu0
        %v2443 = vadd.f32 0.0, %v2442
        %v2444 = vpop.f32.mrf.mxu0
        %v2445 = vadd.f32 0.0, %v2444
        %2446 = vmatmul.bf16.gmra.mxu0 %v1624
        %v2447 = vpop.f32.mrf.mxu0
        %v2448 = vadd.f32 0.0, %v2447
        %v2449 = vpop.f32.mrf.mxu0
        %v2450 = vadd.f32 0.0, %v2449
        %2451 = vmatmul.bf16.gmra.mxu0 %v1628
        %v2452 = vpop.f32.mrf.mxu0
        %v2453 = vadd.f32 0.0, %v2452
        %v2454 = vpop.f32.mrf.mxu0
        %v2455 = vadd.f32 0.0, %v2454
        %2456 = vmatmul.bf16.gmra.mxu0 %v1632
        %v2457 = vpop.f32.mrf.mxu0
        %v2458 = vadd.f32 0.0, %v2457
        %v2459 = vpop.f32.mrf.mxu0
        %v2460 = vadd.f32 0.0, %v2459
        %2461 = vmatmul.bf16.gmra.mxu0 %v1636
        %v2462 = vpop.f32.mrf.mxu0
        %v2463 = vadd.f32 0.0, %v2462
        %v2464 = vpop.f32.mrf.mxu0
        %v2465 = vadd.f32 0.0, %v2464
        %2466 = vmatmul.bf16.gmra.mxu0 %v1640
        %v2467 = vpop.f32.mrf.mxu0
        %v2468 = vadd.f32 0.0, %v2467
        %v2469 = vpop.f32.mrf.mxu0
        %v2470 = vadd.f32 0.0, %v2469
        %2471 = vmatmul.bf16.gmra.mxu0 %v1644
        %v2472 = vpop.f32.mrf.mxu0
        %v2473 = vadd.f32 0.0, %v2472
        %v2474 = vpop.f32.mrf.mxu0
        %v2475 = vadd.f32 0.0, %v2474
        %2476 = vdwg.mxu0
        %2477 = vmatpush.bf16.msra.mxu0 %v1935
        %2478 = vmatpush.bf16.msra.mxu0 %v1933
        %2479 = vmatpush.bf16.msra.mxu0 %v1931
        %2480 = vmatpush.bf16.msra.mxu0 %v1929
        %2481 = vmatpush.bf16.msra.mxu0 %v1927
        %2482 = vmatpush.bf16.msra.mxu0 %v1925
        %2483 = vmatpush.bf16.msra.mxu0 %v1923
        %2484 = vmatpush.bf16.msra.mxu0 %v1921
        %2485 = vmatmul.bf16.gmra.mxu0 %v1585
        %v2486 = vpop.f32.mrf.mxu0
        %v2487 = vadd.f32 %v2398, %v2486
        %v2488 = vpop.f32.mrf.mxu0
        %v2489 = vadd.f32 %v2400, %v2488
        %2490 = vmatmul.bf16.gmra.mxu0 %v1589
        %v2491 = vpop.f32.mrf.mxu0
        %v2492 = vadd.f32 %v2403, %v2491
        %v2493 = vpop.f32.mrf.mxu0
        %v2494 = vadd.f32 %v2405, %v2493
        %2495 = vmatmul.bf16.gmra.mxu0 %v1593
        %v2496 = vpop.f32.mrf.mxu0
        %v2497 = vadd.f32 %v2408, %v2496
        %v2498 = vpop.f32.mrf.mxu0
        %v2499 = vadd.f32 %v2410, %v2498
        %2500 = vmatmul.bf16.gmra.mxu0 %v1597
        %v2501 = vpop.f32.mrf.mxu0
        %v2502 = vadd.f32 %v2413, %v2501
        %v2503 = vpop.f32.mrf.mxu0
        %v2504 = vadd.f32 %v2415, %v2503
        %2505 = vmatmul.bf16.gmra.mxu0 %v1601
        %v2506 = vpop.f32.mrf.mxu0
        %v2507 = vadd.f32 %v2418, %v2506
        %v2508 = vpop.f32.mrf.mxu0
        %v2509 = vadd.f32 %v2420, %v2508
        %2510 = vmatmul.bf16.gmra.mxu0 %v1605
        %v2511 = vpop.f32.mrf.mxu0
        %v2512 = vadd.f32 %v2423, %v2511
        %v2513 = vpop.f32.mrf.mxu0
        %v2514 = vadd.f32 %v2425, %v2513
        %2515 = vmatmul.bf16.gmra.mxu0 %v1609
        %v2516 = vpop.f32.mrf.mxu0
        %v2517 = vadd.f32 %v2428, %v2516
        %v2518 = vpop.f32.mrf.mxu0
        %v2519 = vadd.f32 %v2430, %v2518
        %2520 = vmatmul.bf16.gmra.mxu0 %v1613
        %v2521 = vpop.f32.mrf.mxu0
        %v2522 = vadd.f32 %v2433, %v2521
        %v2523 = vpop.f32.mrf.mxu0
        %v2524 = vadd.f32 %v2435, %v2523
        %2525 = vmatmul.bf16.gmra.mxu0 %v1617
        %v2526 = vpop.f32.mrf.mxu0
        %v2527 = vadd.f32 %v2438, %v2526
        %v2528 = vpop.f32.mrf.mxu0
        %v2529 = vadd.f32 %v2440, %v2528
        %2530 = vmatmul.bf16.gmra.mxu0 %v1621
        %v2531 = vpop.f32.mrf.mxu0
        %v2532 = vadd.f32 %v2443, %v2531
        %v2533 = vpop.f32.mrf.mxu0
        %v2534 = vadd.f32 %v2445, %v2533
        %2535 = vmatmul.bf16.gmra.mxu0 %v1625
        %v2536 = vpop.f32.mrf.mxu0
        %v2537 = vadd.f32 %v2448, %v2536
        %v2538 = vpop.f32.mrf.mxu0
        %v2539 = vadd.f32 %v2450, %v2538
        %2540 = vmatmul.bf16.gmra.mxu0 %v1629
        %v2541 = vpop.f32.mrf.mxu0
        %v2542 = vadd.f32 %v2453, %v2541
        %v2543 = vpop.f32.mrf.mxu0
        %v2544 = vadd.f32 %v2455, %v2543
        %2545 = vmatmul.bf16.gmra.mxu0 %v1633
        %v2546 = vpop.f32.mrf.mxu0
        %v2547 = vadd.f32 %v2458, %v2546
        %v2548 = vpop.f32.mrf.mxu0
        %v2549 = vadd.f32 %v2460, %v2548
        %2550 = vmatmul.bf16.gmra.mxu0 %v1637
        %v2551 = vpop.f32.mrf.mxu0
        %v2552 = vadd.f32 %v2463, %v2551
        %v2553 = vpop.f32.mrf.mxu0
        %v2554 = vadd.f32 %v2465, %v2553
        %2555 = vmatmul.bf16.gmra.mxu0 %v1641
        %v2556 = vpop.f32.mrf.mxu0
        %v2557 = vadd.f32 %v2468, %v2556
        %v2558 = vpop.f32.mrf.mxu0
        %v2559 = vadd.f32 %v2470, %v2558
        %2560 = vmatmul.bf16.gmra.mxu0 %v1645
        %v2561 = vpop.f32.mrf.mxu0
        %v2562 = vadd.f32 %v2473, %v2561
        %v2563 = vpop.f32.mrf.mxu0
        %v2564 = vadd.f32 %v2475, %v2563
        %2565 = vdwg.mxu0
        %2566 = vmatpush.bf16.msra.mxu0 %v1951
        %2567 = vmatpush.bf16.msra.mxu0 %v1949
        %2568 = vmatpush.bf16.msra.mxu0 %v1947
        %2569 = vmatpush.bf16.msra.mxu0 %v1945
        %2570 = vmatpush.bf16.msra.mxu0 %v1943
        %2571 = vmatpush.bf16.msra.mxu0 %v1941
        %2572 = vmatpush.bf16.msra.mxu0 %v1939
        %2573 = vmatpush.bf16.msra.mxu0 %v1937
        %2574 = vmatmul.bf16.gmra.mxu0 %v1586
        %v2575 = vpop.f32.mrf.mxu0
        %v2576 = vadd.f32 %v2487, %v2575
        %v2577 = vpop.f32.mrf.mxu0
        %v2578 = vadd.f32 %v2489, %v2577
        %2579 = vmatmul.bf16.gmra.mxu0 %v1590
        %v2580 = vpop.f32.mrf.mxu0
        %v2581 = vadd.f32 %v2492, %v2580
        %v2582 = vpop.f32.mrf.mxu0
        %v2583 = vadd.f32 %v2494, %v2582
        %2584 = vmatmul.bf16.gmra.mxu0 %v1594
        %v2585 = vpop.f32.mrf.mxu0
        %v2586 = vadd.f32 %v2497, %v2585
        %v2587 = vpop.f32.mrf.mxu0
        %v2588 = vadd.f32 %v2499, %v2587
        %2589 = vmatmul.bf16.gmra.mxu0 %v1598
        %v2590 = vpop.f32.mrf.mxu0
        %v2591 = vadd.f32 %v2502, %v2590
        %v2592 = vpop.f32.mrf.mxu0
        %v2593 = vadd.f32 %v2504, %v2592
        %2594 = vmatmul.bf16.gmra.mxu0 %v1602
        %v2595 = vpop.f32.mrf.mxu0
        %v2596 = vadd.f32 %v2507, %v2595
        %v2597 = vpop.f32.mrf.mxu0
        %v2598 = vadd.f32 %v2509, %v2597
        %2599 = vmatmul.bf16.gmra.mxu0 %v1606
        %v2600 = vpop.f32.mrf.mxu0
        %v2601 = vadd.f32 %v2512, %v2600
        %v2602 = vpop.f32.mrf.mxu0
        %v2603 = vadd.f32 %v2514, %v2602
        %2604 = vmatmul.bf16.gmra.mxu0 %v1610
        %v2605 = vpop.f32.mrf.mxu0
        %v2606 = vadd.f32 %v2517, %v2605
        %v2607 = vpop.f32.mrf.mxu0
        %v2608 = vadd.f32 %v2519, %v2607
        %2609 = vmatmul.bf16.gmra.mxu0 %v1614
        %v2610 = vpop.f32.mrf.mxu0
        %v2611 = vadd.f32 %v2522, %v2610
        %v2612 = vpop.f32.mrf.mxu0
        %v2613 = vadd.f32 %v2524, %v2612
        %2614 = vmatmul.bf16.gmra.mxu0 %v1618
        %v2615 = vpop.f32.mrf.mxu0
        %v2616 = vadd.f32 %v2527, %v2615
        %v2617 = vpop.f32.mrf.mxu0
        %v2618 = vadd.f32 %v2529, %v2617
        %2619 = vmatmul.bf16.gmra.mxu0 %v1622
        %v2620 = vpop.f32.mrf.mxu0
        %v2621 = vadd.f32 %v2532, %v2620
        %v2622 = vpop.f32.mrf.mxu0
        %v2623 = vadd.f32 %v2534, %v2622
        %2624 = vmatmul.bf16.gmra.mxu0 %v1626
        %v2625 = vpop.f32.mrf.mxu0
        %v2626 = vadd.f32 %v2537, %v2625
        %v2627 = vpop.f32.mrf.mxu0
        %v2628 = vadd.f32 %v2539, %v2627
        %2629 = vmatmul.bf16.gmra.mxu0 %v1630
        %v2630 = vpop.f32.mrf.mxu0
        %v2631 = vadd.f32 %v2542, %v2630
        %v2632 = vpop.f32.mrf.mxu0
        %v2633 = vadd.f32 %v2544, %v2632
        %2634 = vmatmul.bf16.gmra.mxu0 %v1634
        %v2635 = vpop.f32.mrf.mxu0
        %v2636 = vadd.f32 %v2547, %v2635
        %v2637 = vpop.f32.mrf.mxu0
        %v2638 = vadd.f32 %v2549, %v2637
        %2639 = vmatmul.bf16.gmra.mxu0 %v1638
        %v2640 = vpop.f32.mrf.mxu0
        %v2641 = vadd.f32 %v2552, %v2640
        %v2642 = vpop.f32.mrf.mxu0
        %v2643 = vadd.f32 %v2554, %v2642
        %2644 = vmatmul.bf16.gmra.mxu0 %v1642
        %v2645 = vpop.f32.mrf.mxu0
        %v2646 = vadd.f32 %v2557, %v2645
        %v2647 = vpop.f32.mrf.mxu0
        %v2648 = vadd.f32 %v2559, %v2647
        %2649 = vmatmul.bf16.gmra.mxu0 %v1646
        %v2650 = vpop.f32.mrf.mxu0
        %v2651 = vadd.f32 %v2562, %v2650
        %v2652 = vpop.f32.mrf.mxu0
        %v2653 = vadd.f32 %v2564, %v2652
        %2654 = vdwg.mxu0
        %2655 = vmatpush.bf16.msra.mxu0 %v1967
        %2656 = vmatpush.bf16.msra.mxu0 %v1965
        %2657 = vmatpush.bf16.msra.mxu0 %v1963
        %2658 = vmatpush.bf16.msra.mxu0 %v1961
        %2659 = vmatpush.bf16.msra.mxu0 %v1959
        %2660 = vmatpush.bf16.msra.mxu0 %v1957
        %2661 = vmatpush.bf16.msra.mxu0 %v1955
        %2662 = vmatpush.bf16.msra.mxu0 %v1953
        %2663 = vmatmul.bf16.gmra.mxu0 %v1587
        %v2664 = vpop.f32.mrf.mxu0
        %v2665 = vadd.f32 %v2576, %v2664
        %v2666 = vpop.f32.mrf.mxu0
        %v2667 = vadd.f32 %v2578, %v2666
        %2668 = vmatmul.bf16.gmra.mxu0 %v1591
        %v2669 = vpop.f32.mrf.mxu0
        %v2670 = vadd.f32 %v2581, %v2669
        %v2671 = vpop.f32.mrf.mxu0
        %v2672 = vadd.f32 %v2583, %v2671
        %2673 = vmatmul.bf16.gmra.mxu0 %v1595
        %v2674 = vpop.f32.mrf.mxu0
        %v2675 = vadd.f32 %v2586, %v2674
        %v2676 = vpop.f32.mrf.mxu0
        %v2677 = vadd.f32 %v2588, %v2676
        %2678 = vmatmul.bf16.gmra.mxu0 %v1599
        %v2679 = vpop.f32.mrf.mxu0
        %v2680 = vadd.f32 %v2591, %v2679
        %v2681 = vpop.f32.mrf.mxu0
        %v2682 = vadd.f32 %v2593, %v2681
        %2683 = vmatmul.bf16.gmra.mxu0 %v1603
        %v2684 = vpop.f32.mrf.mxu0
        %v2685 = vadd.f32 %v2596, %v2684
        %v2686 = vpop.f32.mrf.mxu0
        %v2687 = vadd.f32 %v2598, %v2686
        %2688 = vmatmul.bf16.gmra.mxu0 %v1607
        %v2689 = vpop.f32.mrf.mxu0
        %v2690 = vadd.f32 %v2601, %v2689
        %v2691 = vpop.f32.mrf.mxu0
        %v2692 = vadd.f32 %v2603, %v2691
        %2693 = vmatmul.bf16.gmra.mxu0 %v1611
        %v2694 = vpop.f32.mrf.mxu0
        %v2695 = vadd.f32 %v2606, %v2694
        %v2696 = vpop.f32.mrf.mxu0
        %v2697 = vadd.f32 %v2608, %v2696
        %2698 = vmatmul.bf16.gmra.mxu0 %v1615
        %v2699 = vpop.f32.mrf.mxu0
        %v2700 = vadd.f32 %v2611, %v2699
        %v2701 = vpop.f32.mrf.mxu0
        %v2702 = vadd.f32 %v2613, %v2701
        %2703 = vmatmul.bf16.gmra.mxu0 %v1619
        %v2704 = vpop.f32.mrf.mxu0
        %v2705 = vadd.f32 %v2616, %v2704
        %v2706 = vpop.f32.mrf.mxu0
        %v2707 = vadd.f32 %v2618, %v2706
        %2708 = vmatmul.bf16.gmra.mxu0 %v1623
        %v2709 = vpop.f32.mrf.mxu0
        %v2710 = vadd.f32 %v2621, %v2709
        %v2711 = vpop.f32.mrf.mxu0
        %v2712 = vadd.f32 %v2623, %v2711
        %2713 = vmatmul.bf16.gmra.mxu0 %v1627
        %v2714 = vpop.f32.mrf.mxu0
        %v2715 = vadd.f32 %v2626, %v2714
        %v2716 = vpop.f32.mrf.mxu0
        %v2717 = vadd.f32 %v2628, %v2716
        %2718 = vmatmul.bf16.gmra.mxu0 %v1631
        %v2719 = vpop.f32.mrf.mxu0
        %v2720 = vadd.f32 %v2631, %v2719
        %v2721 = vpop.f32.mrf.mxu0
        %v2722 = vadd.f32 %v2633, %v2721
        %2723 = vmatmul.bf16.gmra.mxu0 %v1635
        %v2724 = vpop.f32.mrf.mxu0
        %v2725 = vadd.f32 %v2636, %v2724
        %v2726 = vpop.f32.mrf.mxu0
        %v2727 = vadd.f32 %v2638, %v2726
        %2728 = vmatmul.bf16.gmra.mxu0 %v1639
        %v2729 = vpop.f32.mrf.mxu0
        %v2730 = vadd.f32 %v2641, %v2729
        %v2731 = vpop.f32.mrf.mxu0
        %v2732 = vadd.f32 %v2643, %v2731
        %2733 = vmatmul.bf16.gmra.mxu0 %v1643
        %v2734 = vpop.f32.mrf.mxu0
        %v2735 = vadd.f32 %v2646, %v2734
        %v2736 = vpop.f32.mrf.mxu0
        %v2737 = vadd.f32 %v2648, %v2736
        %2738 = vmatmul.bf16.gmra.mxu0 %v1647
        %v2739 = vpop.f32.mrf.mxu0
        %v2740 = vadd.f32 %v2651, %v2739
        %v2741 = vpop.f32.mrf.mxu0
        %v2742 = vadd.f32 %v2653, %v2741
        %2743 = vdwg.mxu0
        %v2744 = vld [vmem:[#allocation8] sm:$0xff]
        %v2745 = vld [vmem:[#allocation8 + $0x8] sm:$0xff]
        %v2746 = vld [vmem:[#allocation8 + $0x10] sm:$0xff]
        %v2747 = vld [vmem:[#allocation8 + $0x18] sm:$0xff]
        %v2748 = vld [vmem:[#allocation8 + $0x20] sm:$0xff]
        %v2749 = vld [vmem:[#allocation8 + $0x28] sm:$0xff]
        %v2750 = vld [vmem:[#allocation8 + $0x30] sm:$0xff]
        %v2751 = vld [vmem:[#allocation8 + $0x38] sm:$0xff]
        %v2752 = vld [vmem:[#allocation8 + $0x40] sm:$0xff]
        %v2753 = vld [vmem:[#allocation8 + $0x48] sm:$0xff]
        %v2754 = vld [vmem:[#allocation8 + $0x50] sm:$0xff]
        %v2755 = vld [vmem:[#allocation8 + $0x58] sm:$0xff]
        %v2756 = vld [vmem:[#allocation8 + $0x60] sm:$0xff]
        %v2757 = vld [vmem:[#allocation8 + $0x68] sm:$0xff]
        %v2758 = vld [vmem:[#allocation8 + $0x70] sm:$0xff]
        %v2759 = vld [vmem:[#allocation8 + $0x78] sm:$0xff]
        %v2760 = vld [vmem:[#allocation8 + $0x80] sm:$0xff]
        %v2761 = vld [vmem:[#allocation8 + $0x88] sm:$0xff]
        %v2762 = vld [vmem:[#allocation8 + $0x90] sm:$0xff]
        %v2763 = vld [vmem:[#allocation8 + $0x98] sm:$0xff]
        %v2764 = vld [vmem:[#allocation8 + $0xa0] sm:$0xff]
        %v2765 = vld [vmem:[#allocation8 + $0xa8] sm:$0xff]
        %v2766 = vld [vmem:[#allocation8 + $0xb0] sm:$0xff]
        %v2767 = vld [vmem:[#allocation8 + $0xb8] sm:$0xff]
        %v2768 = vld [vmem:[#allocation8 + $0xc0] sm:$0xff]
        %v2769 = vld [vmem:[#allocation8 + $0xc8] sm:$0xff]
        %v2770 = vld [vmem:[#allocation8 + $0xd0] sm:$0xff]
        %v2771 = vld [vmem:[#allocation8 + $0xd8] sm:$0xff]
        %v2772 = vld [vmem:[#allocation8 + $0xe0] sm:$0xff]
        %v2773 = vld [vmem:[#allocation8 + $0xe8] sm:$0xff]
        %v2774 = vld [vmem:[#allocation8 + $0xf0] sm:$0xff]
        %v2775 = vld [vmem:[#allocation8 + $0xf8] sm:$0xff]
        %v2776 = vld [vmem:[#allocation8 + $0x100] sm:$0xff]
        %v2777 = vld [vmem:[#allocation8 + $0x108] sm:$0xff]
        %v2778 = vld [vmem:[#allocation8 + $0x110] sm:$0xff]
        %v2779 = vld [vmem:[#allocation8 + $0x118] sm:$0xff]
        %v2780 = vld [vmem:[#allocation8 + $0x120] sm:$0xff]
        %v2781 = vld [vmem:[#allocation8 + $0x128] sm:$0xff]
        %v2782 = vld [vmem:[#allocation8 + $0x130] sm:$0xff]
        %v2783 = vld [vmem:[#allocation8 + $0x138] sm:$0xff]
        %v2784 = vld [vmem:[#allocation8 + $0x140] sm:$0xff]
        %v2785 = vld [vmem:[#allocation8 + $0x148] sm:$0xff]
        %v2786 = vld [vmem:[#allocation8 + $0x150] sm:$0xff]
        %v2787 = vld [vmem:[#allocation8 + $0x158] sm:$0xff]
        %v2788 = vld [vmem:[#allocation8 + $0x160] sm:$0xff]
        %v2789 = vld [vmem:[#allocation8 + $0x168] sm:$0xff]
        %v2790 = vld [vmem:[#allocation8 + $0x170] sm:$0xff]
        %v2791 = vld [vmem:[#allocation8 + $0x178] sm:$0xff]
        %v2792 = vld [vmem:[#allocation8 + $0x180] sm:$0xff]
        %v2793 = vld [vmem:[#allocation8 + $0x188] sm:$0xff]
        %v2794 = vld [vmem:[#allocation8 + $0x190] sm:$0xff]
        %v2795 = vld [vmem:[#allocation8 + $0x198] sm:$0xff]
        %v2796 = vld [vmem:[#allocation8 + $0x1a0] sm:$0xff]
        %v2797 = vld [vmem:[#allocation8 + $0x1a8] sm:$0xff]
        %v2798 = vld [vmem:[#allocation8 + $0x1b0] sm:$0xff]
        %v2799 = vld [vmem:[#allocation8 + $0x1b8] sm:$0xff]
        %v2800 = vld [vmem:[#allocation8 + $0x1c0] sm:$0xff]
        %v2801 = vld [vmem:[#allocation8 + $0x1c8] sm:$0xff]
        %v2802 = vld [vmem:[#allocation8 + $0x1d0] sm:$0xff]
        %v2803 = vld [vmem:[#allocation8 + $0x1d8] sm:$0xff]
        %v2804 = vld [vmem:[#allocation8 + $0x1e0] sm:$0xff]
        %v2805 = vld [vmem:[#allocation8 + $0x1e8] sm:$0xff]
        %v2806 = vld [vmem:[#allocation8 + $0x1f0] sm:$0xff]
        %v2807 = vld [vmem:[#allocation8 + $0x1f8] sm:$0xff]
        %v2872 = vunpack.c.l.b16 %v2744
        %v2873 = vunpack.c.h.b16 %v2744
        %v2874 = vunpack.c.l.b16 %v2745
        %v2875 = vunpack.c.h.b16 %v2745
        %v2876 = vunpack.c.l.b16 %v2746
        %v2877 = vunpack.c.h.b16 %v2746
        %v2878 = vunpack.c.l.b16 %v2747
        %v2879 = vunpack.c.h.b16 %v2747
        %v2880 = vunpack.c.l.b16 %v2748
        %v2881 = vunpack.c.h.b16 %v2748
        %v2882 = vunpack.c.l.b16 %v2749
        %v2883 = vunpack.c.h.b16 %v2749
        %v2884 = vunpack.c.l.b16 %v2750
        %v2885 = vunpack.c.h.b16 %v2750
        %v2886 = vunpack.c.l.b16 %v2751
        %v2887 = vunpack.c.h.b16 %v2751
        %v2888 = vunpack.c.l.b16 %v2752
        %v2889 = vunpack.c.h.b16 %v2752
        %v2890 = vunpack.c.l.b16 %v2753
        %v2891 = vunpack.c.h.b16 %v2753
        %v2892 = vunpack.c.l.b16 %v2754
        %v2893 = vunpack.c.h.b16 %v2754
        %v2894 = vunpack.c.l.b16 %v2755
        %v2895 = vunpack.c.h.b16 %v2755
        %v2896 = vunpack.c.l.b16 %v2756
        %v2897 = vunpack.c.h.b16 %v2756
        %v2898 = vunpack.c.l.b16 %v2757
        %v2899 = vunpack.c.h.b16 %v2757
        %v2900 = vunpack.c.l.b16 %v2758
        %v2901 = vunpack.c.h.b16 %v2758
        %v2902 = vunpack.c.l.b16 %v2759
        %v2903 = vunpack.c.h.b16 %v2759
        %v2904 = vunpack.c.l.b16 %v2760
        %v2905 = vunpack.c.h.b16 %v2760
        %v2906 = vunpack.c.l.b16 %v2761
        %v2907 = vunpack.c.h.b16 %v2761
        %v2908 = vunpack.c.l.b16 %v2762
        %v2909 = vunpack.c.h.b16 %v2762
        %v2910 = vunpack.c.l.b16 %v2763
        %v2911 = vunpack.c.h.b16 %v2763
        %v2912 = vunpack.c.l.b16 %v2764
        %v2913 = vunpack.c.h.b16 %v2764
        %v2914 = vunpack.c.l.b16 %v2765
        %v2915 = vunpack.c.h.b16 %v2765
        %v2916 = vunpack.c.l.b16 %v2766
        %v2917 = vunpack.c.h.b16 %v2766
        %v2918 = vunpack.c.l.b16 %v2767
        %v2919 = vunpack.c.h.b16 %v2767
        %v2920 = vunpack.c.l.b16 %v2768
        %v2921 = vunpack.c.h.b16 %v2768
        %v2922 = vunpack.c.l.b16 %v2769
        %v2923 = vunpack.c.h.b16 %v2769
        %v2924 = vunpack.c.l.b16 %v2770
        %v2925 = vunpack.c.h.b16 %v2770
        %v2926 = vunpack.c.l.b16 %v2771
        %v2927 = vunpack.c.h.b16 %v2771
        %v2928 = vunpack.c.l.b16 %v2772
        %v2929 = vunpack.c.h.b16 %v2772
        %v2930 = vunpack.c.l.b16 %v2773
        %v2931 = vunpack.c.h.b16 %v2773
        %v2932 = vunpack.c.l.b16 %v2774
        %v2933 = vunpack.c.h.b16 %v2774
        %v2934 = vunpack.c.l.b16 %v2775
        %v2935 = vunpack.c.h.b16 %v2775
        %v2936 = vunpack.c.l.b16 %v2776
        %v2937 = vunpack.c.h.b16 %v2776
        %v2938 = vunpack.c.l.b16 %v2777
        %v2939 = vunpack.c.h.b16 %v2777
        %v2940 = vunpack.c.l.b16 %v2778
        %v2941 = vunpack.c.h.b16 %v2778
        %v2942 = vunpack.c.l.b16 %v2779
        %v2943 = vunpack.c.h.b16 %v2779
        %v2944 = vunpack.c.l.b16 %v2780
        %v2945 = vunpack.c.h.b16 %v2780
        %v2946 = vunpack.c.l.b16 %v2781
        %v2947 = vunpack.c.h.b16 %v2781
        %v2948 = vunpack.c.l.b16 %v2782
        %v2949 = vunpack.c.h.b16 %v2782
        %v2950 = vunpack.c.l.b16 %v2783
        %v2951 = vunpack.c.h.b16 %v2783
        %v2952 = vunpack.c.l.b16 %v2784
        %v2953 = vunpack.c.h.b16 %v2784
        %v2954 = vunpack.c.l.b16 %v2785
        %v2955 = vunpack.c.h.b16 %v2785
        %v2956 = vunpack.c.l.b16 %v2786
        %v2957 = vunpack.c.h.b16 %v2786
        %v2958 = vunpack.c.l.b16 %v2787
        %v2959 = vunpack.c.h.b16 %v2787
        %v2960 = vunpack.c.l.b16 %v2788
        %v2961 = vunpack.c.h.b16 %v2788
        %v2962 = vunpack.c.l.b16 %v2789
        %v2963 = vunpack.c.h.b16 %v2789
        %v2964 = vunpack.c.l.b16 %v2790
        %v2965 = vunpack.c.h.b16 %v2790
        %v2966 = vunpack.c.l.b16 %v2791
        %v2967 = vunpack.c.h.b16 %v2791
        %v2968 = vunpack.c.l.b16 %v2792
        %v2969 = vunpack.c.h.b16 %v2792
        %v2970 = vunpack.c.l.b16 %v2793
        %v2971 = vunpack.c.h.b16 %v2793
        %v2972 = vunpack.c.l.b16 %v2794
        %v2973 = vunpack.c.h.b16 %v2794
        %v2974 = vunpack.c.l.b16 %v2795
        %v2975 = vunpack.c.h.b16 %v2795
        %v2976 = vunpack.c.l.b16 %v2796
        %v2977 = vunpack.c.h.b16 %v2796
        %v2978 = vunpack.c.l.b16 %v2797
        %v2979 = vunpack.c.h.b16 %v2797
        %v2980 = vunpack.c.l.b16 %v2798
        %v2981 = vunpack.c.h.b16 %v2798
        %v2982 = vunpack.c.l.b16 %v2799
        %v2983 = vunpack.c.h.b16 %v2799
        %v2984 = vunpack.c.l.b16 %v2800
        %v2985 = vunpack.c.h.b16 %v2800
        %v2986 = vunpack.c.l.b16 %v2801
        %v2987 = vunpack.c.h.b16 %v2801
        %v2988 = vunpack.c.l.b16 %v2802
        %v2989 = vunpack.c.h.b16 %v2802
        %v2990 = vunpack.c.l.b16 %v2803
        %v2991 = vunpack.c.h.b16 %v2803
        %v2992 = vunpack.c.l.b16 %v2804
        %v2993 = vunpack.c.h.b16 %v2804
        %v2994 = vunpack.c.l.b16 %v2805
        %v2995 = vunpack.c.h.b16 %v2805
        %v2996 = vunpack.c.l.b16 %v2806
        %v2997 = vunpack.c.h.b16 %v2806
        %v2998 = vunpack.c.l.b16 %v2807
        %v2999 = vunpack.c.h.b16 %v2807
        %v3000 = vpack.c.b16 %v2874, %v2872
        %v3001 = vpack.c.b16 %v2875, %v2873
        %v3002 = vpack.c.b16 %v2878, %v2876
        %v3003 = vpack.c.b16 %v2879, %v2877
        %v3004 = vpack.c.b16 %v2882, %v2880
        %v3005 = vpack.c.b16 %v2883, %v2881
        %v3006 = vpack.c.b16 %v2886, %v2884
        %v3007 = vpack.c.b16 %v2887, %v2885
        %v3008 = vpack.c.b16 %v2890, %v2888
        %v3009 = vpack.c.b16 %v2891, %v2889
        %v3010 = vpack.c.b16 %v2894, %v2892
        %v3011 = vpack.c.b16 %v2895, %v2893
        %v3012 = vpack.c.b16 %v2898, %v2896
        %v3013 = vpack.c.b16 %v2899, %v2897
        %v3014 = vpack.c.b16 %v2902, %v2900
        %v3015 = vpack.c.b16 %v2903, %v2901
        %v3016 = vpack.c.b16 %v2906, %v2904
        %v3017 = vpack.c.b16 %v2907, %v2905
        %v3018 = vpack.c.b16 %v2910, %v2908
        %v3019 = vpack.c.b16 %v2911, %v2909
        %v3020 = vpack.c.b16 %v2914, %v2912
        %v3021 = vpack.c.b16 %v2915, %v2913
        %v3022 = vpack.c.b16 %v2918, %v2916
        %v3023 = vpack.c.b16 %v2919, %v2917
        %v3024 = vpack.c.b16 %v2922, %v2920
        %v3025 = vpack.c.b16 %v2923, %v2921
        %v3026 = vpack.c.b16 %v2926, %v2924
        %v3027 = vpack.c.b16 %v2927, %v2925
        %v3028 = vpack.c.b16 %v2930, %v2928
        %v3029 = vpack.c.b16 %v2931, %v2929
        %v3030 = vpack.c.b16 %v2934, %v2932
        %v3031 = vpack.c.b16 %v2935, %v2933
        %v3032 = vpack.c.b16 %v2938, %v2936
        %v3033 = vpack.c.b16 %v2939, %v2937
        %v3034 = vpack.c.b16 %v2942, %v2940
        %v3035 = vpack.c.b16 %v2943, %v2941
        %v3036 = vpack.c.b16 %v2946, %v2944
        %v3037 = vpack.c.b16 %v2947, %v2945
        %v3038 = vpack.c.b16 %v2950, %v2948
        %v3039 = vpack.c.b16 %v2951, %v2949
        %v3040 = vpack.c.b16 %v2954, %v2952
        %v3041 = vpack.c.b16 %v2955, %v2953
        %v3042 = vpack.c.b16 %v2958, %v2956
        %v3043 = vpack.c.b16 %v2959, %v2957
        %v3044 = vpack.c.b16 %v2962, %v2960
        %v3045 = vpack.c.b16 %v2963, %v2961
        %v3046 = vpack.c.b16 %v2966, %v2964
        %v3047 = vpack.c.b16 %v2967, %v2965
        %v3048 = vpack.c.b16 %v2970, %v2968
        %v3049 = vpack.c.b16 %v2971, %v2969
        %v3050 = vpack.c.b16 %v2974, %v2972
        %v3051 = vpack.c.b16 %v2975, %v2973
        %v3052 = vpack.c.b16 %v2978, %v2976
        %v3053 = vpack.c.b16 %v2979, %v2977
        %v3054 = vpack.c.b16 %v2982, %v2980
        %v3055 = vpack.c.b16 %v2983, %v2981
        %v3056 = vpack.c.b16 %v2986, %v2984
        %v3057 = vpack.c.b16 %v2987, %v2985
        %v3058 = vpack.c.b16 %v2990, %v2988
        %v3059 = vpack.c.b16 %v2991, %v2989
        %v3060 = vpack.c.b16 %v2994, %v2992
        %v3061 = vpack.c.b16 %v2995, %v2993
        %v3062 = vpack.c.b16 %v2998, %v2996
        %v3063 = vpack.c.b16 %v2999, %v2997
        %3128 = vmatpush.bf16.msra.mxu0 %v3014
        %3129 = vmatpush.bf16.msra.mxu0 %v3012
        %3130 = vmatpush.bf16.msra.mxu0 %v3010
        %3131 = vmatpush.bf16.msra.mxu0 %v3008
        %3132 = vmatpush.bf16.msra.mxu0 %v3006
        %3133 = vmatpush.bf16.msra.mxu0 %v3004
        %3134 = vmatpush.bf16.msra.mxu0 %v3002
        %3135 = vmatpush.bf16.msra.mxu0 %v3000
        %3136 = vmatmul.bf16.gmra.mxu0 %v1584
        %v3137 = vpop.f32.mrf.mxu0
        %v3138 = vadd.f32 0.0, %v3137
        %v3139 = vpop.f32.mrf.mxu0
        %v3140 = vadd.f32 0.0, %v3139
        %3141 = vmatmul.bf16.gmra.mxu0 %v1588
        %v3142 = vpop.f32.mrf.mxu0
        %v3143 = vadd.f32 0.0, %v3142
        %v3144 = vpop.f32.mrf.mxu0
        %v3145 = vadd.f32 0.0, %v3144
        %3146 = vmatmul.bf16.gmra.mxu0 %v1592
        %v3147 = vpop.f32.mrf.mxu0
        %v3148 = vadd.f32 0.0, %v3147
        %v3149 = vpop.f32.mrf.mxu0
        %v3150 = vadd.f32 0.0, %v3149
        %3151 = vmatmul.bf16.gmra.mxu0 %v1596
        %v3152 = vpop.f32.mrf.mxu0
        %v3153 = vadd.f32 0.0, %v3152
        %v3154 = vpop.f32.mrf.mxu0
        %v3155 = vadd.f32 0.0, %v3154
        %3156 = vmatmul.bf16.gmra.mxu0 %v1600
        %v3157 = vpop.f32.mrf.mxu0
        %v3158 = vadd.f32 0.0, %v3157
        %v3159 = vpop.f32.mrf.mxu0
        %v3160 = vadd.f32 0.0, %v3159
        %3161 = vmatmul.bf16.gmra.mxu0 %v1604
        %v3162 = vpop.f32.mrf.mxu0
        %v3163 = vadd.f32 0.0, %v3162
        %v3164 = vpop.f32.mrf.mxu0
        %v3165 = vadd.f32 0.0, %v3164
        %3166 = vmatmul.bf16.gmra.mxu0 %v1608
        %v3167 = vpop.f32.mrf.mxu0
        %v3168 = vadd.f32 0.0, %v3167
        %v3169 = vpop.f32.mrf.mxu0
        %v3170 = vadd.f32 0.0, %v3169
        %3171 = vmatmul.bf16.gmra.mxu0 %v1612
        %v3172 = vpop.f32.mrf.mxu0
        %v3173 = vadd.f32 0.0, %v3172
        %v3174 = vpop.f32.mrf.mxu0
        %v3175 = vadd.f32 0.0, %v3174
        %3176 = vmatmul.bf16.gmra.mxu0 %v1616
        %v3177 = vpop.f32.mrf.mxu0
        %v3178 = vadd.f32 0.0, %v3177
        %v3179 = vpop.f32.mrf.mxu0
        %v3180 = vadd.f32 0.0, %v3179
        %3181 = vmatmul.bf16.gmra.mxu0 %v1620
        %v3182 = vpop.f32.mrf.mxu0
        %v3183 = vadd.f32 0.0, %v3182
        %v3184 = vpop.f32.mrf.mxu0
        %v3185 = vadd.f32 0.0, %v3184
        %3186 = vmatmul.bf16.gmra.mxu0 %v1624
        %v3187 = vpop.f32.mrf.mxu0
        %v3188 = vadd.f32 0.0, %v3187
        %v3189 = vpop.f32.mrf.mxu0
        %v3190 = vadd.f32 0.0, %v3189
        %3191 = vmatmul.bf16.gmra.mxu0 %v1628
        %v3192 = vpop.f32.mrf.mxu0
        %v3193 = vadd.f32 0.0, %v3192
        %v3194 = vpop.f32.mrf.mxu0
        %v3195 = vadd.f32 0.0, %v3194
        %3196 = vmatmul.bf16.gmra.mxu0 %v1632
        %v3197 = vpop.f32.mrf.mxu0
        %v3198 = vadd.f32 0.0, %v3197
        %v3199 = vpop.f32.mrf.mxu0
        %v3200 = vadd.f32 0.0, %v3199
        %3201 = vmatmul.bf16.gmra.mxu0 %v1636
        %v3202 = vpop.f32.mrf.mxu0
        %v3203 = vadd.f32 0.0, %v3202
        %v3204 = vpop.f32.mrf.mxu0
        %v3205 = vadd.f32 0.0, %v3204
        %3206 = vmatmul.bf16.gmra.mxu0 %v1640
        %v3207 = vpop.f32.mrf.mxu0
        %v3208 = vadd.f32 0.0, %v3207
        %v3209 = vpop.f32.mrf.mxu0
        %v3210 = vadd.f32 0.0, %v3209
        %3211 = vmatmul.bf16.gmra.mxu0 %v1644
        %v3212 = vpop.f32.mrf.mxu0
        %v3213 = vadd.f32 0.0, %v3212
        %v3214 = vpop.f32.mrf.mxu0
        %v3215 = vadd.f32 0.0, %v3214
        %3216 = vdwg.mxu0
        %3217 = vmatpush.bf16.msra.mxu0 %v3030
        %3218 = vmatpush.bf16.msra.mxu0 %v3028
        %3219 = vmatpush.bf16.msra.mxu0 %v3026
        %3220 = vmatpush.bf16.msra.mxu0 %v3024
        %3221 = vmatpush.bf16.msra.mxu0 %v3022
        %3222 = vmatpush.bf16.msra.mxu0 %v3020
        %3223 = vmatpush.bf16.msra.mxu0 %v3018
        %3224 = vmatpush.bf16.msra.mxu0 %v3016
        %3225 = vmatmul.bf16.gmra.mxu0 %v1585
        %v3226 = vpop.f32.mrf.mxu0
        %v3227 = vadd.f32 %v3138, %v3226
        %v3228 = vpop.f32.mrf.mxu0
        %v3229 = vadd.f32 %v3140, %v3228
        %3230 = vmatmul.bf16.gmra.mxu0 %v1589
        %v3231 = vpop.f32.mrf.mxu0
        %v3232 = vadd.f32 %v3143, %v3231
        %v3233 = vpop.f32.mrf.mxu0
        %v3234 = vadd.f32 %v3145, %v3233
        %3235 = vmatmul.bf16.gmra.mxu0 %v1593
        %v3236 = vpop.f32.mrf.mxu0
        %v3237 = vadd.f32 %v3148, %v3236
        %v3238 = vpop.f32.mrf.mxu0
        %v3239 = vadd.f32 %v3150, %v3238
        %3240 = vmatmul.bf16.gmra.mxu0 %v1597
        %v3241 = vpop.f32.mrf.mxu0
        %v3242 = vadd.f32 %v3153, %v3241
        %v3243 = vpop.f32.mrf.mxu0
        %v3244 = vadd.f32 %v3155, %v3243
        %3245 = vmatmul.bf16.gmra.mxu0 %v1601
        %v3246 = vpop.f32.mrf.mxu0
        %v3247 = vadd.f32 %v3158, %v3246
        %v3248 = vpop.f32.mrf.mxu0
        %v3249 = vadd.f32 %v3160, %v3248
        %3250 = vmatmul.bf16.gmra.mxu0 %v1605
        %v3251 = vpop.f32.mrf.mxu0
        %v3252 = vadd.f32 %v3163, %v3251
        %v3253 = vpop.f32.mrf.mxu0
        %v3254 = vadd.f32 %v3165, %v3253
        %3255 = vmatmul.bf16.gmra.mxu0 %v1609
        %v3256 = vpop.f32.mrf.mxu0
        %v3257 = vadd.f32 %v3168, %v3256
        %v3258 = vpop.f32.mrf.mxu0
        %v3259 = vadd.f32 %v3170, %v3258
        %3260 = vmatmul.bf16.gmra.mxu0 %v1613
        %v3261 = vpop.f32.mrf.mxu0
        %v3262 = vadd.f32 %v3173, %v3261
        %v3263 = vpop.f32.mrf.mxu0
        %v3264 = vadd.f32 %v3175, %v3263
        %3265 = vmatmul.bf16.gmra.mxu0 %v1617
        %v3266 = vpop.f32.mrf.mxu0
        %v3267 = vadd.f32 %v3178, %v3266
        %v3268 = vpop.f32.mrf.mxu0
        %v3269 = vadd.f32 %v3180, %v3268
        %3270 = vmatmul.bf16.gmra.mxu0 %v1621
        %v3271 = vpop.f32.mrf.mxu0
        %v3272 = vadd.f32 %v3183, %v3271
        %v3273 = vpop.f32.mrf.mxu0
        %v3274 = vadd.f32 %v3185, %v3273
        %3275 = vmatmul.bf16.gmra.mxu0 %v1625
        %v3276 = vpop.f32.mrf.mxu0
        %v3277 = vadd.f32 %v3188, %v3276
        %v3278 = vpop.f32.mrf.mxu0
        %v3279 = vadd.f32 %v3190, %v3278
        %3280 = vmatmul.bf16.gmra.mxu0 %v1629
        %v3281 = vpop.f32.mrf.mxu0
        %v3282 = vadd.f32 %v3193, %v3281
        %v3283 = vpop.f32.mrf.mxu0
        %v3284 = vadd.f32 %v3195, %v3283
        %3285 = vmatmul.bf16.gmra.mxu0 %v1633
        %v3286 = vpop.f32.mrf.mxu0
        %v3287 = vadd.f32 %v3198, %v3286
        %v3288 = vpop.f32.mrf.mxu0
        %v3289 = vadd.f32 %v3200, %v3288
        %3290 = vmatmul.bf16.gmra.mxu0 %v1637
        %v3291 = vpop.f32.mrf.mxu0
        %v3292 = vadd.f32 %v3203, %v3291
        %v3293 = vpop.f32.mrf.mxu0
        %v3294 = vadd.f32 %v3205, %v3293
        %3295 = vmatmul.bf16.gmra.mxu0 %v1641
        %v3296 = vpop.f32.mrf.mxu0
        %v3297 = vadd.f32 %v3208, %v3296
        %v3298 = vpop.f32.mrf.mxu0
        %v3299 = vadd.f32 %v3210, %v3298
        %3300 = vmatmul.bf16.gmra.mxu0 %v1645
        %v3301 = vpop.f32.mrf.mxu0
        %v3302 = vadd.f32 %v3213, %v3301
        %v3303 = vpop.f32.mrf.mxu0
        %v3304 = vadd.f32 %v3215, %v3303
        %3305 = vdwg.mxu0
        %3306 = vmatpush.bf16.msra.mxu0 %v3046
        %3307 = vmatpush.bf16.msra.mxu0 %v3044
        %3308 = vmatpush.bf16.msra.mxu0 %v3042
        %3309 = vmatpush.bf16.msra.mxu0 %v3040
        %3310 = vmatpush.bf16.msra.mxu0 %v3038
        %3311 = vmatpush.bf16.msra.mxu0 %v3036
        %3312 = vmatpush.bf16.msra.mxu0 %v3034
        %3313 = vmatpush.bf16.msra.mxu0 %v3032
        %3314 = vmatmul.bf16.gmra.mxu0 %v1586
        %v3315 = vpop.f32.mrf.mxu0
        %v3316 = vadd.f32 %v3227, %v3315
        %v3317 = vpop.f32.mrf.mxu0
        %v3318 = vadd.f32 %v3229, %v3317
        %3319 = vmatmul.bf16.gmra.mxu0 %v1590
        %v3320 = vpop.f32.mrf.mxu0
        %v3321 = vadd.f32 %v3232, %v3320
        %v3322 = vpop.f32.mrf.mxu0
        %v3323 = vadd.f32 %v3234, %v3322
        %3324 = vmatmul.bf16.gmra.mxu0 %v1594
        %v3325 = vpop.f32.mrf.mxu0
        %v3326 = vadd.f32 %v3237, %v3325
        %v3327 = vpop.f32.mrf.mxu0
        %v3328 = vadd.f32 %v3239, %v3327
        %3329 = vmatmul.bf16.gmra.mxu0 %v1598
        %v3330 = vpop.f32.mrf.mxu0
        %v3331 = vadd.f32 %v3242, %v3330
        %v3332 = vpop.f32.mrf.mxu0
        %v3333 = vadd.f32 %v3244, %v3332
        %3334 = vmatmul.bf16.gmra.mxu0 %v1602
        %v3335 = vpop.f32.mrf.mxu0
        %v3336 = vadd.f32 %v3247, %v3335
        %v3337 = vpop.f32.mrf.mxu0
        %v3338 = vadd.f32 %v3249, %v3337
        %3339 = vmatmul.bf16.gmra.mxu0 %v1606
        %v3340 = vpop.f32.mrf.mxu0
        %v3341 = vadd.f32 %v3252, %v3340
        %v3342 = vpop.f32.mrf.mxu0
        %v3343 = vadd.f32 %v3254, %v3342
        %3344 = vmatmul.bf16.gmra.mxu0 %v1610
        %v3345 = vpop.f32.mrf.mxu0
        %v3346 = vadd.f32 %v3257, %v3345
        %v3347 = vpop.f32.mrf.mxu0
        %v3348 = vadd.f32 %v3259, %v3347
        %3349 = vmatmul.bf16.gmra.mxu0 %v1614
        %v3350 = vpop.f32.mrf.mxu0
        %v3351 = vadd.f32 %v3262, %v3350
        %v3352 = vpop.f32.mrf.mxu0
        %v3353 = vadd.f32 %v3264, %v3352
        %3354 = vmatmul.bf16.gmra.mxu0 %v1618
        %v3355 = vpop.f32.mrf.mxu0
        %v3356 = vadd.f32 %v3267, %v3355
        %v3357 = vpop.f32.mrf.mxu0
        %v3358 = vadd.f32 %v3269, %v3357
        %3359 = vmatmul.bf16.gmra.mxu0 %v1622
        %v3360 = vpop.f32.mrf.mxu0
        %v3361 = vadd.f32 %v3272, %v3360
        %v3362 = vpop.f32.mrf.mxu0
        %v3363 = vadd.f32 %v3274, %v3362
        %3364 = vmatmul.bf16.gmra.mxu0 %v1626
        %v3365 = vpop.f32.mrf.mxu0
        %v3366 = vadd.f32 %v3277, %v3365
        %v3367 = vpop.f32.mrf.mxu0
        %v3368 = vadd.f32 %v3279, %v3367
        %3369 = vmatmul.bf16.gmra.mxu0 %v1630
        %v3370 = vpop.f32.mrf.mxu0
        %v3371 = vadd.f32 %v3282, %v3370
        %v3372 = vpop.f32.mrf.mxu0
        %v3373 = vadd.f32 %v3284, %v3372
        %3374 = vmatmul.bf16.gmra.mxu0 %v1634
        %v3375 = vpop.f32.mrf.mxu0
        %v3376 = vadd.f32 %v3287, %v3375
        %v3377 = vpop.f32.mrf.mxu0
        %v3378 = vadd.f32 %v3289, %v3377
        %3379 = vmatmul.bf16.gmra.mxu0 %v1638
        %v3380 = vpop.f32.mrf.mxu0
        %v3381 = vadd.f32 %v3292, %v3380
        %v3382 = vpop.f32.mrf.mxu0
        %v3383 = vadd.f32 %v3294, %v3382
        %3384 = vmatmul.bf16.gmra.mxu0 %v1642
        %v3385 = vpop.f32.mrf.mxu0
        %v3386 = vadd.f32 %v3297, %v3385
        %v3387 = vpop.f32.mrf.mxu0
        %v3388 = vadd.f32 %v3299, %v3387
        %3389 = vmatmul.bf16.gmra.mxu0 %v1646
        %v3390 = vpop.f32.mrf.mxu0
        %v3391 = vadd.f32 %v3302, %v3390
        %v3392 = vpop.f32.mrf.mxu0
        %v3393 = vadd.f32 %v3304, %v3392
        %3394 = vdwg.mxu0
        %3395 = vmatpush.bf16.msra.mxu0 %v3062
        %3396 = vmatpush.bf16.msra.mxu0 %v3060
        %3397 = vmatpush.bf16.msra.mxu0 %v3058
        %3398 = vmatpush.bf16.msra.mxu0 %v3056
        %3399 = vmatpush.bf16.msra.mxu0 %v3054
        %3400 = vmatpush.bf16.msra.mxu0 %v3052
        %3401 = vmatpush.bf16.msra.mxu0 %v3050
        %3402 = vmatpush.bf16.msra.mxu0 %v3048
        %3403 = vmatmul.bf16.gmra.mxu0 %v1587
        %v3404 = vpop.f32.mrf.mxu0
        %v3405 = vadd.f32 %v3316, %v3404
        %v3406 = vpop.f32.mrf.mxu0
        %v3407 = vadd.f32 %v3318, %v3406
        %3408 = vmatmul.bf16.gmra.mxu0 %v1591
        %v3409 = vpop.f32.mrf.mxu0
        %v3410 = vadd.f32 %v3321, %v3409
        %v3411 = vpop.f32.mrf.mxu0
        %v3412 = vadd.f32 %v3323, %v3411
        %3413 = vmatmul.bf16.gmra.mxu0 %v1595
        %v3414 = vpop.f32.mrf.mxu0
        %v3415 = vadd.f32 %v3326, %v3414
        %v3416 = vpop.f32.mrf.mxu0
        %v3417 = vadd.f32 %v3328, %v3416
        %3418 = vmatmul.bf16.gmra.mxu0 %v1599
        %v3419 = vpop.f32.mrf.mxu0
        %v3420 = vadd.f32 %v3331, %v3419
        %v3421 = vpop.f32.mrf.mxu0
        %v3422 = vadd.f32 %v3333, %v3421
        %3423 = vmatmul.bf16.gmra.mxu0 %v1603
        %v3424 = vpop.f32.mrf.mxu0
        %v3425 = vadd.f32 %v3336, %v3424
        %v3426 = vpop.f32.mrf.mxu0
        %v3427 = vadd.f32 %v3338, %v3426
        %3428 = vmatmul.bf16.gmra.mxu0 %v1607
        %v3429 = vpop.f32.mrf.mxu0
        %v3430 = vadd.f32 %v3341, %v3429
        %v3431 = vpop.f32.mrf.mxu0
        %v3432 = vadd.f32 %v3343, %v3431
        %3433 = vmatmul.bf16.gmra.mxu0 %v1611
        %v3434 = vpop.f32.mrf.mxu0
        %v3435 = vadd.f32 %v3346, %v3434
        %v3436 = vpop.f32.mrf.mxu0
        %v3437 = vadd.f32 %v3348, %v3436
        %3438 = vmatmul.bf16.gmra.mxu0 %v1615
        %v3439 = vpop.f32.mrf.mxu0
        %v3440 = vadd.f32 %v3351, %v3439
        %v3441 = vpop.f32.mrf.mxu0
        %v3442 = vadd.f32 %v3353, %v3441
        %3443 = vmatmul.bf16.gmra.mxu0 %v1619
        %v3444 = vpop.f32.mrf.mxu0
        %v3445 = vadd.f32 %v3356, %v3444
        %v3446 = vpop.f32.mrf.mxu0
        %v3447 = vadd.f32 %v3358, %v3446
        %3448 = vmatmul.bf16.gmra.mxu0 %v1623
        %v3449 = vpop.f32.mrf.mxu0
        %v3450 = vadd.f32 %v3361, %v3449
        %v3451 = vpop.f32.mrf.mxu0
        %v3452 = vadd.f32 %v3363, %v3451
        %3453 = vmatmul.bf16.gmra.mxu0 %v1627
        %v3454 = vpop.f32.mrf.mxu0
        %v3455 = vadd.f32 %v3366, %v3454
        %v3456 = vpop.f32.mrf.mxu0
        %v3457 = vadd.f32 %v3368, %v3456
        %3458 = vmatmul.bf16.gmra.mxu0 %v1631
        %v3459 = vpop.f32.mrf.mxu0
        %v3460 = vadd.f32 %v3371, %v3459
        %v3461 = vpop.f32.mrf.mxu0
        %v3462 = vadd.f32 %v3373, %v3461
        %3463 = vmatmul.bf16.gmra.mxu0 %v1635
        %v3464 = vpop.f32.mrf.mxu0
        %v3465 = vadd.f32 %v3376, %v3464
        %v3466 = vpop.f32.mrf.mxu0
        %v3467 = vadd.f32 %v3378, %v3466
        %3468 = vmatmul.bf16.gmra.mxu0 %v1639
        %v3469 = vpop.f32.mrf.mxu0
        %v3470 = vadd.f32 %v3381, %v3469
        %v3471 = vpop.f32.mrf.mxu0
        %v3472 = vadd.f32 %v3383, %v3471
        %3473 = vmatmul.bf16.gmra.mxu0 %v1643
        %v3474 = vpop.f32.mrf.mxu0
        %v3475 = vadd.f32 %v3386, %v3474
        %v3476 = vpop.f32.mrf.mxu0
        %v3477 = vadd.f32 %v3388, %v3476
        %3478 = vmatmul.bf16.gmra.mxu0 %v1647
        %v3479 = vpop.f32.mrf.mxu0
        %v3480 = vadd.f32 %v3391, %v3479
        %v3481 = vpop.f32.mrf.mxu0
        %v3482 = vadd.f32 %v3393, %v3481
        %3483 = vdwg.mxu0
        %3484 = vmatpush.bf16.msra.mxu0 %v3015
        %3485 = vmatpush.bf16.msra.mxu0 %v3013
        %3486 = vmatpush.bf16.msra.mxu0 %v3011
        %3487 = vmatpush.bf16.msra.mxu0 %v3009
        %3488 = vmatpush.bf16.msra.mxu0 %v3007
        %3489 = vmatpush.bf16.msra.mxu0 %v3005
        %3490 = vmatpush.bf16.msra.mxu0 %v3003
        %3491 = vmatpush.bf16.msra.mxu0 %v3001
        %3492 = vmatmul.bf16.gmra.mxu0 %v1584
        %v3493 = vpop.f32.mrf.mxu0
        %v3494 = vadd.f32 0.0, %v3493
        %v3495 = vpop.f32.mrf.mxu0
        %v3496 = vadd.f32 0.0, %v3495
        %3497 = vmatmul.bf16.gmra.mxu0 %v1588
        %v3498 = vpop.f32.mrf.mxu0
        %v3499 = vadd.f32 0.0, %v3498
        %v3500 = vpop.f32.mrf.mxu0
        %v3501 = vadd.f32 0.0, %v3500
        %3502 = vmatmul.bf16.gmra.mxu0 %v1592
        %v3503 = vpop.f32.mrf.mxu0
        %v3504 = vadd.f32 0.0, %v3503
        %v3505 = vpop.f32.mrf.mxu0
        %v3506 = vadd.f32 0.0, %v3505
        %3507 = vmatmul.bf16.gmra.mxu0 %v1596
        %v3508 = vpop.f32.mrf.mxu0
        %v3509 = vadd.f32 0.0, %v3508
        %v3510 = vpop.f32.mrf.mxu0
        %v3511 = vadd.f32 0.0, %v3510
        %3512 = vmatmul.bf16.gmra.mxu0 %v1600
        %v3513 = vpop.f32.mrf.mxu0
        %v3514 = vadd.f32 0.0, %v3513
        %v3515 = vpop.f32.mrf.mxu0
        %v3516 = vadd.f32 0.0, %v3515
        %3517 = vmatmul.bf16.gmra.mxu0 %v1604
        %v3518 = vpop.f32.mrf.mxu0
        %v3519 = vadd.f32 0.0, %v3518
        %v3520 = vpop.f32.mrf.mxu0
        %v3521 = vadd.f32 0.0, %v3520
        %3522 = vmatmul.bf16.gmra.mxu0 %v1608
        %v3523 = vpop.f32.mrf.mxu0
        %v3524 = vadd.f32 0.0, %v3523
        %v3525 = vpop.f32.mrf.mxu0
        %v3526 = vadd.f32 0.0, %v3525
        %3527 = vmatmul.bf16.gmra.mxu0 %v1612
        %v3528 = vpop.f32.mrf.mxu0
        %v3529 = vadd.f32 0.0, %v3528
        %v3530 = vpop.f32.mrf.mxu0
        %v3531 = vadd.f32 0.0, %v3530
        %3532 = vmatmul.bf16.gmra.mxu0 %v1616
        %v3533 = vpop.f32.mrf.mxu0
        %v3534 = vadd.f32 0.0, %v3533
        %v3535 = vpop.f32.mrf.mxu0
        %v3536 = vadd.f32 0.0, %v3535
        %3537 = vmatmul.bf16.gmra.mxu0 %v1620
        %v3538 = vpop.f32.mrf.mxu0
        %v3539 = vadd.f32 0.0, %v3538
        %v3540 = vpop.f32.mrf.mxu0
        %v3541 = vadd.f32 0.0, %v3540
        %3542 = vmatmul.bf16.gmra.mxu0 %v1624
        %v3543 = vpop.f32.mrf.mxu0
        %v3544 = vadd.f32 0.0, %v3543
        %v3545 = vpop.f32.mrf.mxu0
        %v3546 = vadd.f32 0.0, %v3545
        %3547 = vmatmul.bf16.gmra.mxu0 %v1628
        %v3548 = vpop.f32.mrf.mxu0
        %v3549 = vadd.f32 0.0, %v3548
        %v3550 = vpop.f32.mrf.mxu0
        %v3551 = vadd.f32 0.0, %v3550
        %3552 = vmatmul.bf16.gmra.mxu0 %v1632
        %v3553 = vpop.f32.mrf.mxu0
        %v3554 = vadd.f32 0.0, %v3553
        %v3555 = vpop.f32.mrf.mxu0
        %v3556 = vadd.f32 0.0, %v3555
        %3557 = vmatmul.bf16.gmra.mxu0 %v1636
        %v3558 = vpop.f32.mrf.mxu0
        %v3559 = vadd.f32 0.0, %v3558
        %v3560 = vpop.f32.mrf.mxu0
        %v3561 = vadd.f32 0.0, %v3560
        %3562 = vmatmul.bf16.gmra.mxu0 %v1640
        %v3563 = vpop.f32.mrf.mxu0
        %v3564 = vadd.f32 0.0, %v3563
        %v3565 = vpop.f32.mrf.mxu0
        %v3566 = vadd.f32 0.0, %v3565
        %3567 = vmatmul.bf16.gmra.mxu0 %v1644
        %v3568 = vpop.f32.mrf.mxu0
        %v3569 = vadd.f32 0.0, %v3568
        %v3570 = vpop.f32.mrf.mxu0
        %v3571 = vadd.f32 0.0, %v3570
        %3572 = vdwg.mxu0
        %3573 = vmatpush.bf16.msra.mxu0 %v3031
        %3574 = vmatpush.bf16.msra.mxu0 %v3029
        %3575 = vmatpush.bf16.msra.mxu0 %v3027
        %3576 = vmatpush.bf16.msra.mxu0 %v3025
        %3577 = vmatpush.bf16.msra.mxu0 %v3023
        %3578 = vmatpush.bf16.msra.mxu0 %v3021
        %3579 = vmatpush.bf16.msra.mxu0 %v3019
        %3580 = vmatpush.bf16.msra.mxu0 %v3017
        %3581 = vmatmul.bf16.gmra.mxu0 %v1585
        %v3582 = vpop.f32.mrf.mxu0
        %v3583 = vadd.f32 %v3494, %v3582
        %v3584 = vpop.f32.mrf.mxu0
        %v3585 = vadd.f32 %v3496, %v3584
        %3586 = vmatmul.bf16.gmra.mxu0 %v1589
        %v3587 = vpop.f32.mrf.mxu0
        %v3588 = vadd.f32 %v3499, %v3587
        %v3589 = vpop.f32.mrf.mxu0
        %v3590 = vadd.f32 %v3501, %v3589
        %3591 = vmatmul.bf16.gmra.mxu0 %v1593
        %v3592 = vpop.f32.mrf.mxu0
        %v3593 = vadd.f32 %v3504, %v3592
        %v3594 = vpop.f32.mrf.mxu0
        %v3595 = vadd.f32 %v3506, %v3594
        %3596 = vmatmul.bf16.gmra.mxu0 %v1597
        %v3597 = vpop.f32.mrf.mxu0
        %v3598 = vadd.f32 %v3509, %v3597
        %v3599 = vpop.f32.mrf.mxu0
        %v3600 = vadd.f32 %v3511, %v3599
        %3601 = vmatmul.bf16.gmra.mxu0 %v1601
        %v3602 = vpop.f32.mrf.mxu0
        %v3603 = vadd.f32 %v3514, %v3602
        %v3604 = vpop.f32.mrf.mxu0
        %v3605 = vadd.f32 %v3516, %v3604
        %3606 = vmatmul.bf16.gmra.mxu0 %v1605
        %v3607 = vpop.f32.mrf.mxu0
        %v3608 = vadd.f32 %v3519, %v3607
        %v3609 = vpop.f32.mrf.mxu0
        %v3610 = vadd.f32 %v3521, %v3609
        %3611 = vmatmul.bf16.gmra.mxu0 %v1609
        %v3612 = vpop.f32.mrf.mxu0
        %v3613 = vadd.f32 %v3524, %v3612
        %v3614 = vpop.f32.mrf.mxu0
        %v3615 = vadd.f32 %v3526, %v3614
        %3616 = vmatmul.bf16.gmra.mxu0 %v1613
        %v3617 = vpop.f32.mrf.mxu0
        %v3618 = vadd.f32 %v3529, %v3617
        %v3619 = vpop.f32.mrf.mxu0
        %v3620 = vadd.f32 %v3531, %v3619
        %3621 = vmatmul.bf16.gmra.mxu0 %v1617
        %v3622 = vpop.f32.mrf.mxu0
        %v3623 = vadd.f32 %v3534, %v3622
        %v3624 = vpop.f32.mrf.mxu0
        %v3625 = vadd.f32 %v3536, %v3624
        %3626 = vmatmul.bf16.gmra.mxu0 %v1621
        %v3627 = vpop.f32.mrf.mxu0
        %v3628 = vadd.f32 %v3539, %v3627
        %v3629 = vpop.f32.mrf.mxu0
        %v3630 = vadd.f32 %v3541, %v3629
        %3631 = vmatmul.bf16.gmra.mxu0 %v1625
        %v3632 = vpop.f32.mrf.mxu0
        %v3633 = vadd.f32 %v3544, %v3632
        %v3634 = vpop.f32.mrf.mxu0
        %v3635 = vadd.f32 %v3546, %v3634
        %3636 = vmatmul.bf16.gmra.mxu0 %v1629
        %v3637 = vpop.f32.mrf.mxu0
        %v3638 = vadd.f32 %v3549, %v3637
        %v3639 = vpop.f32.mrf.mxu0
        %v3640 = vadd.f32 %v3551, %v3639
        %3641 = vmatmul.bf16.gmra.mxu0 %v1633
        %v3642 = vpop.f32.mrf.mxu0
        %v3643 = vadd.f32 %v3554, %v3642
        %v3644 = vpop.f32.mrf.mxu0
        %v3645 = vadd.f32 %v3556, %v3644
        %3646 = vmatmul.bf16.gmra.mxu0 %v1637
        %v3647 = vpop.f32.mrf.mxu0
        %v3648 = vadd.f32 %v3559, %v3647
        %v3649 = vpop.f32.mrf.mxu0
        %v3650 = vadd.f32 %v3561, %v3649
        %3651 = vmatmul.bf16.gmra.mxu0 %v1641
        %v3652 = vpop.f32.mrf.mxu0
        %v3653 = vadd.f32 %v3564, %v3652
        %v3654 = vpop.f32.mrf.mxu0
        %v3655 = vadd.f32 %v3566, %v3654
        %3656 = vmatmul.bf16.gmra.mxu0 %v1645
        %v3657 = vpop.f32.mrf.mxu0
        %v3658 = vadd.f32 %v3569, %v3657
        %v3659 = vpop.f32.mrf.mxu0
        %v3660 = vadd.f32 %v3571, %v3659
        %3661 = vdwg.mxu0
        %3662 = vmatpush.bf16.msra.mxu0 %v3047
        %3663 = vmatpush.bf16.msra.mxu0 %v3045
        %3664 = vmatpush.bf16.msra.mxu0 %v3043
        %3665 = vmatpush.bf16.msra.mxu0 %v3041
        %3666 = vmatpush.bf16.msra.mxu0 %v3039
        %3667 = vmatpush.bf16.msra.mxu0 %v3037
        %3668 = vmatpush.bf16.msra.mxu0 %v3035
        %3669 = vmatpush.bf16.msra.mxu0 %v3033
        %3670 = vmatmul.bf16.gmra.mxu0 %v1586
        %v3671 = vpop.f32.mrf.mxu0
        %v3672 = vadd.f32 %v3583, %v3671
        %v3673 = vpop.f32.mrf.mxu0
        %v3674 = vadd.f32 %v3585, %v3673
        %3675 = vmatmul.bf16.gmra.mxu0 %v1590
        %v3676 = vpop.f32.mrf.mxu0
        %v3677 = vadd.f32 %v3588, %v3676
        %v3678 = vpop.f32.mrf.mxu0
        %v3679 = vadd.f32 %v3590, %v3678
        %3680 = vmatmul.bf16.gmra.mxu0 %v1594
        %v3681 = vpop.f32.mrf.mxu0
        %v3682 = vadd.f32 %v3593, %v3681
        %v3683 = vpop.f32.mrf.mxu0
        %v3684 = vadd.f32 %v3595, %v3683
        %3685 = vmatmul.bf16.gmra.mxu0 %v1598
        %v3686 = vpop.f32.mrf.mxu0
        %v3687 = vadd.f32 %v3598, %v3686
        %v3688 = vpop.f32.mrf.mxu0
        %v3689 = vadd.f32 %v3600, %v3688
        %3690 = vmatmul.bf16.gmra.mxu0 %v1602
        %v3691 = vpop.f32.mrf.mxu0
        %v3692 = vadd.f32 %v3603, %v3691
        %v3693 = vpop.f32.mrf.mxu0
        %v3694 = vadd.f32 %v3605, %v3693
        %3695 = vmatmul.bf16.gmra.mxu0 %v1606
        %v3696 = vpop.f32.mrf.mxu0
        %v3697 = vadd.f32 %v3608, %v3696
        %v3698 = vpop.f32.mrf.mxu0
        %v3699 = vadd.f32 %v3610, %v3698
        %3700 = vmatmul.bf16.gmra.mxu0 %v1610
        %v3701 = vpop.f32.mrf.mxu0
        %v3702 = vadd.f32 %v3613, %v3701
        %v3703 = vpop.f32.mrf.mxu0
        %v3704 = vadd.f32 %v3615, %v3703
        %3705 = vmatmul.bf16.gmra.mxu0 %v1614
        %v3706 = vpop.f32.mrf.mxu0
        %v3707 = vadd.f32 %v3618, %v3706
        %v3708 = vpop.f32.mrf.mxu0
        %v3709 = vadd.f32 %v3620, %v3708
        %3710 = vmatmul.bf16.gmra.mxu0 %v1618
        %v3711 = vpop.f32.mrf.mxu0
        %v3712 = vadd.f32 %v3623, %v3711
        %v3713 = vpop.f32.mrf.mxu0
        %v3714 = vadd.f32 %v3625, %v3713
        %3715 = vmatmul.bf16.gmra.mxu0 %v1622
        %v3716 = vpop.f32.mrf.mxu0
        %v3717 = vadd.f32 %v3628, %v3716
        %v3718 = vpop.f32.mrf.mxu0
        %v3719 = vadd.f32 %v3630, %v3718
        %3720 = vmatmul.bf16.gmra.mxu0 %v1626
        %v3721 = vpop.f32.mrf.mxu0
        %v3722 = vadd.f32 %v3633, %v3721
        %v3723 = vpop.f32.mrf.mxu0
        %v3724 = vadd.f32 %v3635, %v3723
        %3725 = vmatmul.bf16.gmra.mxu0 %v1630
        %v3726 = vpop.f32.mrf.mxu0
        %v3727 = vadd.f32 %v3638, %v3726
        %v3728 = vpop.f32.mrf.mxu0
        %v3729 = vadd.f32 %v3640, %v3728
        %3730 = vmatmul.bf16.gmra.mxu0 %v1634
        %v3731 = vpop.f32.mrf.mxu0
        %v3732 = vadd.f32 %v3643, %v3731
        %v3733 = vpop.f32.mrf.mxu0
        %v3734 = vadd.f32 %v3645, %v3733
        %3735 = vmatmul.bf16.gmra.mxu0 %v1638
        %v3736 = vpop.f32.mrf.mxu0
        %v3737 = vadd.f32 %v3648, %v3736
        %v3738 = vpop.f32.mrf.mxu0
        %v3739 = vadd.f32 %v3650, %v3738
        %3740 = vmatmul.bf16.gmra.mxu0 %v1642
        %v3741 = vpop.f32.mrf.mxu0
        %v3742 = vadd.f32 %v3653, %v3741
        %v3743 = vpop.f32.mrf.mxu0
        %v3744 = vadd.f32 %v3655, %v3743
        %3745 = vmatmul.bf16.gmra.mxu0 %v1646
        %v3746 = vpop.f32.mrf.mxu0
        %v3747 = vadd.f32 %v3658, %v3746
        %v3748 = vpop.f32.mrf.mxu0
        %v3749 = vadd.f32 %v3660, %v3748
        %3750 = vdwg.mxu0
        %3751 = vmatpush.bf16.msra.mxu0 %v3063
        %3752 = vmatpush.bf16.msra.mxu0 %v3061
        %3753 = vmatpush.bf16.msra.mxu0 %v3059
        %3754 = vmatpush.bf16.msra.mxu0 %v3057
        %3755 = vmatpush.bf16.msra.mxu0 %v3055
        %3756 = vmatpush.bf16.msra.mxu0 %v3053
        %3757 = vmatpush.bf16.msra.mxu0 %v3051
        %3758 = vmatpush.bf16.msra.mxu0 %v3049
        %3759 = vmatmul.bf16.gmra.mxu0 %v1587
        %v3760 = vpop.f32.mrf.mxu0
        %v3761 = vadd.f32 %v3672, %v3760
        %v3762 = vpop.f32.mrf.mxu0
        %v3763 = vadd.f32 %v3674, %v3762
        %3764 = vmatmul.bf16.gmra.mxu0 %v1591
        %v3765 = vpop.f32.mrf.mxu0
        %v3766 = vadd.f32 %v3677, %v3765
        %v3767 = vpop.f32.mrf.mxu0
        %v3768 = vadd.f32 %v3679, %v3767
        %3769 = vmatmul.bf16.gmra.mxu0 %v1595
        %v3770 = vpop.f32.mrf.mxu0
        %v3771 = vadd.f32 %v3682, %v3770
        %v3772 = vpop.f32.mrf.mxu0
        %v3773 = vadd.f32 %v3684, %v3772
        %3774 = vmatmul.bf16.gmra.mxu0 %v1599
        %v3775 = vpop.f32.mrf.mxu0
        %v3776 = vadd.f32 %v3687, %v3775
        %v3777 = vpop.f32.mrf.mxu0
        %v3778 = vadd.f32 %v3689, %v3777
        %3779 = vmatmul.bf16.gmra.mxu0 %v1603
        %v3780 = vpop.f32.mrf.mxu0
        %v3781 = vadd.f32 %v3692, %v3780
        %v3782 = vpop.f32.mrf.mxu0
        %v3783 = vadd.f32 %v3694, %v3782
        %3784 = vmatmul.bf16.gmra.mxu0 %v1607
        %v3785 = vpop.f32.mrf.mxu0
        %v3786 = vadd.f32 %v3697, %v3785
        %v3787 = vpop.f32.mrf.mxu0
        %v3788 = vadd.f32 %v3699, %v3787
        %3789 = vmatmul.bf16.gmra.mxu0 %v1611
        %v3790 = vpop.f32.mrf.mxu0
        %v3791 = vadd.f32 %v3702, %v3790
        %v3792 = vpop.f32.mrf.mxu0
        %v3793 = vadd.f32 %v3704, %v3792
        %3794 = vmatmul.bf16.gmra.mxu0 %v1615
        %v3795 = vpop.f32.mrf.mxu0
        %v3796 = vadd.f32 %v3707, %v3795
        %v3797 = vpop.f32.mrf.mxu0
        %v3798 = vadd.f32 %v3709, %v3797
        %3799 = vmatmul.bf16.gmra.mxu0 %v1619
        %v3800 = vpop.f32.mrf.mxu0
        %v3801 = vadd.f32 %v3712, %v3800
        %v3802 = vpop.f32.mrf.mxu0
        %v3803 = vadd.f32 %v3714, %v3802
        %3804 = vmatmul.bf16.gmra.mxu0 %v1623
        %v3805 = vpop.f32.mrf.mxu0
        %v3806 = vadd.f32 %v3717, %v3805
        %v3807 = vpop.f32.mrf.mxu0
        %v3808 = vadd.f32 %v3719, %v3807
        %3809 = vmatmul.bf16.gmra.mxu0 %v1627
        %v3810 = vpop.f32.mrf.mxu0
        %v3811 = vadd.f32 %v3722, %v3810
        %v3812 = vpop.f32.mrf.mxu0
        %v3813 = vadd.f32 %v3724, %v3812
        %3814 = vmatmul.bf16.gmra.mxu0 %v1631
        %v3815 = vpop.f32.mrf.mxu0
        %v3816 = vadd.f32 %v3727, %v3815
        %v3817 = vpop.f32.mrf.mxu0
        %v3818 = vadd.f32 %v3729, %v3817
        %3819 = vmatmul.bf16.gmra.mxu0 %v1635
        %v3820 = vpop.f32.mrf.mxu0
        %v3821 = vadd.f32 %v3732, %v3820
        %v3822 = vpop.f32.mrf.mxu0
        %v3823 = vadd.f32 %v3734, %v3822
        %3824 = vmatmul.bf16.gmra.mxu0 %v1639
        %v3825 = vpop.f32.mrf.mxu0
        %v3826 = vadd.f32 %v3737, %v3825
        %v3827 = vpop.f32.mrf.mxu0
        %v3828 = vadd.f32 %v3739, %v3827
        %3829 = vmatmul.bf16.gmra.mxu0 %v1643
        %v3830 = vpop.f32.mrf.mxu0
        %v3831 = vadd.f32 %v3742, %v3830
        %v3832 = vpop.f32.mrf.mxu0
        %v3833 = vadd.f32 %v3744, %v3832
        %3834 = vmatmul.bf16.gmra.mxu0 %v1647
        %v3835 = vpop.f32.mrf.mxu0
        %v3836 = vadd.f32 %v3747, %v3835
        %v3837 = vpop.f32.mrf.mxu0
        %v3838 = vadd.f32 %v3749, %v3837
        %3839 = vdwg.mxu0
        %v3840 = vld [vmem:[%s380] sm:$0xff]
        %v3841 = vld [vmem:[%s380 + $0x8] sm:$0xff]
        %v3842 = vld [vmem:[%s380 + $0x10] sm:$0xff]
        %v3843 = vld [vmem:[%s380 + $0x18] sm:$0xff]
        %v3844 = vld [vmem:[%s380 + $0x20] sm:$0xff]
        %v3845 = vld [vmem:[%s380 + $0x28] sm:$0xff]
        %v3846 = vld [vmem:[%s380 + $0x30] sm:$0xff]
        %v3847 = vld [vmem:[%s380 + $0x38] sm:$0xff]
        %v3848 = vld [vmem:[%s380 + $0x40] sm:$0xff]
        %v3849 = vld [vmem:[%s380 + $0x48] sm:$0xff]
        %v3850 = vld [vmem:[%s380 + $0x50] sm:$0xff]
        %v3851 = vld [vmem:[%s380 + $0x58] sm:$0xff]
        %v3852 = vld [vmem:[%s380 + $0x60] sm:$0xff]
        %v3853 = vld [vmem:[%s380 + $0x68] sm:$0xff]
        %v3854 = vld [vmem:[%s380 + $0x70] sm:$0xff]
        %v3855 = vld [vmem:[%s380 + $0x78] sm:$0xff]
        %v3856 = vld [vmem:[%s380 + $0x80] sm:$0xff]
        %v3857 = vld [vmem:[%s380 + $0x88] sm:$0xff]
        %v3858 = vld [vmem:[%s380 + $0x90] sm:$0xff]
        %v3859 = vld [vmem:[%s380 + $0x98] sm:$0xff]
        %v3860 = vld [vmem:[%s380 + $0xa0] sm:$0xff]
        %v3861 = vld [vmem:[%s380 + $0xa8] sm:$0xff]
        %v3862 = vld [vmem:[%s380 + $0xb0] sm:$0xff]
        %v3863 = vld [vmem:[%s380 + $0xb8] sm:$0xff]
        %v3864 = vld [vmem:[%s380 + $0xc0] sm:$0xff]
        %v3865 = vld [vmem:[%s380 + $0xc8] sm:$0xff]
        %v3866 = vld [vmem:[%s380 + $0xd0] sm:$0xff]
        %v3867 = vld [vmem:[%s380 + $0xd8] sm:$0xff]
        %v3868 = vld [vmem:[%s380 + $0xe0] sm:$0xff]
        %v3869 = vld [vmem:[%s380 + $0xe8] sm:$0xff]
        %v3870 = vld [vmem:[%s380 + $0xf0] sm:$0xff]
        %v3871 = vld [vmem:[%s380 + $0xf8] sm:$0xff]
        %v3872 = vld [vmem:[%s390] sm:$0xff]
        %v3873 = vld [vmem:[%s390 + $0x8] sm:$0xff]
        %v3874 = vld [vmem:[%s390 + $0x10] sm:$0xff]
        %v3875 = vld [vmem:[%s390 + $0x18] sm:$0xff]
        %v3876 = vld [vmem:[%s390 + $0x20] sm:$0xff]
        %v3877 = vld [vmem:[%s390 + $0x28] sm:$0xff]
        %v3878 = vld [vmem:[%s390 + $0x30] sm:$0xff]
        %v3879 = vld [vmem:[%s390 + $0x38] sm:$0xff]
        %v3880 = vld [vmem:[%s390 + $0x40] sm:$0xff]
        %v3881 = vld [vmem:[%s390 + $0x48] sm:$0xff]
        %v3882 = vld [vmem:[%s390 + $0x50] sm:$0xff]
        %v3883 = vld [vmem:[%s390 + $0x58] sm:$0xff]
        %v3884 = vld [vmem:[%s390 + $0x60] sm:$0xff]
        %v3885 = vld [vmem:[%s390 + $0x68] sm:$0xff]
        %v3886 = vld [vmem:[%s390 + $0x70] sm:$0xff]
        %v3887 = vld [vmem:[%s390 + $0x78] sm:$0xff]
        %v3888 = vld [vmem:[%s390 + $0x80] sm:$0xff]
        %v3889 = vld [vmem:[%s390 + $0x88] sm:$0xff]
        %v3890 = vld [vmem:[%s390 + $0x90] sm:$0xff]
        %v3891 = vld [vmem:[%s390 + $0x98] sm:$0xff]
        %v3892 = vld [vmem:[%s390 + $0xa0] sm:$0xff]
        %v3893 = vld [vmem:[%s390 + $0xa8] sm:$0xff]
        %v3894 = vld [vmem:[%s390 + $0xb0] sm:$0xff]
        %v3895 = vld [vmem:[%s390 + $0xb8] sm:$0xff]
        %v3896 = vld [vmem:[%s390 + $0xc0] sm:$0xff]
        %v3897 = vld [vmem:[%s390 + $0xc8] sm:$0xff]
        %v3898 = vld [vmem:[%s390 + $0xd0] sm:$0xff]
        %v3899 = vld [vmem:[%s390 + $0xd8] sm:$0xff]
        %v3900 = vld [vmem:[%s390 + $0xe0] sm:$0xff]
        %v3901 = vld [vmem:[%s390 + $0xe8] sm:$0xff]
        %v3902 = vld [vmem:[%s390 + $0xf0] sm:$0xff]
        %v3903 = vld [vmem:[%s390 + $0xf8] sm:$0xff]
        %3936 = vrot.lane.b32.xlu0 %v2309, 64
        %v3937 = vpop.permute.xlu0 %3936
        %3938 = vrot.lane.b32.xlu0 %v2311, 64
        %v3939 = vpop.permute.xlu0 %3938
        %3940 = vrot.lane.b32.xlu0 %v2314, 64
        %v3941 = vpop.permute.xlu0 %3940
        %3942 = vrot.lane.b32.xlu0 %v2316, 64
        %v3943 = vpop.permute.xlu0 %3942
        %3944 = vrot.lane.b32.xlu0 %v2319, 64
        %v3945 = vpop.permute.xlu0 %3944
        %3946 = vrot.lane.b32.xlu0 %v2321, 64
        %v3947 = vpop.permute.xlu0 %3946
        %3948 = vrot.lane.b32.xlu0 %v2324, 64
        %v3949 = vpop.permute.xlu0 %3948
        %3950 = vrot.lane.b32.xlu0 %v2326, 64
        %v3951 = vpop.permute.xlu0 %3950
        %3952 = vrot.lane.b32.xlu0 %v2329, 64
        %v3953 = vpop.permute.xlu0 %3952
        %3954 = vrot.lane.b32.xlu0 %v2331, 64
        %v3955 = vpop.permute.xlu0 %3954
        %3956 = vrot.lane.b32.xlu0 %v2334, 64
        %v3957 = vpop.permute.xlu0 %3956
        %3958 = vrot.lane.b32.xlu0 %v2336, 64
        %v3959 = vpop.permute.xlu0 %3958
        %3960 = vrot.lane.b32.xlu0 %v2339, 64
        %v3961 = vpop.permute.xlu0 %3960
        %3962 = vrot.lane.b32.xlu0 %v2341, 64
        %v3963 = vpop.permute.xlu0 %3962
        %3964 = vrot.lane.b32.xlu0 %v2344, 64
        %v3965 = vpop.permute.xlu0 %3964
        %3966 = vrot.lane.b32.xlu0 %v2346, 64
        %v3967 = vpop.permute.xlu0 %3966
        %3968 = vrot.lane.b32.xlu0 %v2349, 64
        %v3969 = vpop.permute.xlu0 %3968
        %3970 = vrot.lane.b32.xlu0 %v2351, 64
        %v3971 = vpop.permute.xlu0 %3970
        %3972 = vrot.lane.b32.xlu0 %v2354, 64
        %v3973 = vpop.permute.xlu0 %3972
        %3974 = vrot.lane.b32.xlu0 %v2356, 64
        %v3975 = vpop.permute.xlu0 %3974
        %3976 = vrot.lane.b32.xlu0 %v2359, 64
        %v3977 = vpop.permute.xlu0 %3976
        %3978 = vrot.lane.b32.xlu0 %v2361, 64
        %v3979 = vpop.permute.xlu0 %3978
        %3980 = vrot.lane.b32.xlu0 %v2364, 64
        %v3981 = vpop.permute.xlu0 %3980
        %3982 = vrot.lane.b32.xlu0 %v2366, 64
        %v3983 = vpop.permute.xlu0 %3982
        %3984 = vrot.lane.b32.xlu0 %v2369, 64
        %v3985 = vpop.permute.xlu0 %3984
        %3986 = vrot.lane.b32.xlu0 %v2371, 64
        %v3987 = vpop.permute.xlu0 %3986
        %3988 = vrot.lane.b32.xlu0 %v2374, 64
        %v3989 = vpop.permute.xlu0 %3988
        %3990 = vrot.lane.b32.xlu0 %v2376, 64
        %v3991 = vpop.permute.xlu0 %3990
        %3992 = vrot.lane.b32.xlu0 %v2379, 64
        %v3993 = vpop.permute.xlu0 %3992
        %3994 = vrot.lane.b32.xlu0 %v2381, 64
        %v3995 = vpop.permute.xlu0 %3994
        %3996 = vrot.lane.b32.xlu0 %v2384, 64
        %v3997 = vpop.permute.xlu0 %3996
        %3998 = vrot.lane.b32.xlu0 %v2386, 64
        %v3999 = vpop.permute.xlu0 %3998
        %v4032 = vmul.f32 %v2309, %v3840
        %v4033 = vmul.f32 %v2311, %v3841
        %v4034 = vmul.f32 %v2314, %v3842
        %v4035 = vmul.f32 %v2316, %v3843
        %v4036 = vmul.f32 %v2319, %v3844
        %v4037 = vmul.f32 %v2321, %v3845
        %v4038 = vmul.f32 %v2324, %v3846
        %v4039 = vmul.f32 %v2326, %v3847
        %v4040 = vmul.f32 %v2329, %v3848
        %v4041 = vmul.f32 %v2331, %v3849
        %v4042 = vmul.f32 %v2334, %v3850
        %v4043 = vmul.f32 %v2336, %v3851
        %v4044 = vmul.f32 %v2339, %v3852
        %v4045 = vmul.f32 %v2341, %v3853
        %v4046 = vmul.f32 %v2344, %v3854
        %v4047 = vmul.f32 %v2346, %v3855
        %v4048 = vmul.f32 %v2349, %v3856
        %v4049 = vmul.f32 %v2351, %v3857
        %v4050 = vmul.f32 %v2354, %v3858
        %v4051 = vmul.f32 %v2356, %v3859
        %v4052 = vmul.f32 %v2359, %v3860
        %v4053 = vmul.f32 %v2361, %v3861
        %v4054 = vmul.f32 %v2364, %v3862
        %v4055 = vmul.f32 %v2366, %v3863
        %v4056 = vmul.f32 %v2369, %v3864
        %v4057 = vmul.f32 %v2371, %v3865
        %v4058 = vmul.f32 %v2374, %v3866
        %v4059 = vmul.f32 %v2376, %v3867
        %v4060 = vmul.f32 %v2379, %v3868
        %v4061 = vmul.f32 %v2381, %v3869
        %v4062 = vmul.f32 %v2384, %v3870
        %v4063 = vmul.f32 %v2386, %v3871
        %v4064 = vmul.f32 %v3937, %v3872
        %v4065 = vmul.f32 %v3939, %v3873
        %v4066 = vmul.f32 %v3941, %v3874
        %v4067 = vmul.f32 %v3943, %v3875
        %v4068 = vmul.f32 %v3945, %v3876
        %v4069 = vmul.f32 %v3947, %v3877
        %v4070 = vmul.f32 %v3949, %v3878
        %v4071 = vmul.f32 %v3951, %v3879
        %v4072 = vmul.f32 %v3953, %v3880
        %v4073 = vmul.f32 %v3955, %v3881
        %v4074 = vmul.f32 %v3957, %v3882
        %v4075 = vmul.f32 %v3959, %v3883
        %v4076 = vmul.f32 %v3961, %v3884
        %v4077 = vmul.f32 %v3963, %v3885
        %v4078 = vmul.f32 %v3965, %v3886
        %v4079 = vmul.f32 %v3967, %v3887
        %v4080 = vmul.f32 %v3969, %v3888
        %v4081 = vmul.f32 %v3971, %v3889
        %v4082 = vmul.f32 %v3973, %v3890
        %v4083 = vmul.f32 %v3975, %v3891
        %v4084 = vmul.f32 %v3977, %v3892
        %v4085 = vmul.f32 %v3979, %v3893
        %v4086 = vmul.f32 %v3981, %v3894
        %v4087 = vmul.f32 %v3983, %v3895
        %v4088 = vmul.f32 %v3985, %v3896
        %v4089 = vmul.f32 %v3987, %v3897
        %v4090 = vmul.f32 %v3989, %v3898
        %v4091 = vmul.f32 %v3991, %v3899
        %v4092 = vmul.f32 %v3993, %v3900
        %v4093 = vmul.f32 %v3995, %v3901
        %v4094 = vmul.f32 %v3997, %v3902
        %v4095 = vmul.f32 %v3999, %v3903
        %v4096 = vadd.f32 %v4032, %v4064
        %v4097 = vadd.f32 %v4033, %v4065
        %v4098 = vadd.f32 %v4034, %v4066
        %v4099 = vadd.f32 %v4035, %v4067
        %v4100 = vadd.f32 %v4036, %v4068
        %v4101 = vadd.f32 %v4037, %v4069
        %v4102 = vadd.f32 %v4038, %v4070
        %v4103 = vadd.f32 %v4039, %v4071
        %v4104 = vadd.f32 %v4040, %v4072
        %v4105 = vadd.f32 %v4041, %v4073
        %v4106 = vadd.f32 %v4042, %v4074
        %v4107 = vadd.f32 %v4043, %v4075
        %v4108 = vadd.f32 %v4044, %v4076
        %v4109 = vadd.f32 %v4045, %v4077
        %v4110 = vadd.f32 %v4046, %v4078
        %v4111 = vadd.f32 %v4047, %v4079
        %v4112 = vadd.f32 %v4048, %v4080
        %v4113 = vadd.f32 %v4049, %v4081
        %v4114 = vadd.f32 %v4050, %v4082
        %v4115 = vadd.f32 %v4051, %v4083
        %v4116 = vadd.f32 %v4052, %v4084
        %v4117 = vadd.f32 %v4053, %v4085
        %v4118 = vadd.f32 %v4054, %v4086
        %v4119 = vadd.f32 %v4055, %v4087
        %v4120 = vadd.f32 %v4056, %v4088
        %v4121 = vadd.f32 %v4057, %v4089
        %v4122 = vadd.f32 %v4058, %v4090
        %v4123 = vadd.f32 %v4059, %v4091
        %v4124 = vadd.f32 %v4060, %v4092
        %v4125 = vadd.f32 %v4061, %v4093
        %v4126 = vadd.f32 %v4062, %v4094
        %v4127 = vadd.f32 %v4063, %v4095
        %v4128 = vpack.c.bf16 %v4096, %v4096
        %v4129 = vpack.c.bf16 %v4097, %v4097
        %v4130 = vpack.c.bf16 %v4098, %v4098
        %v4131 = vpack.c.bf16 %v4099, %v4099
        %v4132 = vpack.c.bf16 %v4100, %v4100
        %v4133 = vpack.c.bf16 %v4101, %v4101
        %v4134 = vpack.c.bf16 %v4102, %v4102
        %v4135 = vpack.c.bf16 %v4103, %v4103
        %v4136 = vpack.c.bf16 %v4104, %v4104
        %v4137 = vpack.c.bf16 %v4105, %v4105
        %v4138 = vpack.c.bf16 %v4106, %v4106
        %v4139 = vpack.c.bf16 %v4107, %v4107
        %v4140 = vpack.c.bf16 %v4108, %v4108
        %v4141 = vpack.c.bf16 %v4109, %v4109
        %v4142 = vpack.c.bf16 %v4110, %v4110
        %v4143 = vpack.c.bf16 %v4111, %v4111
        %v4144 = vpack.c.bf16 %v4112, %v4112
        %v4145 = vpack.c.bf16 %v4113, %v4113
        %v4146 = vpack.c.bf16 %v4114, %v4114
        %v4147 = vpack.c.bf16 %v4115, %v4115
        %v4148 = vpack.c.bf16 %v4116, %v4116
        %v4149 = vpack.c.bf16 %v4117, %v4117
        %v4150 = vpack.c.bf16 %v4118, %v4118
        %v4151 = vpack.c.bf16 %v4119, %v4119
        %v4152 = vpack.c.bf16 %v4120, %v4120
        %v4153 = vpack.c.bf16 %v4121, %v4121
        %v4154 = vpack.c.bf16 %v4122, %v4122
        %v4155 = vpack.c.bf16 %v4123, %v4123
        %v4156 = vpack.c.bf16 %v4124, %v4124
        %v4157 = vpack.c.bf16 %v4125, %v4125
        %v4158 = vpack.c.bf16 %v4126, %v4126
        %v4159 = vpack.c.bf16 %v4127, %v4127
        %4160 = vst [vmem:[%s429] sm:$0xf] %v4128
        %4161 = vst [vmem:[%s429 + $0x4] sm:$0xf] %v4129
        %4162 = vst [vmem:[%s429 + $0x8] sm:$0xf] %v4130
        %4163 = vst [vmem:[%s429 + $0xc] sm:$0xf] %v4131
        %4164 = vst [vmem:[%s429 + $0x10] sm:$0xf] %v4132
        %4165 = vst [vmem:[%s429 + $0x14] sm:$0xf] %v4133
        %4166 = vst [vmem:[%s429 + $0x18] sm:$0xf] %v4134
        %4167 = vst [vmem:[%s429 + $0x1c] sm:$0xf] %v4135
        %4168 = vst [vmem:[%s429 + $0x20] sm:$0xf] %v4136
        %4169 = vst [vmem:[%s429 + $0x24] sm:$0xf] %v4137
        %4170 = vst [vmem:[%s429 + $0x28] sm:$0xf] %v4138
        %4171 = vst [vmem:[%s429 + $0x2c] sm:$0xf] %v4139
        %4172 = vst [vmem:[%s429 + $0x30] sm:$0xf] %v4140
        %4173 = vst [vmem:[%s429 + $0x34] sm:$0xf] %v4141
        %4174 = vst [vmem:[%s429 + $0x38] sm:$0xf] %v4142
        %4175 = vst [vmem:[%s429 + $0x3c] sm:$0xf] %v4143
        %4176 = vst [vmem:[%s429 + $0x40] sm:$0xf] %v4144
        %4177 = vst [vmem:[%s429 + $0x44] sm:$0xf] %v4145
        %4178 = vst [vmem:[%s429 + $0x48] sm:$0xf] %v4146
        %4179 = vst [vmem:[%s429 + $0x4c] sm:$0xf] %v4147
        %4180 = vst [vmem:[%s429 + $0x50] sm:$0xf] %v4148
        %4181 = vst [vmem:[%s429 + $0x54] sm:$0xf] %v4149
        %4182 = vst [vmem:[%s429 + $0x58] sm:$0xf] %v4150
        %4183 = vst [vmem:[%s429 + $0x5c] sm:$0xf] %v4151
        %4184 = vst [vmem:[%s429 + $0x60] sm:$0xf] %v4152
        %4185 = vst [vmem:[%s429 + $0x64] sm:$0xf] %v4153
        %4186 = vst [vmem:[%s429 + $0x68] sm:$0xf] %v4154
        %4187 = vst [vmem:[%s429 + $0x6c] sm:$0xf] %v4155
        %4188 = vst [vmem:[%s429 + $0x70] sm:$0xf] %v4156
        %4189 = vst [vmem:[%s429 + $0x74] sm:$0xf] %v4157
        %4190 = vst [vmem:[%s429 + $0x78] sm:$0xf] %v4158
        %4191 = vst [vmem:[%s429 + $0x7c] sm:$0xf] %v4159
        %v4192 = vpack.c.bf16 %v3405, %v3405
        %v4193 = vpack.c.bf16 %v3407, %v3407
        %v4194 = vpack.c.bf16 %v3410, %v3410
        %v4195 = vpack.c.bf16 %v3412, %v3412
        %v4196 = vpack.c.bf16 %v3415, %v3415
        %v4197 = vpack.c.bf16 %v3417, %v3417
        %v4198 = vpack.c.bf16 %v3420, %v3420
        %v4199 = vpack.c.bf16 %v3422, %v3422
        %v4200 = vpack.c.bf16 %v3425, %v3425
        %v4201 = vpack.c.bf16 %v3427, %v3427
        %v4202 = vpack.c.bf16 %v3430, %v3430
        %v4203 = vpack.c.bf16 %v3432, %v3432
        %v4204 = vpack.c.bf16 %v3435, %v3435
        %v4205 = vpack.c.bf16 %v3437, %v3437
        %v4206 = vpack.c.bf16 %v3440, %v3440
        %v4207 = vpack.c.bf16 %v3442, %v3442
        %v4208 = vpack.c.bf16 %v3445, %v3445
        %v4209 = vpack.c.bf16 %v3447, %v3447
        %v4210 = vpack.c.bf16 %v3450, %v3450
        %v4211 = vpack.c.bf16 %v3452, %v3452
        %v4212 = vpack.c.bf16 %v3455, %v3455
        %v4213 = vpack.c.bf16 %v3457, %v3457
        %v4214 = vpack.c.bf16 %v3460, %v3460
        %v4215 = vpack.c.bf16 %v3462, %v3462
        %v4216 = vpack.c.bf16 %v3465, %v3465
        %v4217 = vpack.c.bf16 %v3467, %v3467
        %v4218 = vpack.c.bf16 %v3470, %v3470
        %v4219 = vpack.c.bf16 %v3472, %v3472
        %v4220 = vpack.c.bf16 %v3475, %v3475
        %v4221 = vpack.c.bf16 %v3477, %v3477
        %v4222 = vpack.c.bf16 %v3480, %v3480
        %v4223 = vpack.c.bf16 %v3482, %v3482
        %4224 = vst [vmem:[%s436] sm:$0xf] %v4192
        %4225 = vst [vmem:[%s436 + $0x4] sm:$0xf] %v4193
        %4226 = vst [vmem:[%s436 + $0x8] sm:$0xf] %v4194
        %4227 = vst [vmem:[%s436 + $0xc] sm:$0xf] %v4195
        %4228 = vst [vmem:[%s436 + $0x10] sm:$0xf] %v4196
        %4229 = vst [vmem:[%s436 + $0x14] sm:$0xf] %v4197
        %4230 = vst [vmem:[%s436 + $0x18] sm:$0xf] %v4198
        %4231 = vst [vmem:[%s436 + $0x1c] sm:$0xf] %v4199
        %4232 = vst [vmem:[%s436 + $0x20] sm:$0xf] %v4200
        %4233 = vst [vmem:[%s436 + $0x24] sm:$0xf] %v4201
        %4234 = vst [vmem:[%s436 + $0x28] sm:$0xf] %v4202
        %4235 = vst [vmem:[%s436 + $0x2c] sm:$0xf] %v4203
        %4236 = vst [vmem:[%s436 + $0x30] sm:$0xf] %v4204
        %4237 = vst [vmem:[%s436 + $0x34] sm:$0xf] %v4205
        %4238 = vst [vmem:[%s436 + $0x38] sm:$0xf] %v4206
        %4239 = vst [vmem:[%s436 + $0x3c] sm:$0xf] %v4207
        %4240 = vst [vmem:[%s436 + $0x40] sm:$0xf] %v4208
        %4241 = vst [vmem:[%s436 + $0x44] sm:$0xf] %v4209
        %4242 = vst [vmem:[%s436 + $0x48] sm:$0xf] %v4210
        %4243 = vst [vmem:[%s436 + $0x4c] sm:$0xf] %v4211
        %4244 = vst [vmem:[%s436 + $0x50] sm:$0xf] %v4212
        %4245 = vst [vmem:[%s436 + $0x54] sm:$0xf] %v4213
        %4246 = vst [vmem:[%s436 + $0x58] sm:$0xf] %v4214
        %4247 = vst [vmem:[%s436 + $0x5c] sm:$0xf] %v4215
        %4248 = vst [vmem:[%s436 + $0x60] sm:$0xf] %v4216
        %4249 = vst [vmem:[%s436 + $0x64] sm:$0xf] %v4217
        %4250 = vst [vmem:[%s436 + $0x68] sm:$0xf] %v4218
        %4251 = vst [vmem:[%s436 + $0x6c] sm:$0xf] %v4219
        %4252 = vst [vmem:[%s436 + $0x70] sm:$0xf] %v4220
        %4253 = vst [vmem:[%s436 + $0x74] sm:$0xf] %v4221
        %4254 = vst [vmem:[%s436 + $0x78] sm:$0xf] %v4222
        %4255 = vst [vmem:[%s436 + $0x7c] sm:$0xf] %v4223
        %4288 = vrot.lane.b32.xlu0 %v2665, 64
        %v4289 = vpop.permute.xlu0 %4288
        %4290 = vrot.lane.b32.xlu0 %v2667, 64
        %v4291 = vpop.permute.xlu0 %4290
        %4292 = vrot.lane.b32.xlu0 %v2670, 64
        %v4293 = vpop.permute.xlu0 %4292
        %4294 = vrot.lane.b32.xlu0 %v2672, 64
        %v4295 = vpop.permute.xlu0 %4294
        %4296 = vrot.lane.b32.xlu0 %v2675, 64
        %v4297 = vpop.permute.xlu0 %4296
        %4298 = vrot.lane.b32.xlu0 %v2677, 64
        %v4299 = vpop.permute.xlu0 %4298
        %4300 = vrot.lane.b32.xlu0 %v2680, 64
        %v4301 = vpop.permute.xlu0 %4300
        %4302 = vrot.lane.b32.xlu0 %v2682, 64
        %v4303 = vpop.permute.xlu0 %4302
        %4304 = vrot.lane.b32.xlu0 %v2685, 64
        %v4305 = vpop.permute.xlu0 %4304
        %4306 = vrot.lane.b32.xlu0 %v2687, 64
        %v4307 = vpop.permute.xlu0 %4306
        %4308 = vrot.lane.b32.xlu0 %v2690, 64
        %v4309 = vpop.permute.xlu0 %4308
        %4310 = vrot.lane.b32.xlu0 %v2692, 64
        %v4311 = vpop.permute.xlu0 %4310
        %4312 = vrot.lane.b32.xlu0 %v2695, 64
        %v4313 = vpop.permute.xlu0 %4312
        %4314 = vrot.lane.b32.xlu0 %v2697, 64
        %v4315 = vpop.permute.xlu0 %4314
        %4316 = vrot.lane.b32.xlu0 %v2700, 64
        %v4317 = vpop.permute.xlu0 %4316
        %4318 = vrot.lane.b32.xlu0 %v2702, 64
        %v4319 = vpop.permute.xlu0 %4318
        %4320 = vrot.lane.b32.xlu0 %v2705, 64
        %v4321 = vpop.permute.xlu0 %4320
        %4322 = vrot.lane.b32.xlu0 %v2707, 64
        %v4323 = vpop.permute.xlu0 %4322
        %4324 = vrot.lane.b32.xlu0 %v2710, 64
        %v4325 = vpop.permute.xlu0 %4324
        %4326 = vrot.lane.b32.xlu0 %v2712, 64
        %v4327 = vpop.permute.xlu0 %4326
        %4328 = vrot.lane.b32.xlu0 %v2715, 64
        %v4329 = vpop.permute.xlu0 %4328
        %4330 = vrot.lane.b32.xlu0 %v2717, 64
        %v4331 = vpop.permute.xlu0 %4330
        %4332 = vrot.lane.b32.xlu0 %v2720, 64
        %v4333 = vpop.permute.xlu0 %4332
        %4334 = vrot.lane.b32.xlu0 %v2722, 64
        %v4335 = vpop.permute.xlu0 %4334
        %4336 = vrot.lane.b32.xlu0 %v2725, 64
        %v4337 = vpop.permute.xlu0 %4336
        %4338 = vrot.lane.b32.xlu0 %v2727, 64
        %v4339 = vpop.permute.xlu0 %4338
        %4340 = vrot.lane.b32.xlu0 %v2730, 64
        %v4341 = vpop.permute.xlu0 %4340
        %4342 = vrot.lane.b32.xlu0 %v2732, 64
        %v4343 = vpop.permute.xlu0 %4342
        %4344 = vrot.lane.b32.xlu0 %v2735, 64
        %v4345 = vpop.permute.xlu0 %4344
        %4346 = vrot.lane.b32.xlu0 %v2737, 64
        %v4347 = vpop.permute.xlu0 %4346
        %4348 = vrot.lane.b32.xlu0 %v2740, 64
        %v4349 = vpop.permute.xlu0 %4348
        %4350 = vrot.lane.b32.xlu0 %v2742, 64
        %v4351 = vpop.permute.xlu0 %4350
        %v4384 = vmul.f32 %v2665, %v3840
        %v4385 = vmul.f32 %v2667, %v3841
        %v4386 = vmul.f32 %v2670, %v3842
        %v4387 = vmul.f32 %v2672, %v3843
        %v4388 = vmul.f32 %v2675, %v3844
        %v4389 = vmul.f32 %v2677, %v3845
        %v4390 = vmul.f32 %v2680, %v3846
        %v4391 = vmul.f32 %v2682, %v3847
        %v4392 = vmul.f32 %v2685, %v3848
        %v4393 = vmul.f32 %v2687, %v3849
        %v4394 = vmul.f32 %v2690, %v3850
        %v4395 = vmul.f32 %v2692, %v3851
        %v4396 = vmul.f32 %v2695, %v3852
        %v4397 = vmul.f32 %v2697, %v3853
        %v4398 = vmul.f32 %v2700, %v3854
        %v4399 = vmul.f32 %v2702, %v3855
        %v4400 = vmul.f32 %v2705, %v3856
        %v4401 = vmul.f32 %v2707, %v3857
        %v4402 = vmul.f32 %v2710, %v3858
        %v4403 = vmul.f32 %v2712, %v3859
        %v4404 = vmul.f32 %v2715, %v3860
        %v4405 = vmul.f32 %v2717, %v3861
        %v4406 = vmul.f32 %v2720, %v3862
        %v4407 = vmul.f32 %v2722, %v3863
        %v4408 = vmul.f32 %v2725, %v3864
        %v4409 = vmul.f32 %v2727, %v3865
        %v4410 = vmul.f32 %v2730, %v3866
        %v4411 = vmul.f32 %v2732, %v3867
        %v4412 = vmul.f32 %v2735, %v3868
        %v4413 = vmul.f32 %v2737, %v3869
        %v4414 = vmul.f32 %v2740, %v3870
        %v4415 = vmul.f32 %v2742, %v3871
        %v4416 = vmul.f32 %v4289, %v3872
        %v4417 = vmul.f32 %v4291, %v3873
        %v4418 = vmul.f32 %v4293, %v3874
        %v4419 = vmul.f32 %v4295, %v3875
        %v4420 = vmul.f32 %v4297, %v3876
        %v4421 = vmul.f32 %v4299, %v3877
        %v4422 = vmul.f32 %v4301, %v3878
        %v4423 = vmul.f32 %v4303, %v3879
        %v4424 = vmul.f32 %v4305, %v3880
        %v4425 = vmul.f32 %v4307, %v3881
        %v4426 = vmul.f32 %v4309, %v3882
        %v4427 = vmul.f32 %v4311, %v3883
        %v4428 = vmul.f32 %v4313, %v3884
        %v4429 = vmul.f32 %v4315, %v3885
        %v4430 = vmul.f32 %v4317, %v3886
        %v4431 = vmul.f32 %v4319, %v3887
        %v4432 = vmul.f32 %v4321, %v3888
        %v4433 = vmul.f32 %v4323, %v3889
        %v4434 = vmul.f32 %v4325, %v3890
        %v4435 = vmul.f32 %v4327, %v3891
        %v4436 = vmul.f32 %v4329, %v3892
        %v4437 = vmul.f32 %v4331, %v3893
        %v4438 = vmul.f32 %v4333, %v3894
        %v4439 = vmul.f32 %v4335, %v3895
        %v4440 = vmul.f32 %v4337, %v3896
        %v4441 = vmul.f32 %v4339, %v3897
        %v4442 = vmul.f32 %v4341, %v3898
        %v4443 = vmul.f32 %v4343, %v3899
        %v4444 = vmul.f32 %v4345, %v3900
        %v4445 = vmul.f32 %v4347, %v3901
        %v4446 = vmul.f32 %v4349, %v3902
        %v4447 = vmul.f32 %v4351, %v3903
        %v4448 = vadd.f32 %v4384, %v4416
        %v4449 = vadd.f32 %v4385, %v4417
        %v4450 = vadd.f32 %v4386, %v4418
        %v4451 = vadd.f32 %v4387, %v4419
        %v4452 = vadd.f32 %v4388, %v4420
        %v4453 = vadd.f32 %v4389, %v4421
        %v4454 = vadd.f32 %v4390, %v4422
        %v4455 = vadd.f32 %v4391, %v4423
        %v4456 = vadd.f32 %v4392, %v4424
        %v4457 = vadd.f32 %v4393, %v4425
        %v4458 = vadd.f32 %v4394, %v4426
        %v4459 = vadd.f32 %v4395, %v4427
        %v4460 = vadd.f32 %v4396, %v4428
        %v4461 = vadd.f32 %v4397, %v4429
        %v4462 = vadd.f32 %v4398, %v4430
        %v4463 = vadd.f32 %v4399, %v4431
        %v4464 = vadd.f32 %v4400, %v4432
        %v4465 = vadd.f32 %v4401, %v4433
        %v4466 = vadd.f32 %v4402, %v4434
        %v4467 = vadd.f32 %v4403, %v4435
        %v4468 = vadd.f32 %v4404, %v4436
        %v4469 = vadd.f32 %v4405, %v4437
        %v4470 = vadd.f32 %v4406, %v4438
        %v4471 = vadd.f32 %v4407, %v4439
        %v4472 = vadd.f32 %v4408, %v4440
        %v4473 = vadd.f32 %v4409, %v4441
        %v4474 = vadd.f32 %v4410, %v4442
        %v4475 = vadd.f32 %v4411, %v4443
        %v4476 = vadd.f32 %v4412, %v4444
        %v4477 = vadd.f32 %v4413, %v4445
        %v4478 = vadd.f32 %v4414, %v4446
        %v4479 = vadd.f32 %v4415, %v4447
        %v4480 = vpack.c.bf16 %v4448, %v4448
        %v4481 = vpack.c.bf16 %v4449, %v4449
        %v4482 = vpack.c.bf16 %v4450, %v4450
        %v4483 = vpack.c.bf16 %v4451, %v4451
        %v4484 = vpack.c.bf16 %v4452, %v4452
        %v4485 = vpack.c.bf16 %v4453, %v4453
        %v4486 = vpack.c.bf16 %v4454, %v4454
        %v4487 = vpack.c.bf16 %v4455, %v4455
        %v4488 = vpack.c.bf16 %v4456, %v4456
        %v4489 = vpack.c.bf16 %v4457, %v4457
        %v4490 = vpack.c.bf16 %v4458, %v4458
        %v4491 = vpack.c.bf16 %v4459, %v4459
        %v4492 = vpack.c.bf16 %v4460, %v4460
        %v4493 = vpack.c.bf16 %v4461, %v4461
        %v4494 = vpack.c.bf16 %v4462, %v4462
        %v4495 = vpack.c.bf16 %v4463, %v4463
        %v4496 = vpack.c.bf16 %v4464, %v4464
        %v4497 = vpack.c.bf16 %v4465, %v4465
        %v4498 = vpack.c.bf16 %v4466, %v4466
        %v4499 = vpack.c.bf16 %v4467, %v4467
        %v4500 = vpack.c.bf16 %v4468, %v4468
        %v4501 = vpack.c.bf16 %v4469, %v4469
        %v4502 = vpack.c.bf16 %v4470, %v4470
        %v4503 = vpack.c.bf16 %v4471, %v4471
        %v4504 = vpack.c.bf16 %v4472, %v4472
        %v4505 = vpack.c.bf16 %v4473, %v4473
        %v4506 = vpack.c.bf16 %v4474, %v4474
        %v4507 = vpack.c.bf16 %v4475, %v4475
        %v4508 = vpack.c.bf16 %v4476, %v4476
        %v4509 = vpack.c.bf16 %v4477, %v4477
        %v4510 = vpack.c.bf16 %v4478, %v4478
        %v4511 = vpack.c.bf16 %v4479, %v4479
        %s4512 = scalar_lea.vmem %s429, 128 [#allocation12]
        %4513 = vst [vmem:[%s4512] sm:$0xf] %v4480
        %4514 = vst [vmem:[%s4512 + $0x4] sm:$0xf] %v4481
        %4515 = vst [vmem:[%s4512 + $0x8] sm:$0xf] %v4482
        %4516 = vst [vmem:[%s4512 + $0xc] sm:$0xf] %v4483
        %4517 = vst [vmem:[%s4512 + $0x10] sm:$0xf] %v4484
        %4518 = vst [vmem:[%s4512 + $0x14] sm:$0xf] %v4485
        %4519 = vst [vmem:[%s4512 + $0x18] sm:$0xf] %v4486
        %4520 = vst [vmem:[%s4512 + $0x1c] sm:$0xf] %v4487
        %4521 = vst [vmem:[%s4512 + $0x20] sm:$0xf] %v4488
        %4522 = vst [vmem:[%s4512 + $0x24] sm:$0xf] %v4489
        %4523 = vst [vmem:[%s4512 + $0x28] sm:$0xf] %v4490
        %4524 = vst [vmem:[%s4512 + $0x2c] sm:$0xf] %v4491
        %4525 = vst [vmem:[%s4512 + $0x30] sm:$0xf] %v4492
        %4526 = vst [vmem:[%s4512 + $0x34] sm:$0xf] %v4493
        %4527 = vst [vmem:[%s4512 + $0x38] sm:$0xf] %v4494
        %4528 = vst [vmem:[%s4512 + $0x3c] sm:$0xf] %v4495
        %4529 = vst [vmem:[%s4512 + $0x40] sm:$0xf] %v4496
        %4530 = vst [vmem:[%s4512 + $0x44] sm:$0xf] %v4497
        %4531 = vst [vmem:[%s4512 + $0x48] sm:$0xf] %v4498
        %4532 = vst [vmem:[%s4512 + $0x4c] sm:$0xf] %v4499
        %4533 = vst [vmem:[%s4512 + $0x50] sm:$0xf] %v4500
        %4534 = vst [vmem:[%s4512 + $0x54] sm:$0xf] %v4501
        %4535 = vst [vmem:[%s4512 + $0x58] sm:$0xf] %v4502
        %4536 = vst [vmem:[%s4512 + $0x5c] sm:$0xf] %v4503
        %4537 = vst [vmem:[%s4512 + $0x60] sm:$0xf] %v4504
        %4538 = vst [vmem:[%s4512 + $0x64] sm:$0xf] %v4505
        %4539 = vst [vmem:[%s4512 + $0x68] sm:$0xf] %v4506
        %4540 = vst [vmem:[%s4512 + $0x6c] sm:$0xf] %v4507
        %4541 = vst [vmem:[%s4512 + $0x70] sm:$0xf] %v4508
        %4542 = vst [vmem:[%s4512 + $0x74] sm:$0xf] %v4509
        %4543 = vst [vmem:[%s4512 + $0x78] sm:$0xf] %v4510
        %4544 = vst [vmem:[%s4512 + $0x7c] sm:$0xf] %v4511
        %v4545 = vpack.c.bf16 %v3761, %v3761
        %v4546 = vpack.c.bf16 %v3763, %v3763
        %v4547 = vpack.c.bf16 %v3766, %v3766
        %v4548 = vpack.c.bf16 %v3768, %v3768
        %v4549 = vpack.c.bf16 %v3771, %v3771
        %v4550 = vpack.c.bf16 %v3773, %v3773
        %v4551 = vpack.c.bf16 %v3776, %v3776
        %v4552 = vpack.c.bf16 %v3778, %v3778
        %v4553 = vpack.c.bf16 %v3781, %v3781
        %v4554 = vpack.c.bf16 %v3783, %v3783
        %v4555 = vpack.c.bf16 %v3786, %v3786
        %v4556 = vpack.c.bf16 %v3788, %v3788
        %v4557 = vpack.c.bf16 %v3791, %v3791
        %v4558 = vpack.c.bf16 %v3793, %v3793
        %v4559 = vpack.c.bf16 %v3796, %v3796
        %v4560 = vpack.c.bf16 %v3798, %v3798
        %v4561 = vpack.c.bf16 %v3801, %v3801
        %v4562 = vpack.c.bf16 %v3803, %v3803
        %v4563 = vpack.c.bf16 %v3806, %v3806
        %v4564 = vpack.c.bf16 %v3808, %v3808
        %v4565 = vpack.c.bf16 %v3811, %v3811
        %v4566 = vpack.c.bf16 %v3813, %v3813
        %v4567 = vpack.c.bf16 %v3816, %v3816
        %v4568 = vpack.c.bf16 %v3818, %v3818
        %v4569 = vpack.c.bf16 %v3821, %v3821
        %v4570 = vpack.c.bf16 %v3823, %v3823
        %v4571 = vpack.c.bf16 %v3826, %v3826
        %v4572 = vpack.c.bf16 %v3828, %v3828
        %v4573 = vpack.c.bf16 %v3831, %v3831
        %v4574 = vpack.c.bf16 %v3833, %v3833
        %v4575 = vpack.c.bf16 %v3836, %v3836
        %v4576 = vpack.c.bf16 %v3838, %v3838
        %s4577 = scalar_lea.vmem %s436, 128 [#allocation13]
        %4578 = vst [vmem:[%s4577] sm:$0xf] %v4545
        %4579 = vst [vmem:[%s4577 + $0x4] sm:$0xf] %v4546
        %4580 = vst [vmem:[%s4577 + $0x8] sm:$0xf] %v4547
        %4581 = vst [vmem:[%s4577 + $0xc] sm:$0xf] %v4548
        %4582 = vst [vmem:[%s4577 + $0x10] sm:$0xf] %v4549
        %4583 = vst [vmem:[%s4577 + $0x14] sm:$0xf] %v4550
        %4584 = vst [vmem:[%s4577 + $0x18] sm:$0xf] %v4551
        %4585 = vst [vmem:[%s4577 + $0x1c] sm:$0xf] %v4552
        %4586 = vst [vmem:[%s4577 + $0x20] sm:$0xf] %v4553
        %4587 = vst [vmem:[%s4577 + $0x24] sm:$0xf] %v4554
        %4588 = vst [vmem:[%s4577 + $0x28] sm:$0xf] %v4555
        %4589 = vst [vmem:[%s4577 + $0x2c] sm:$0xf] %v4556
        %4590 = vst [vmem:[%s4577 + $0x30] sm:$0xf] %v4557
        %4591 = vst [vmem:[%s4577 + $0x34] sm:$0xf] %v4558
        %4592 = vst [vmem:[%s4577 + $0x38] sm:$0xf] %v4559
        %4593 = vst [vmem:[%s4577 + $0x3c] sm:$0xf] %v4560
        %4594 = vst [vmem:[%s4577 + $0x40] sm:$0xf] %v4561
        %4595 = vst [vmem:[%s4577 + $0x44] sm:$0xf] %v4562
        %4596 = vst [vmem:[%s4577 + $0x48] sm:$0xf] %v4563
        %4597 = vst [vmem:[%s4577 + $0x4c] sm:$0xf] %v4564
        %4598 = vst [vmem:[%s4577 + $0x50] sm:$0xf] %v4565
        %4599 = vst [vmem:[%s4577 + $0x54] sm:$0xf] %v4566
        %4600 = vst [vmem:[%s4577 + $0x58] sm:$0xf] %v4567
        %4601 = vst [vmem:[%s4577 + $0x5c] sm:$0xf] %v4568
        %4602 = vst [vmem:[%s4577 + $0x60] sm:$0xf] %v4569
        %4603 = vst [vmem:[%s4577 + $0x64] sm:$0xf] %v4570
        %4604 = vst [vmem:[%s4577 + $0x68] sm:$0xf] %v4571
        %4605 = vst [vmem:[%s4577 + $0x6c] sm:$0xf] %v4572
        %4606 = vst [vmem:[%s4577 + $0x70] sm:$0xf] %v4573
        %4607 = vst [vmem:[%s4577 + $0x74] sm:$0xf] %v4574
        %4608 = vst [vmem:[%s4577 + $0x78] sm:$0xf] %v4575
        %4609 = vst [vmem:[%s4577 + $0x7c] sm:$0xf] %v4576
        %s4610 = sand.u32 %s179, 1
        %s4611 = scalar_lea.sflag [#allocation4], %s4610
        %s4612 = sand.u32 %s179, 1
        %s4613 = smul.addr %s4612, 256
        %s4614 = scalar_lea.vmem [#allocation12], %s4613
        %s4615 = sand.u32 %s205, 1
        %s4616 = scalar_lea.sflag [#allocation14], %s4615
        %s4617 = sand.u32 %s205, 1
        %s4618 = smul.addr %s4617, 256
        %s4619 = scalar_lea.vmem [#allocation13], %s4618
        // Predicated region
        $region69: #{tpu_custom_call.1} parent=43 // pred_check
          %p4620 = pneg %p189
        $region70: #{tpu_custom_call.1} parent=43 // pred_check_branch
          %4622 = sbr.rel (%p4620) target = $region72
        $region71: #{tpu_custom_call.1} parent=43 // pred_region
          #allocation16 [shape = 'u32[6]{0}', space=smem, size = 0x18, scoped, tag = 'DMA stride descriptor']
          %s4623 = smul.u32 32, %s30
          %4625 = vsyncadd %s4611, 0
          %s4626 = smul.addr %s4623, 4
          %s4627 = scalar_lea.hbm %s6, %s4626
          %s4629 = sshll.u32 1, 14
          %s4630 = sxor.u32 4294967295, %s4629
          %s4633 = sshll.u32 7, 18
          %s4634 = sxor.u32 4294967295, %s4633
          %s4635 = sand.u32 0, %s4634
          %s4637 = sor.u32 %s4635, 0
          %s4638 = sshll.u32 %s4614, 4
          %s4639 = int_to_ptr.vmem [resolvable:$true] %s4638
          %s4640 = sshll.u32 %s4627, 4
          %s4641 = int_to_ptr.hbm [resolvable:$true] %s4640
          %4647 = sst [smem:[#allocation16]] 2048
          %s4648 = scalar_lea.smem [#allocation16], 1
          %4649 = sst [smem:[%s4648]] 4096
          %s4650 = scalar_lea.smem [#allocation16], 2
          %4651 = sst [smem:[%s4650]] 32
          %s4652 = scalar_lea.smem [#allocation16], 3
          %4653 = sst [smem:[%s4652]] 64
          %s4654 = scalar_lea.smem [#allocation16], 4
          %4655 = sst [smem:[%s4654]] 64
          %s4656 = scalar_lea.smem [#allocation16], 5
          %4657 = sst [smem:[%s4656]] 4
          %4659 = dma.general %s4639, 4096, %s4641, %s4611, [#allocation15], [#allocation16], %s4637, 0
        $region72: #{tpu_custom_call.1} parent=43 // pred_fallthru
          _
        // Predicated region
        $region73: #{tpu_custom_call.1} parent=43 // pred_check
          %p4660 = pneg %p215
        $region74: #{tpu_custom_call.1} parent=43 // pred_check_branch
          %4662 = sbr.rel (%p4660) target = $region76
        $region75: #{tpu_custom_call.1} parent=43 // pred_region
          #allocation18 [shape = 'u32[6]{0}', space=smem, size = 0x18, scoped, tag = 'DMA stride descriptor']
          %s4663 = smul.u32 32, %s30
          %4665 = vsyncadd %s4616, 0
          %s4666 = smul.addr %s4663, 4
          %s4667 = scalar_lea.hbm %s7, %s4666
          %s4669 = sshll.u32 1, 14
          %s4670 = sxor.u32 4294967295, %s4669
          %s4673 = sshll.u32 7, 18
          %s4674 = sxor.u32 4294967295, %s4673
          %s4675 = sand.u32 0, %s4674
          %s4677 = sor.u32 %s4675, 0
          %s4678 = sshll.u32 %s4619, 4
          %s4679 = int_to_ptr.vmem [resolvable:$true] %s4678
          %s4680 = sshll.u32 %s4667, 4
          %s4681 = int_to_ptr.hbm [resolvable:$true] %s4680
          %4687 = sst [smem:[#allocation18]] 2048
          %s4688 = scalar_lea.smem [#allocation18], 1
          %4689 = sst [smem:[%s4688]] 4096
          %s4690 = scalar_lea.smem [#allocation18], 2
          %4691 = sst [smem:[%s4690]] 32
          %s4692 = scalar_lea.smem [#allocation18], 3
          %4693 = sst [smem:[%s4692]] 64
          %s4694 = scalar_lea.smem [#allocation18], 4
          %4695 = sst [smem:[%s4694]] 64
          %s4696 = scalar_lea.smem [#allocation18], 5
          %4697 = sst [smem:[%s4696]] 4
          %4699 = dma.general %s4679, 4096, %s4681, %s4616, [#allocation17], [#allocation18], %s4677, 0
        $region76: #{tpu_custom_call.1} parent=43 // pred_fallthru
          _
      $region44: #{tpu_custom_call.1} parent=5 // pred_fallthru
        _
      %p4700 = scmp.le.s32.totalorder 2, %s25
      // Predicated region
      $region77: #{tpu_custom_call.1} parent=5 // pred_check
        %p4701 = pneg %p4700
      $region78: #{tpu_custom_call.1} parent=5 // pred_check_branch
        %4703 = sbr.rel (%p4701) target = $region80
      $region79: #{tpu_custom_call.1} parent=5 // pred_region
        %s4704 = ssub.s32 %s25, 2
        // Predicated region
        $region81: #{tpu_custom_call.1} parent=79 // pred_check
          %p4705 = pneg %p195
        $region82: #{tpu_custom_call.1} parent=79 // pred_check_branch
          %4707 = sbr.rel (%p4705) target = $region84
        $region83: #{tpu_custom_call.1} parent=79 // pred_region
          %s4708 = sand.u32 %s180, 1
          %s4709 = scalar_lea.sflag [#allocation4], %s4708
          %s4710 = sand.u32 %s180, 1
          %s4711 = smul.addr %s4710, 256
          %s4712 = scalar_lea.vmem [#allocation12], %s4711
          %4714 = dma.done %s4709, 4096
        $region84: #{tpu_custom_call.1} parent=79 // pred_fallthru
          _
        // Predicated region
        $region85: #{tpu_custom_call.1} parent=79 // pred_check
          %p4715 = pneg %p221
        $region86: #{tpu_custom_call.1} parent=79 // pred_check_branch
          %4717 = sbr.rel (%p4715) target = $region88
        $region87: #{tpu_custom_call.1} parent=79 // pred_region
          %s4718 = sand.u32 %s206, 1
          %s4719 = scalar_lea.sflag [#allocation14], %s4718
          %s4720 = sand.u32 %s206, 1
          %s4721 = smul.addr %s4720, 256
          %s4722 = scalar_lea.vmem [#allocation13], %s4721
          %4724 = dma.done %s4719, 4096
        $region88: #{tpu_custom_call.1} parent=79 // pred_fallthru
          _
      $region80: #{tpu_custom_call.1} parent=5 // pred_fallthru
        _
    $region6: #{tpu_custom_call.1} parent=1 // loop_footer
      %s29 = sadd.s32 1, %s25
    $region7: #{tpu_custom_call.1} parent=1 // loop_footer_branch
      %24 = sbr.rel target = $region3
    $region8: #{tpu_custom_call.1} parent=1 // loop_exit
      _
    %4725 = vsyncpa [#allocation3], 1
    %s4726 = scalar_lea.sflag [#allocation3], 1
    %4727 = vsyncpa %s4726, 1
    %4728 = vsyncpa [#allocation6], 1
    %4729 = vsyncpa [#allocation9], 1
    %4730 = vsyncpa [#allocation4], 1
    %s4731 = scalar_lea.sflag [#allocation4], 1
    %4732 = vsyncpa %s4731, 1
    %4733 = vsyncpa [#allocation14], 1
    %s4734 = scalar_lea.sflag [#allocation14], 1
    %4735 = vsyncpa %s4734, 1

</llo_original>
